<compile_context>
chip_gen: v5e
topology: v5e:2x2
jax: 0.10.0
libtpu: 0.0.40
codegen_flags: <defaults>
</compile_context>

<pallas_src>
import math
from functools import partial

import numpy as np
import jax
import jax.numpy as jnp
from jax import lax
from jax.experimental import pallas as pl
from jax.experimental.pallas import tpu as pltpu


# ----------------------------- Pallas kernel -----------------------------

def encoder_block_kernel(x_ref, q_ref, k_ref, v_ref,
                         wo_ref, bo_ref, w1_ref, b1_ref, w2_ref, b2_ref,
                         g1_ref, beta1_ref, g2_ref, beta2_ref,
                         out_ref,
                         o_scr,
                         *, num_heads):
    x = x_ref[0].astype(jnp.float32)                                   # (TQ, E)
    TQ, E = x.shape
    D = E // num_heads

    # Per-head attention.  Heads are a static loop with static ref slices, so
    # only the (TQ,D)/(S,D) pieces each head touches are loaded (no full (S,E)
    # values kept live across the unrolled loop).  Head outputs are
    # lane-concatenated into a (TQ,E) bf16 scratch so the output projection is
    # a single E-wide contraction (fills the 256-wide MXU on v6e/v7x).
    # TODO(synk): for dynamic head counts with D a multiple of 128, switch to
    # lax.fori_loop + pl.ds/pl.multiple_of lane slices; static slices are
    # required here because the self-test uses D=8 (< lane width).
    for h in range(num_heads):
        lo, hi = h * D, (h + 1) * D
        qh = q_ref[0, :, lo:hi]                                        # (TQ, D) bf16 (scale folded)
        kh = k_ref[0, :, lo:hi]                                        # (S,  D) bf16
        s = lax.dot_general(qh, kh,
                            dimension_numbers=(((1,), (1,)), ((), ())),
                            preferred_element_type=jnp.float32)        # (TQ, S)
        s = s - jnp.max(s, axis=-1, keepdims=True)
        p = jnp.exp(s)
        inv = pl.reciprocal(jnp.sum(p, axis=-1, keepdims=True), approx=True)
        p_bf = (p * inv).astype(jnp.bfloat16)
        o_h = jnp.dot(p_bf, v_ref[0, :, lo:hi],
                      preferred_element_type=jnp.float32)              # (TQ, D)
        o_scr[:, lo:hi] = o_h.astype(jnp.bfloat16)

    # Single E-wide output projection (bf16 operands, f32 accumulation).
    attn = jnp.dot(o_scr[...], wo_ref[...],
                   preferred_element_type=jnp.float32) + bo_ref[...]

    def layernorm(y, g, b):
        mu = jnp.mean(y, axis=-1, keepdims=True)
        yc = y - mu
        var = jnp.mean(yc * yc, axis=-1, keepdims=True)
        return yc * lax.rsqrt(var + 1e-5) * g + b

    # --- residual + norm_attn ---
    h1 = layernorm(x + attn, g1_ref[...], beta1_ref[...])

    # --- MLP: Linear -> ReLU -> Linear ---
    m = jnp.dot(h1.astype(jnp.bfloat16), w1_ref[...],
                preferred_element_type=jnp.float32) + b1_ref[...]
    m = jnp.maximum(m, 0.0)
    m = jnp.dot(m.astype(jnp.bfloat16), w2_ref[...],
                preferred_element_type=jnp.float32) + b2_ref[...]

    # --- residual + norm_mlp ---
    out = layernorm(h1 + m, g2_ref[...], beta2_ref[...])
    out_ref[0] = out.astype(out_ref.dtype)


WEIGHT_ORDER = ("wo", "bo", "w1", "b1", "w2", "b2",
                "g1", "beta1", "g2", "beta2")


# --------------------------- wrapper helpers ---------------------------

def _vmem_limit_bytes():
    # Per-generation VMEM budget (v7x: 64 MiB physical, v5e/v6e: 128 MiB).
    try:
        cap = pltpu.get_tpu_info().vmem_capacity_bytes
    except Exception:
        cap = 128 * 1024 * 1024
    return min(int(cap * 3 // 4), 100 * 1024 * 1024)


def _pick_tq(S, E, weight_bytes, vmem_limit):
    cands = [t for t in (512, 256, 128, 64, 32, 16, 8) if S % t == 0]
    if not cands:
        return S
    kv_bytes = 2 * 2 * S * E * 2            # K,V inputs, double-buffered bf16
    fixed = weight_bytes + kv_bytes
    for t in cands:                         # largest tile that fits the budget
        tile = (2 * t * E * (4 + 2)         # x (f32) + q (bf16) tiles, 2-buffered
                + 2 * t * E * 4             # out tile, 2-buffered
                + t * E * 2                 # o_scr (bf16)
                + 3 * t * S * 4             # live f32 score/prob temps
                + 4 * t * E * 4)            # f32 intermediates (attn/h1/m)
        if fixed + tile <= int(vmem_limit * 0.7):
            return t
    return cands[-1]


def encoder_block(x, params, num_heads):
    B, S, E = x.shape
    D = E // num_heads
    scale = 1.0 / math.sqrt(D)

    # Q/K/V projections (per-head (D,D) Linear shared across heads) as plain
    # XLA einsums in f32; 1/sqrt(D) folded into Q; kernel gets bf16 operands.
    xh = x.astype(jnp.float32).reshape(B, S, num_heads, D)
    q = (jnp.einsum("bshd,de->bshe", xh, params["wq"]) + params["bq"][0]) * scale
    k = jnp.einsum("bshd,de->bshe", xh, params["wk"]) + params["bk"][0]
    v = jnp.einsum("bshd,de->bshe", xh, params["wv"]) + params["bv"][0]
    q = q.reshape(B, S, E).astype(jnp.bfloat16)
    k = k.reshape(B, S, E).astype(jnp.bfloat16)
    v = v.reshape(B, S, E).astype(jnp.bfloat16)

    prepped = dict(params)
    for name in ("wo", "w1", "w2"):                 # matmul operands in bf16
        prepped[name] = params[name].astype(jnp.bfloat16)
    weights = [prepped[name] for name in WEIGHT_ORDER]
    weight_bytes = sum(int(w.size) * w.dtype.itemsize for w in weights)

    vmem_limit = _vmem_limit_bytes()
    TQ = _pick_tq(S, E, weight_bytes, vmem_limit)
    grid = (B, S // TQ)

    tile_spec = pl.BlockSpec((1, TQ, E), lambda b, qi: (b, qi, 0))
    seq_spec = pl.BlockSpec((1, S, E), lambda b, qi: (b, 0, 0))  # K/V: re-DMA only when b changes

    flops = int(B * (4 * S * S * E + 6 * S * E * E))
    transcendentals = int(B * num_heads * S * S)
    bytes_accessed = int(B * S * E * (4 + 3 * 2 + 4) + weight_bytes)

    def build(weight_specs):
        return pl.pallas_call(
            partial(encoder_block_kernel, num_heads=num_heads),
            out_shape=jax.ShapeDtypeStruct((B, S, E), x.dtype),
            grid=grid,
            in_specs=[tile_spec, tile_spec, seq_spec, seq_spec] + weight_specs,
            out_specs=pl.BlockSpec((1, TQ, E), lambda b, qi: (b, qi, 0)),
            scratch_shapes=[pltpu.VMEM((TQ, E), jnp.bfloat16)],  # lane-concat head outputs
            compiler_params=pltpu.CompilerParams(
                dimension_semantics=("parallel", "parallel"),
                vmem_limit_bytes=vmem_limit),
            cost_estimate=pl.CostEstimate(flops=flops,
                                          transcendentals=transcendentals,
                                          bytes_accessed=bytes_accessed),
        )

    args = (x, q, k, v, *weights)
    try:
        # Grid-invariant weights/biases: single-buffered (DMA'd once).
        single_buf = [pl.BlockSpec(w.shape, lambda b, qi: (0, 0),
                                   pipeline_mode=pl.Buffered(1)) for w in weights]
        return build(single_buf)(*args)
    except Exception:
        # TODO(synk): this jax build rejected pipeline_mode=Buffered(1);
        # fall back to default (double-buffered) weight specs.
        default_specs = [pl.BlockSpec(w.shape, lambda b, qi: (0, 0))
                         for w in weights]
        return build(default_specs)(*args)


# ------------------------- pure-JAX reference -------------------------

def encoder_block_ref(x, params, num_heads):
    B, S, E = x.shape
    D = E // num_heads
    xh = x.reshape(B, S, num_heads, D)
    q = jnp.einsum("bshd,de->bshe", xh, params["wq"]) + params["bq"][0]
    k = jnp.einsum("bshd,de->bshe", xh, params["wk"]) + params["bk"][0]
    v = jnp.einsum("bshd,de->bshe", xh, params["wv"]) + params["bv"][0]
    scores = jnp.einsum("bshd,bthd->bhst", q, k) / math.sqrt(D)
    p = jax.nn.softmax(scores, axis=-1)
    attn = jnp.einsum("bhst,bthd->bshd", p, v).reshape(B, S, E)
    attn = attn @ params["wo"] + params["bo"][0]

    def ln(y, g, b):
        mu = jnp.mean(y, axis=-1, keepdims=True)
        var = jnp.mean((y - mu) ** 2, axis=-1, keepdims=True)
        return (y - mu) * jax.lax.rsqrt(var + 1e-5) * g + b

    h1 = ln(x + attn, params["g1"][0], params["beta1"][0])
    m = jnp.maximum(h1 @ params["w1"] + params["b1"][0], 0.0)
    m = m @ params["w2"] + params["b2"][0]
    return ln(h1 + m, params["g2"][0], params["beta2"][0])


# --------------------------- param init ---------------------------

def init_params(key, emb_dim, num_heads):
    D = emb_dim // num_heads
    keys = jax.random.split(key, 6)

    def lin(k, fan_in, fan_out):
        kw, kb = jax.random.split(k)
        w = jax.random.normal(kw, (fan_in, fan_out), jnp.float32) * 0.1
        b = jax.random.normal(kb, (1, fan_out), jnp.float32) * 0.1
        return w, b

    wq, bq = lin(keys[0], D, D)
    wk, bk = lin(keys[1], D, D)
    wv, bv = lin(keys[2], D, D)
    wo, bo = lin(keys[3], emb_dim, emb_dim)
    w1, b1 = lin(keys[4], emb_dim, emb_dim)
    w2, b2 = lin(keys[5], emb_dim, emb_dim)
    return dict(
        wq=wq, bq=bq, wk=wk, bk=bk, wv=wv, bv=bv,
        wo=wo, bo=bo, w1=w1, b1=b1, w2=w2, b2=b2,
        g1=jnp.ones((1, emb_dim), jnp.float32),
        beta1=jnp.zeros((1, emb_dim), jnp.float32),
        g2=jnp.ones((1, emb_dim), jnp.float32),
        beta2=jnp.zeros((1, emb_dim), jnp.float32),
    )


# ------------------------------ main ------------------------------

if __name__ == "__main__":
    B, S, E, H = 2, 8, 32, 4
    key = jax.random.PRNGKey(0)
    params = init_params(key, E, H)
    x = jax.random.normal(jax.random.fold_in(key, 999), (B, S, E), jnp.float32)

    out = jax.block_until_ready(encoder_block(x, params, H))
    ref = jax.block_until_ready(encoder_block_ref(x, params, H))

    assert out.shape == (B, S, E)
    # bf16 matmul operands + approx reciprocal -> relaxed tolerances vs f32 ref.
    np.testing.assert_allclose(np.asarray(out), np.asarray(ref),
                               rtol=5e-2, atol=5e-2)
    print("KERNEL_OK")
</pallas_src>

<mosaic_0001>
module attributes {stable_mosaic.version = 11 : i64} {
  func.func @encoder_block_kernel(%arg0: i32, %arg1: i32, %arg2: memref<1x8x32xf32, #tpu.memory_space<vmem>>, %arg3: memref<1x8x32xbf16, #tpu.memory_space<vmem>>, %arg4: memref<1x8x32xbf16, #tpu.memory_space<vmem>>, %arg5: memref<1x8x32xbf16, #tpu.memory_space<vmem>>, %arg6: memref<32x32xbf16, #tpu.memory_space<vmem>>, %arg7: memref<1x32xf32, #tpu.memory_space<vmem>>, %arg8: memref<32x32xbf16, #tpu.memory_space<vmem>>, %arg9: memref<1x32xf32, #tpu.memory_space<vmem>>, %arg10: memref<32x32xbf16, #tpu.memory_space<vmem>>, %arg11: memref<1x32xf32, #tpu.memory_space<vmem>>, %arg12: memref<1x32xf32, #tpu.memory_space<vmem>>, %arg13: memref<1x32xf32, #tpu.memory_space<vmem>>, %arg14: memref<1x32xf32, #tpu.memory_space<vmem>>, %arg15: memref<1x32xf32, #tpu.memory_space<vmem>>, %arg16: memref<1x8x32xf32, #tpu.memory_space<vmem>>, %arg17: memref<8x32xbf16, #tpu.memory_space<vmem>>) attributes {dimension_semantics = [#tpu.dimension_semantics<parallel>, #tpu.dimension_semantics<parallel>], iteration_bounds = array<i64: 2, 1>, scalar_prefetch = 0 : i64, scratch_operands = 1 : i64, tpu.core_type = #tpu.core_type<tc>, window_params = [{transform_indices = @transform_0, window_bounds = array<i64: 1, 8, 32>}, {transform_indices = @transform_1, window_bounds = array<i64: 1, 8, 32>}, {transform_indices = @transform_2, window_bounds = array<i64: 1, 8, 32>}, {transform_indices = @transform_3, window_bounds = array<i64: 1, 8, 32>}, {pipeline_mode = #tpu.pipeline_mode<synchronous>, transform_indices = @transform_4, window_bounds = array<i64: 32, 32>}, {pipeline_mode = #tpu.pipeline_mode<synchronous>, transform_indices = @transform_5, window_bounds = array<i64: 1, 32>}, {pipeline_mode = #tpu.pipeline_mode<synchronous>, transform_indices = @transform_6, window_bounds = array<i64: 32, 32>}, {pipeline_mode = #tpu.pipeline_mode<synchronous>, transform_indices = @transform_7, window_bounds = array<i64: 1, 32>}, {pipeline_mode = #tpu.pipeline_mode<synchronous>, transform_indices = @transform_8, window_bounds = array<i64: 32, 32>}, {pipeline_mode = #tpu.pipeline_mode<synchronous>, transform_indices = @transform_9, window_bounds = array<i64: 1, 32>}, {pipeline_mode = #tpu.pipeline_mode<synchronous>, transform_indices = @transform_10, window_bounds = array<i64: 1, 32>}, {pipeline_mode = #tpu.pipeline_mode<synchronous>, transform_indices = @transform_11, window_bounds = array<i64: 1, 32>}, {pipeline_mode = #tpu.pipeline_mode<synchronous>, transform_indices = @transform_12, window_bounds = array<i64: 1, 32>}, {pipeline_mode = #tpu.pipeline_mode<synchronous>, transform_indices = @transform_13, window_bounds = array<i64: 1, 32>}, {transform_indices = @transform_14, window_bounds = array<i64: 1, 8, 32>}]} {
    %c0 = arith.constant 0 : index
    %c0_0 = arith.constant 0 : index
    %c0_1 = arith.constant 0 : index
    %0 = vector.load %arg2[%c0, %c0_0, %c0_1] : memref<1x8x32xf32, #tpu.memory_space<vmem>>, vector<1x8x32xf32>
    %1 = vector.shape_cast %0 : vector<1x8x32xf32> to vector<8x32xf32>
    %c0_2 = arith.constant 0 : index
    %c0_3 = arith.constant 0 : index
    %c0_4 = arith.constant 0 : index
    %2 = vector.load %arg3[%c0_2, %c0_3, %c0_4] : memref<1x8x32xbf16, #tpu.memory_space<vmem>>, vector<1x8x8xbf16>
    %3 = vector.shape_cast %2 : vector<1x8x8xbf16> to vector<8x8xbf16>
    %c0_5 = arith.constant 0 : index
    %c0_6 = arith.constant 0 : index
    %c0_7 = arith.constant 0 : index
    %4 = vector.load %arg4[%c0_5, %c0_6, %c0_7] : memref<1x8x32xbf16, #tpu.memory_space<vmem>>, vector<1x8x8xbf16>
    %5 = vector.shape_cast %4 : vector<1x8x8xbf16> to vector<8x8xbf16>
    %cst = arith.constant dense<0.000000e+00> : vector<8x8xf32>
    %6 = tpu.matmul %3, %5, %cst {dimension_numbers = #tpu.dot_dimension_numbers<[1], [1], [0], [0], [0, 0, 1, 0], [], []>} : vector<8x8xbf16>, vector<8x8xbf16>, vector<8x8xf32> -> vector<8x8xf32>
    %cst_8 = arith.constant dense<0xFF800000> : vector<8xf32>
    %7 = vector.multi_reduction <maximumf>, %6, %cst_8 [1] : vector<8x8xf32> to vector<8xf32>
    %8 = vector.shape_cast %7 : vector<8xf32> to vector<8x1xf32>
    %9 = vector.broadcast %8 : vector<8x1xf32> to vector<8x8xf32>
    %10 = arith.subf %6, %9 : vector<8x8xf32>
    %11 = math.exp %10 : vector<8x8xf32>
    %cst_9 = arith.constant dense<0.000000e+00> : vector<8xf32>
    %12 = vector.multi_reduction <add>, %11, %cst_9 [1] : vector<8x8xf32> to vector<8xf32>
    %13 = vector.shape_cast %12 : vector<8xf32> to vector<8x1xf32>
    %14 = tpu.reciprocal %13 {approx = true} : vector<8x1xf32> -> vector<8x1xf32>
    %15 = vector.broadcast %14 : vector<8x1xf32> to vector<8x8xf32>
    %16 = arith.mulf %11, %15 : vector<8x8xf32>
    %17 = arith.truncf %16 : vector<8x8xf32> to vector<8x8xbf16>
    %c0_10 = arith.constant 0 : index
    %c0_11 = arith.constant 0 : index
    %c0_12 = arith.constant 0 : index
    %18 = vector.load %arg5[%c0_10, %c0_11, %c0_12] : memref<1x8x32xbf16, #tpu.memory_space<vmem>>, vector<1x8x8xbf16>
    %19 = vector.shape_cast %18 : vector<1x8x8xbf16> to vector<8x8xbf16>
    %cst_13 = arith.constant dense<0.000000e+00> : vector<8x8xf32>
    %20 = tpu.matmul %17, %19, %cst_13 {dimension_numbers = #tpu.dot_dimension_numbers<[1], [0], [0], [1], [0, 0, 1, 1], [], []>} : vector<8x8xbf16>, vector<8x8xbf16>, vector<8x8xf32> -> vector<8x8xf32>
    %21 = arith.truncf %20 : vector<8x8xf32> to vector<8x8xbf16>
    %c0_14 = arith.constant 0 : index
    %c0_15 = arith.constant 0 : index
    %22 = vector.load %arg17[%c0_14, %c0_15] : memref<8x32xbf16, #tpu.memory_space<vmem>>, vector<8x8xbf16>
    tpu.vector_store %arg17[%c0_14, %c0_15], %21 {strides = array<i32>} : memref<8x32xbf16, #tpu.memory_space<vmem>>, vector<8x8xbf16>,
    %c0_16 = arith.constant 0 : index
    %c0_17 = arith.constant 0 : index
    %c8 = arith.constant 8 : index
    %23 = vector.load %arg3[%c0_16, %c0_17, %c8] : memref<1x8x32xbf16, #tpu.memory_space<vmem>>, vector<1x8x8xbf16>
    %24 = vector.shape_cast %23 : vector<1x8x8xbf16> to vector<8x8xbf16>
    %c0_18 = arith.constant 0 : index
    %c0_19 = arith.constant 0 : index
    %c8_20 = arith.constant 8 : index
    %25 = vector.load %arg4[%c0_18, %c0_19, %c8_20] : memref<1x8x32xbf16, #tpu.memory_space<vmem>>, vector<1x8x8xbf16>
    %26 = vector.shape_cast %25 : vector<1x8x8xbf16> to vector<8x8xbf16>
    %cst_21 = arith.constant dense<0.000000e+00> : vector<8x8xf32>
    %27 = tpu.matmul %24, %26, %cst_21 {dimension_numbers = #tpu.dot_dimension_numbers<[1], [1], [0], [0], [0, 0, 1, 0], [], []>} : vector<8x8xbf16>, vector<8x8xbf16>, vector<8x8xf32> -> vector<8x8xf32>
    %cst_22 = arith.constant dense<0xFF800000> : vector<8xf32>
    %28 = vector.multi_reduction <maximumf>, %27, %cst_22 [1] : vector<8x8xf32> to vector<8xf32>
    %29 = vector.shape_cast %28 : vector<8xf32> to vector<8x1xf32>
    %30 = vector.broadcast %29 : vector<8x1xf32> to vector<8x8xf32>
    %31 = arith.subf %27, %30 : vector<8x8xf32>
    %32 = math.exp %31 : vector<8x8xf32>
    %cst_23 = arith.constant dense<0.000000e+00> : vector<8xf32>
    %33 = vector.multi_reduction <add>, %32, %cst_23 [1] : vector<8x8xf32> to vector<8xf32>
    %34 = vector.shape_cast %33 : vector<8xf32> to vector<8x1xf32>
    %35 = tpu.reciprocal %34 {approx = true} : vector<8x1xf32> -> vector<8x1xf32>
    %36 = vector.broadcast %35 : vector<8x1xf32> to vector<8x8xf32>
    %37 = arith.mulf %32, %36 : vector<8x8xf32>
    %38 = arith.truncf %37 : vector<8x8xf32> to vector<8x8xbf16>
    %c0_24 = arith.constant 0 : index
    %c0_25 = arith.constant 0 : index
    %c8_26 = arith.constant 8 : index
    %39 = vector.load %arg5[%c0_24, %c0_25, %c8_26] : memref<1x8x32xbf16, #tpu.memory_space<vmem>>, vector<1x8x8xbf16>
    %40 = vector.shape_cast %39 : vector<1x8x8xbf16> to vector<8x8xbf16>
    %cst_27 = arith.constant dense<0.000000e+00> : vector<8x8xf32>
    %41 = tpu.matmul %38, %40, %cst_27 {dimension_numbers = #tpu.dot_dimension_numbers<[1], [0], [0], [1], [0, 0, 1, 1], [], []>} : vector<8x8xbf16>, vector<8x8xbf16>, vector<8x8xf32> -> vector<8x8xf32>
    %42 = arith.truncf %41 : vector<8x8xf32> to vector<8x8xbf16>
    %c0_28 = arith.constant 0 : index
    %c8_29 = arith.constant 8 : index
    %43 = vector.load %arg17[%c0_28, %c8_29] : memref<8x32xbf16, #tpu.memory_space<vmem>>, vector<8x8xbf16>
    tpu.vector_store %arg17[%c0_28, %c8_29], %42 {strides = array<i32>} : memref<8x32xbf16, #tpu.memory_space<vmem>>, vector<8x8xbf16>,
    %c0_30 = arith.constant 0 : index
    %c0_31 = arith.constant 0 : index
    %c16 = arith.constant 16 : index
    %44 = vector.load %arg3[%c0_30, %c0_31, %c16] : memref<1x8x32xbf16, #tpu.memory_space<vmem>>, vector<1x8x8xbf16>
    %45 = vector.shape_cast %44 : vector<1x8x8xbf16> to vector<8x8xbf16>
    %c0_32 = arith.constant 0 : index
    %c0_33 = arith.constant 0 : index
    %c16_34 = arith.constant 16 : index
    %46 = vector.load %arg4[%c0_32, %c0_33, %c16_34] : memref<1x8x32xbf16, #tpu.memory_space<vmem>>, vector<1x8x8xbf16>
    %47 = vector.shape_cast %46 : vector<1x8x8xbf16> to vector<8x8xbf16>
    %cst_35 = arith.constant dense<0.000000e+00> : vector<8x8xf32>
    %48 = tpu.matmul %45, %47, %cst_35 {dimension_numbers = #tpu.dot_dimension_numbers<[1], [1], [0], [0], [0, 0, 1, 0], [], []>} : vector<8x8xbf16>, vector<8x8xbf16>, vector<8x8xf32> -> vector<8x8xf32>
    %cst_36 = arith.constant dense<0xFF800000> : vector<8xf32>
    %49 = vector.multi_reduction <maximumf>, %48, %cst_36 [1] : vector<8x8xf32> to vector<8xf32>
    %50 = vector.shape_cast %49 : vector<8xf32> to vector<8x1xf32>
    %51 = vector.broadcast %50 : vector<8x1xf32> to vector<8x8xf32>
    %52 = arith.subf %48, %51 : vector<8x8xf32>
    %53 = math.exp %52 : vector<8x8xf32>
    %cst_37 = arith.constant dense<0.000000e+00> : vector<8xf32>
    %54 = vector.multi_reduction <add>, %53, %cst_37 [1] : vector<8x8xf32> to vector<8xf32>
    %55 = vector.shape_cast %54 : vector<8xf32> to vector<8x1xf32>
    %56 = tpu.reciprocal %55 {approx = true} : vector<8x1xf32> -> vector<8x1xf32>
    %57 = vector.broadcast %56 : vector<8x1xf32> to vector<8x8xf32>
    %58 = arith.mulf %53, %57 : vector<8x8xf32>
    %59 = arith.truncf %58 : vector<8x8xf32> to vector<8x8xbf16>
    %c0_38 = arith.constant 0 : index
    %c0_39 = arith.constant 0 : index
    %c16_40 = arith.constant 16 : index
    %60 = vector.load %arg5[%c0_38, %c0_39, %c16_40] : memref<1x8x32xbf16, #tpu.memory_space<vmem>>, vector<1x8x8xbf16>
    %61 = vector.shape_cast %60 : vector<1x8x8xbf16> to vector<8x8xbf16>
    %cst_41 = arith.constant dense<0.000000e+00> : vector<8x8xf32>
    %62 = tpu.matmul %59, %61, %cst_41 {dimension_numbers = #tpu.dot_dimension_numbers<[1], [0], [0], [1], [0, 0, 1, 1], [], []>} : vector<8x8xbf16>, vector<8x8xbf16>, vector<8x8xf32> -> vector<8x8xf32>
    %63 = arith.truncf %62 : vector<8x8xf32> to vector<8x8xbf16>
    %c0_42 = arith.constant 0 : index
    %c16_43 = arith.constant 16 : index
    %64 = vector.load %arg17[%c0_42, %c16_43] : memref<8x32xbf16, #tpu.memory_space<vmem>>, vector<8x8xbf16>
    tpu.vector_store %arg17[%c0_42, %c16_43], %63 {strides = array<i32>} : memref<8x32xbf16, #tpu.memory_space<vmem>>, vector<8x8xbf16>,
    %c0_44 = arith.constant 0 : index
    %c0_45 = arith.constant 0 : index
    %c24 = arith.constant 24 : index
    %65 = vector.load %arg3[%c0_44, %c0_45, %c24] : memref<1x8x32xbf16, #tpu.memory_space<vmem>>, vector<1x8x8xbf16>
    %66 = vector.shape_cast %65 : vector<1x8x8xbf16> to vector<8x8xbf16>
    %c0_46 = arith.constant 0 : index
    %c0_47 = arith.constant 0 : index
    %c24_48 = arith.constant 24 : index
    %67 = vector.load %arg4[%c0_46, %c0_47, %c24_48] : memref<1x8x32xbf16, #tpu.memory_space<vmem>>, vector<1x8x8xbf16>
    %68 = vector.shape_cast %67 : vector<1x8x8xbf16> to vector<8x8xbf16>
    %cst_49 = arith.constant dense<0.000000e+00> : vector<8x8xf32>
    %69 = tpu.matmul %66, %68, %cst_49 {dimension_numbers = #tpu.dot_dimension_numbers<[1], [1], [0], [0], [0, 0, 1, 0], [], []>} : vector<8x8xbf16>, vector<8x8xbf16>, vector<8x8xf32> -> vector<8x8xf32>
    %cst_50 = arith.constant dense<0xFF800000> : vector<8xf32>
    %70 = vector.multi_reduction <maximumf>, %69, %cst_50 [1] : vector<8x8xf32> to vector<8xf32>
    %71 = vector.shape_cast %70 : vector<8xf32> to vector<8x1xf32>
    %72 = vector.broadcast %71 : vector<8x1xf32> to vector<8x8xf32>
    %73 = arith.subf %69, %72 : vector<8x8xf32>
    %74 = math.exp %73 : vector<8x8xf32>
    %cst_51 = arith.constant dense<0.000000e+00> : vector<8xf32>
    %75 = vector.multi_reduction <add>, %74, %cst_51 [1] : vector<8x8xf32> to vector<8xf32>
    %76 = vector.shape_cast %75 : vector<8xf32> to vector<8x1xf32>
    %77 = tpu.reciprocal %76 {approx = true} : vector<8x1xf32> -> vector<8x1xf32>
    %78 = vector.broadcast %77 : vector<8x1xf32> to vector<8x8xf32>
    %79 = arith.mulf %74, %78 : vector<8x8xf32>
    %80 = arith.truncf %79 : vector<8x8xf32> to vector<8x8xbf16>
    %c0_52 = arith.constant 0 : index
    %c0_53 = arith.constant 0 : index
    %c24_54 = arith.constant 24 : index
    %81 = vector.load %arg5[%c0_52, %c0_53, %c24_54] : memref<1x8x32xbf16, #tpu.memory_space<vmem>>, vector<1x8x8xbf16>
    %82 = vector.shape_cast %81 : vector<1x8x8xbf16> to vector<8x8xbf16>
    %cst_55 = arith.constant dense<0.000000e+00> : vector<8x8xf32>
    %83 = tpu.matmul %80, %82, %cst_55 {dimension_numbers = #tpu.dot_dimension_numbers<[1], [0], [0], [1], [0, 0, 1, 1], [], []>} : vector<8x8xbf16>, vector<8x8xbf16>, vector<8x8xf32> -> vector<8x8xf32>
    %84 = arith.truncf %83 : vector<8x8xf32> to vector<8x8xbf16>
    %c0_56 = arith.constant 0 : index
    %c24_57 = arith.constant 24 : index
    %85 = vector.load %arg17[%c0_56, %c24_57] : memref<8x32xbf16, #tpu.memory_space<vmem>>, vector<8x8xbf16>
    tpu.vector_store %arg17[%c0_56, %c24_57], %84 {strides = array<i32>} : memref<8x32xbf16, #tpu.memory_space<vmem>>, vector<8x8xbf16>,
    %c0_58 = arith.constant 0 : index
    %c0_59 = arith.constant 0 : index
    %86 = vector.load %arg17[%c0_58, %c0_59] : memref<8x32xbf16, #tpu.memory_space<vmem>>, vector<8x32xbf16>
    %c0_60 = arith.constant 0 : index
    %c0_61 = arith.constant 0 : index
    %87 = vector.load %arg6[%c0_60, %c0_61] : memref<32x32xbf16, #tpu.memory_space<vmem>>, vector<32x32xbf16>
    %cst_62 = arith.constant dense<0.000000e+00> : vector<8x32xf32>
    %88 = tpu.matmul %86, %87, %cst_62 {dimension_numbers = #tpu.dot_dimension_numbers<[1], [0], [0], [1], [0, 0, 1, 1], [], []>} : vector<8x32xbf16>, vector<32x32xbf16>, vector<8x32xf32> -> vector<8x32xf32>
    %c0_63 = arith.constant 0 : index
    %c0_64 = arith.constant 0 : index
    %89 = vector.load %arg7[%c0_63, %c0_64] : memref<1x32xf32, #tpu.memory_space<vmem>>, vector<1x32xf32>
    %90 = vector.broadcast %89 : vector<1x32xf32> to vector<8x32xf32>
    %91 = arith.addf %88, %90 : vector<8x32xf32>
    %92 = arith.addf %1, %91 : vector<8x32xf32>
    %c0_65 = arith.constant 0 : index
    %c0_66 = arith.constant 0 : index
    %93 = vector.load %arg12[%c0_65, %c0_66] : memref<1x32xf32, #tpu.memory_space<vmem>>, vector<1x32xf32>
    %c0_67 = arith.constant 0 : index
    %c0_68 = arith.constant 0 : index
    %94 = vector.load %arg13[%c0_67, %c0_68] : memref<1x32xf32, #tpu.memory_space<vmem>>, vector<1x32xf32>
    %cst_69 = arith.constant dense<0.000000e+00> : vector<8xf32>
    %95 = vector.multi_reduction <add>, %92, %cst_69 [1] : vector<8x32xf32> to vector<8xf32>
    %96 = vector.shape_cast %95 : vector<8xf32> to vector<8x1xf32>
    %cst_70 = arith.constant 3.200000e+01 : f32
    %97 = vector.broadcast %cst_70 : f32 to vector<8x1xf32>
    %98 = arith.divf %96, %97 : vector<8x1xf32>
    %99 = vector.broadcast %98 : vector<8x1xf32> to vector<8x32xf32>
    %100 = arith.subf %92, %99 : vector<8x32xf32>
    %101 = arith.mulf %100, %100 : vector<8x32xf32>
    %cst_71 = arith.constant dense<0.000000e+00> : vector<8xf32>
    %102 = vector.multi_reduction <add>, %101, %cst_71 [1] : vector<8x32xf32> to vector<8xf32>
    %103 = vector.shape_cast %102 : vector<8xf32> to vector<8x1xf32>
    %cst_72 = arith.constant 3.200000e+01 : f32
    %104 = vector.broadcast %cst_72 : f32 to vector<8x1xf32>
    %105 = arith.divf %103, %104 : vector<8x1xf32>
    %cst_73 = arith.constant 9.99999974E-6 : f32
    %106 = vector.broadcast %cst_73 : f32 to vector<8x1xf32>
    %107 = arith.addf %105, %106 : vector<8x1xf32>
    %108 = math.rsqrt %107 : vector<8x1xf32>
    %109 = vector.broadcast %108 : vector<8x1xf32> to vector<8x32xf32>
    %110 = arith.mulf %100, %109 : vector<8x32xf32>
    %111 = vector.broadcast %93 : vector<1x32xf32> to vector<8x32xf32>
    %112 = arith.mulf %110, %111 : vector<8x32xf32>
    %113 = vector.broadcast %94 : vector<1x32xf32> to vector<8x32xf32>
    %114 = arith.addf %112, %113 : vector<8x32xf32>
    %115 = arith.truncf %114 : vector<8x32xf32> to vector<8x32xbf16>
    %c0_74 = arith.constant 0 : index
    %c0_75 = arith.constant 0 : index
    %116 = vector.load %arg8[%c0_74, %c0_75] : memref<32x32xbf16, #tpu.memory_space<vmem>>, vector<32x32xbf16>
    %cst_76 = arith.constant dense<0.000000e+00> : vector<8x32xf32>
    %117 = tpu.matmul %115, %116, %cst_76 {dimension_numbers = #tpu.dot_dimension_numbers<[1], [0], [0], [1], [0, 0, 1, 1], [], []>} : vector<8x32xbf16>, vector<32x32xbf16>, vector<8x32xf32> -> vector<8x32xf32>
    %c0_77 = arith.constant 0 : index
    %c0_78 = arith.constant 0 : index
    %118 = vector.load %arg9[%c0_77, %c0_78] : memref<1x32xf32, #tpu.memory_space<vmem>>, vector<1x32xf32>
    %119 = vector.broadcast %118 : vector<1x32xf32> to vector<8x32xf32>
    %120 = arith.addf %117, %119 : vector<8x32xf32>
    %cst_79 = arith.constant 0.000000e+00 : f32
    %121 = vector.broadcast %cst_79 : f32 to vector<8x32xf32>
    %122 = arith.maximumf %120, %121 : vector<8x32xf32>
    %123 = arith.truncf %122 : vector<8x32xf32> to vector<8x32xbf16>
    %c0_80 = arith.constant 0 : index
    %c0_81 = arith.constant 0 : index
    %124 = vector.load %arg10[%c0_80, %c0_81] : memref<32x32xbf16, #tpu.memory_space<vmem>>, vector<32x32xbf16>
    %cst_82 = arith.constant dense<0.000000e+00> : vector<8x32xf32>
    %125 = tpu.matmul %123, %124, %cst_82 {dimension_numbers = #tpu.dot_dimension_numbers<[1], [0], [0], [1], [0, 0, 1, 1], [], []>} : vector<8x32xbf16>, vector<32x32xbf16>, vector<8x32xf32> -> vector<8x32xf32>
    %c0_83 = arith.constant 0 : index
    %c0_84 = arith.constant 0 : index
    %126 = vector.load %arg11[%c0_83, %c0_84] : memref<1x32xf32, #tpu.memory_space<vmem>>, vector<1x32xf32>
    %127 = vector.broadcast %126 : vector<1x32xf32> to vector<8x32xf32>
    %128 = arith.addf %125, %127 : vector<8x32xf32>
    %129 = arith.addf %114, %128 : vector<8x32xf32>
    %c0_85 = arith.constant 0 : index
    %c0_86 = arith.constant 0 : index
    %130 = vector.load %arg14[%c0_85, %c0_86] : memref<1x32xf32, #tpu.memory_space<vmem>>, vector<1x32xf32>
    %c0_87 = arith.constant 0 : index
    %c0_88 = arith.constant 0 : index
    %131 = vector.load %arg15[%c0_87, %c0_88] : memref<1x32xf32, #tpu.memory_space<vmem>>, vector<1x32xf32>
    %cst_89 = arith.constant dense<0.000000e+00> : vector<8xf32>
    %132 = vector.multi_reduction <add>, %129, %cst_89 [1] : vector<8x32xf32> to vector<8xf32>
    %133 = vector.shape_cast %132 : vector<8xf32> to vector<8x1xf32>
    %cst_90 = arith.constant 3.200000e+01 : f32
    %134 = vector.broadcast %cst_90 : f32 to vector<8x1xf32>
    %135 = arith.divf %133, %134 : vector<8x1xf32>
    %136 = vector.broadcast %135 : vector<8x1xf32> to vector<8x32xf32>
    %137 = arith.subf %129, %136 : vector<8x32xf32>
    %138 = arith.mulf %137, %137 : vector<8x32xf32>
    %cst_91 = arith.constant dense<0.000000e+00> : vector<8xf32>
    %139 = vector.multi_reduction <add>, %138, %cst_91 [1] : vector<8x32xf32> to vector<8xf32>
    %140 = vector.shape_cast %139 : vector<8xf32> to vector<8x1xf32>
    %cst_92 = arith.constant 3.200000e+01 : f32
    %141 = vector.broadcast %cst_92 : f32 to vector<8x1xf32>
    %142 = arith.divf %140, %141 : vector<8x1xf32>
    %cst_93 = arith.constant 9.99999974E-6 : f32
    %143 = vector.broadcast %cst_93 : f32 to vector<8x1xf32>
    %144 = arith.addf %142, %143 : vector<8x1xf32>
    %145 = math.rsqrt %144 : vector<8x1xf32>
    %146 = vector.broadcast %145 : vector<8x1xf32> to vector<8x32xf32>
    %147 = arith.mulf %137, %146 : vector<8x32xf32>
    %148 = vector.broadcast %130 : vector<1x32xf32> to vector<8x32xf32>
    %149 = arith.mulf %147, %148 : vector<8x32xf32>
    %150 = vector.broadcast %131 : vector<1x32xf32> to vector<8x32xf32>
    %151 = arith.addf %149, %150 : vector<8x32xf32>
    %c0_94 = arith.constant 0 : index
    %c0_95 = arith.constant 0 : index
    %c0_96 = arith.constant 0 : index
    %152 = vector.load %arg16[%c0_94, %c0_95, %c0_96] : memref<1x8x32xf32, #tpu.memory_space<vmem>>, vector<1x8x32xf32>
    %153 = vector.shape_cast %152 : vector<1x8x32xf32> to vector<8x32xf32>
    %154 = vector.shape_cast %151 : vector<8x32xf32> to vector<1x8x32xf32>
    tpu.vector_store %arg16[%c0_94, %c0_95, %c0_96], %154 {strides = array<i32>} : memref<1x8x32xf32, #tpu.memory_space<vmem>>, vector<1x8x32xf32>,
    return
  }
  func.func @transform_0(%arg0: i32, %arg1: i32) -> (i32, i32, i32) {
    %c0_i32 = arith.constant 0 : i32
    %c0_i32_0 = arith.constant 0 : i32
    return %arg0, %arg1, %c0_i32 : i32, i32, i32
  }
  func.func @transform_1(%arg0: i32, %arg1: i32) -> (i32, i32, i32) {
    %c0_i32 = arith.constant 0 : i32
    %c0_i32_0 = arith.constant 0 : i32
    return %arg0, %arg1, %c0_i32 : i32, i32, i32
  }
  func.func @transform_2(%arg0: i32, %arg1: i32) -> (i32, i32, i32) {
    %c0_i32 = arith.constant 0 : i32
    %c0_i32_0 = arith.constant 0 : i32
    %c0_i32_1 = arith.constant 0 : i32
    return %arg0, %c0_i32, %c0_i32_0 : i32, i32, i32
  }
  func.func @transform_3(%arg0: i32, %arg1: i32) -> (i32, i32, i32) {
    %c0_i32 = arith.constant 0 : i32
    %c0_i32_0 = arith.constant 0 : i32
    %c0_i32_1 = arith.constant 0 : i32
    return %arg0, %c0_i32, %c0_i32_0 : i32, i32, i32
  }
  func.func @transform_4(%arg0: i32, %arg1: i32) -> (i32, i32) {
    %c0_i32 = arith.constant 0 : i32
    %c0_i32_0 = arith.constant 0 : i32
    %c0_i32_1 = arith.constant 0 : i32
    return %c0_i32, %c0_i32_0 : i32, i32
  }
  func.func @transform_5(%arg0: i32, %arg1: i32) -> (i32, i32) {
    %c0_i32 = arith.constant 0 : i32
    %c0_i32_0 = arith.constant 0 : i32
    %c0_i32_1 = arith.constant 0 : i32
    return %c0_i32, %c0_i32_0 : i32, i32
  }
  func.func @transform_6(%arg0: i32, %arg1: i32) -> (i32, i32) {
    %c0_i32 = arith.constant 0 : i32
    %c0_i32_0 = arith.constant 0 : i32
    %c0_i32_1 = arith.constant 0 : i32
    return %c0_i32, %c0_i32_0 : i32, i32
  }
  func.func @transform_7(%arg0: i32, %arg1: i32) -> (i32, i32) {
    %c0_i32 = arith.constant 0 : i32
    %c0_i32_0 = arith.constant 0 : i32
    %c0_i32_1 = arith.constant 0 : i32
    return %c0_i32, %c0_i32_0 : i32, i32
  }
  func.func @transform_8(%arg0: i32, %arg1: i32) -> (i32, i32) {
    %c0_i32 = arith.constant 0 : i32
    %c0_i32_0 = arith.constant 0 : i32
    %c0_i32_1 = arith.constant 0 : i32
    return %c0_i32, %c0_i32_0 : i32, i32
  }
  func.func @transform_9(%arg0: i32, %arg1: i32) -> (i32, i32) {
    %c0_i32 = arith.constant 0 : i32
    %c0_i32_0 = arith.constant 0 : i32
    %c0_i32_1 = arith.constant 0 : i32
    return %c0_i32, %c0_i32_0 : i32, i32
  }
  func.func @transform_10(%arg0: i32, %arg1: i32) -> (i32, i32) {
    %c0_i32 = arith.constant 0 : i32
    %c0_i32_0 = arith.constant 0 : i32
    %c0_i32_1 = arith.constant 0 : i32
    return %c0_i32, %c0_i32_0 : i32, i32
  }
  func.func @transform_11(%arg0: i32, %arg1: i32) -> (i32, i32) {
    %c0_i32 = arith.constant 0 : i32
    %c0_i32_0 = arith.constant 0 : i32
    %c0_i32_1 = arith.constant 0 : i32
    return %c0_i32, %c0_i32_0 : i32, i32
  }
  func.func @transform_12(%arg0: i32, %arg1: i32) -> (i32, i32) {
    %c0_i32 = arith.constant 0 : i32
    %c0_i32_0 = arith.constant 0 : i32
    %c0_i32_1 = arith.constant 0 : i32
    return %c0_i32, %c0_i32_0 : i32, i32
  }
  func.func @transform_13(%arg0: i32, %arg1: i32) -> (i32, i32) {
    %c0_i32 = arith.constant 0 : i32
    %c0_i32_0 = arith.constant 0 : i32
    %c0_i32_1 = arith.constant 0 : i32
    return %c0_i32, %c0_i32_0 : i32, i32
  }
  func.func @transform_14(%arg0: i32, %arg1: i32) -> (i32, i32, i32) {
    %c0_i32 = arith.constant 0 : i32
    %c0_i32_0 = arith.constant 0 : i32
    return %arg0, %arg1, %c0_i32 : i32, i32, i32
  }
}

module attributes {stable_mosaic.version = 11 : i64} {
  func.func @encoder_block_kernel(%arg0: i32, %arg1: i32, %arg2: memref<1x8x32xf32, #tpu.memory_space<vmem>>, %arg3: memref<1x8x32xbf16, #tpu.memory_space<vmem>>, %arg4: memref<1x8x32xbf16, #tpu.memory_space<vmem>>, %arg5: memref<1x8x32xbf16, #tpu.memory_space<vmem>>, %arg6: memref<32x32xbf16, #tpu.memory_space<vmem>>, %arg7: memref<1x32xf32, #tpu.memory_space<vmem>>, %arg8: memref<32x32xbf16, #tpu.memory_space<vmem>>, %arg9: memref<1x32xf32, #tpu.memory_space<vmem>>, %arg10: memref<32x32xbf16, #tpu.memory_space<vmem>>, %arg11: memref<1x32xf32, #tpu.memory_space<vmem>>, %arg12: memref<1x32xf32, #tpu.memory_space<vmem>>, %arg13: memref<1x32xf32, #tpu.memory_space<vmem>>, %arg14: memref<1x32xf32, #tpu.memory_space<vmem>>, %arg15: memref<1x32xf32, #tpu.memory_space<vmem>>, %arg16: memref<1x8x32xf32, #tpu.memory_space<vmem>>, %arg17: memref<8x32xbf16, #tpu.memory_space<vmem>>) attributes {dimension_semantics = [#tpu.dimension_semantics<parallel>, #tpu.dimension_semantics<parallel>], iteration_bounds = array<i64: 2, 1>, scalar_prefetch = 0 : i64, scratch_operands = 1 : i64, tpu.core_type = #tpu.core_type<tc>, window_params = [{transform_indices = @transform_0, window_bounds = array<i64: 1, 8, 32>}, {transform_indices = @transform_1, window_bounds = array<i64: 1, 8, 32>}, {transform_indices = @transform_2, window_bounds = array<i64: 1, 8, 32>}, {transform_indices = @transform_3, window_bounds = array<i64: 1, 8, 32>}, {pipeline_mode = #tpu.pipeline_mode<synchronous>, transform_indices = @transform_4, window_bounds = array<i64: 32, 32>}, {pipeline_mode = #tpu.pipeline_mode<synchronous>, transform_indices = @transform_5, window_bounds = array<i64: 1, 32>}, {pipeline_mode = #tpu.pipeline_mode<synchronous>, transform_indices = @transform_6, window_bounds = array<i64: 32, 32>}, {pipeline_mode = #tpu.pipeline_mode<synchronous>, transform_indices = @transform_7, window_bounds = array<i64: 1, 32>}, {pipeline_mode = #tpu.pipeline_mode<synchronous>, transform_indices = @transform_8, window_bounds = array<i64: 32, 32>}, {pipeline_mode = #tpu.pipeline_mode<synchronous>, transform_indices = @transform_9, window_bounds = array<i64: 1, 32>}, {pipeline_mode = #tpu.pipeline_mode<synchronous>, transform_indices = @transform_10, window_bounds = array<i64: 1, 32>}, {pipeline_mode = #tpu.pipeline_mode<synchronous>, transform_indices = @transform_11, window_bounds = array<i64: 1, 32>}, {pipeline_mode = #tpu.pipeline_mode<synchronous>, transform_indices = @transform_12, window_bounds = array<i64: 1, 32>}, {pipeline_mode = #tpu.pipeline_mode<synchronous>, transform_indices = @transform_13, window_bounds = array<i64: 1, 32>}, {transform_indices = @transform_14, window_bounds = array<i64: 1, 8, 32>}]} {
    %c0 = arith.constant 0 : index
    %c0_0 = arith.constant 0 : index
    %c0_1 = arith.constant 0 : index
    %0 = vector.load %arg2[%c0, %c0_0, %c0_1] : memref<1x8x32xf32, #tpu.memory_space<vmem>>, vector<1x8x32xf32>
    %1 = vector.shape_cast %0 : vector<1x8x32xf32> to vector<8x32xf32>
    %c0_2 = arith.constant 0 : index
    %c0_3 = arith.constant 0 : index
    %c0_4 = arith.constant 0 : index
    %2 = vector.load %arg3[%c0_2, %c0_3, %c0_4] : memref<1x8x32xbf16, #tpu.memory_space<vmem>>, vector<1x8x8xbf16>
    %3 = vector.shape_cast %2 : vector<1x8x8xbf16> to vector<8x8xbf16>
    %c0_5 = arith.constant 0 : index
    %c0_6 = arith.constant 0 : index
    %c0_7 = arith.constant 0 : index
    %4 = vector.load %arg4[%c0_5, %c0_6, %c0_7] : memref<1x8x32xbf16, #tpu.memory_space<vmem>>, vector<1x8x8xbf16>
    %5 = vector.shape_cast %4 : vector<1x8x8xbf16> to vector<8x8xbf16>
    %cst = arith.constant dense<0.000000e+00> : vector<8x8xf32>
    %6 = tpu.matmul %3, %5, %cst {dimension_numbers = #tpu.dot_dimension_numbers<[1], [1], [0], [0], [0, 0, 1, 0], [], []>} : vector<8x8xbf16>, vector<8x8xbf16>, vector<8x8xf32> -> vector<8x8xf32>
    %cst_8 = arith.constant dense<0xFF800000> : vector<8xf32>
    %7 = vector.multi_reduction <maximumf>, %6, %cst_8 [1] : vector<8x8xf32> to vector<8xf32>
    %8 = vector.shape_cast %7 : vector<8xf32> to vector<8x1xf32>
    %9 = vector.broadcast %8 : vector<8x1xf32> to vector<8x8xf32>
    %10 = arith.subf %6, %9 : vector<8x8xf32>
    %11 = math.exp %10 : vector<8x8xf32>
    %cst_9 = arith.constant dense<0.000000e+00> : vector<8xf32>
    %12 = vector.multi_reduction <add>, %11, %cst_9 [1] : vector<8x8xf32> to vector<8xf32>
    %13 = vector.shape_cast %12 : vector<8xf32> to vector<8x1xf32>
    %14 = tpu.reciprocal %13 {approx = true} : vector<8x1xf32> -> vector<8x1xf32>
    %15 = vector.broadcast %14 : vector<8x1xf32> to vector<8x8xf32>
    %16 = arith.mulf %11, %15 : vector<8x8xf32>
    %17 = arith.truncf %16 : vector<8x8xf32> to vector<8x8xbf16>
    %c0_10 = arith.constant 0 : index
    %c0_11 = arith.constant 0 : index
    %c0_12 = arith.constant 0 : index
    %18 = vector.load %arg5[%c0_10, %c0_11, %c0_12] : memref<1x8x32xbf16, #tpu.memory_space<vmem>>, vector<1x8x8xbf16>
    %19 = vector.shape_cast %18 : vector<1x8x8xbf16> to vector<8x8xbf16>
    %cst_13 = arith.constant dense<0.000000e+00> : vector<8x8xf32>
    %20 = tpu.matmul %17, %19, %cst_13 {dimension_numbers = #tpu.dot_dimension_numbers<[1], [0], [0], [1], [0, 0, 1, 1], [], []>} : vector<8x8xbf16>, vector<8x8xbf16>, vector<8x8xf32> -> vector<8x8xf32>
    %21 = arith.truncf %20 : vector<8x8xf32> to vector<8x8xbf16>
    %c0_14 = arith.constant 0 : index
    %c0_15 = arith.constant 0 : index
    %22 = vector.load %arg17[%c0_14, %c0_15] : memref<8x32xbf16, #tpu.memory_space<vmem>>, vector<8x8xbf16>
    tpu.vector_store %arg17[%c0_14, %c0_15], %21 {strides = array<i32>} : memref<8x32xbf16, #tpu.memory_space<vmem>>, vector<8x8xbf16>,
    %c0_16 = arith.constant 0 : index
    %c0_17 = arith.constant 0 : index
    %c8 = arith.constant 8 : index
    %23 = vector.load %arg3[%c0_16, %c0_17, %c8] : memref<1x8x32xbf16, #tpu.memory_space<vmem>>, vector<1x8x8xbf16>
    %24 = vector.shape_cast %23 : vector<1x8x8xbf16> to vector<8x8xbf16>
    %c0_18 = arith.constant 0 : index
    %c0_19 = arith.constant 0 : index
    %c8_20 = arith.constant 8 : index
    %25 = vector.load %arg4[%c0_18, %c0_19, %c8_20] : memref<1x8x32xbf16, #tpu.memory_space<vmem>>, vector<1x8x8xbf16>
    %26 = vector.shape_cast %25 : vector<1x8x8xbf16> to vector<8x8xbf16>
    %cst_21 = arith.constant dense<0.000000e+00> : vector<8x8xf32>
    %27 = tpu.matmul %24, %26, %cst_21 {dimension_numbers = #tpu.dot_dimension_numbers<[1], [1], [0], [0], [0, 0, 1, 0], [], []>} : vector<8x8xbf16>, vector<8x8xbf16>, vector<8x8xf32> -> vector<8x8xf32>
    %cst_22 = arith.constant dense<0xFF800000> : vector<8xf32>
    %28 = vector.multi_reduction <maximumf>, %27, %cst_22 [1] : vector<8x8xf32> to vector<8xf32>
    %29 = vector.shape_cast %28 : vector<8xf32> to vector<8x1xf32>
    %30 = vector.broadcast %29 : vector<8x1xf32> to vector<8x8xf32>
    %31 = arith.subf %27, %30 : vector<8x8xf32>
    %32 = math.exp %31 : vector<8x8xf32>
    %cst_23 = arith.constant dense<0.000000e+00> : vector<8xf32>
    %33 = vector.multi_reduction <add>, %32, %cst_23 [1] : vector<8x8xf32> to vector<8xf32>
    %34 = vector.shape_cast %33 : vector<8xf32> to vector<8x1xf32>
    %35 = tpu.reciprocal %34 {approx = true} : vector<8x1xf32> -> vector<8x1xf32>
    %36 = vector.broadcast %35 : vector<8x1xf32> to vector<8x8xf32>
    %37 = arith.mulf %32, %36 : vector<8x8xf32>
    %38 = arith.truncf %37 : vector<8x8xf32> to vector<8x8xbf16>
    %c0_24 = arith.constant 0 : index
    %c0_25 = arith.constant 0 : index
    %c8_26 = arith.constant 8 : index
    %39 = vector.load %arg5[%c0_24, %c0_25, %c8_26] : memref<1x8x32xbf16, #tpu.memory_space<vmem>>, vector<1x8x8xbf16>
    %40 = vector.shape_cast %39 : vector<1x8x8xbf16> to vector<8x8xbf16>
    %cst_27 = arith.constant dense<0.000000e+00> : vector<8x8xf32>
    %41 = tpu.matmul %38, %40, %cst_27 {dimension_numbers = #tpu.dot_dimension_numbers<[1], [0], [0], [1], [0, 0, 1, 1], [], []>} : vector<8x8xbf16>, vector<8x8xbf16>, vector<8x8xf32> -> vector<8x8xf32>
    %42 = arith.truncf %41 : vector<8x8xf32> to vector<8x8xbf16>
    %c0_28 = arith.constant 0 : index
    %c8_29 = arith.constant 8 : index
    %43 = vector.load %arg17[%c0_28, %c8_29] : memref<8x32xbf16, #tpu.memory_space<vmem>>, vector<8x8xbf16>
    tpu.vector_store %arg17[%c0_28, %c8_29], %42 {strides = array<i32>} : memref<8x32xbf16, #tpu.memory_space<vmem>>, vector<8x8xbf16>,
    %c0_30 = arith.constant 0 : index
    %c0_31 = arith.constant 0 : index
    %c16 = arith.constant 16 : index
    %44 = vector.load %arg3[%c0_30, %c0_31, %c16] : memref<1x8x32xbf16, #tpu.memory_space<vmem>>, vector<1x8x8xbf16>
    %45 = vector.shape_cast %44 : vector<1x8x8xbf16> to vector<8x8xbf16>
    %c0_32 = arith.constant 0 : index
    %c0_33 = arith.constant 0 : index
    %c16_34 = arith.constant 16 : index
    %46 = vector.load %arg4[%c0_32, %c0_33, %c16_34] : memref<1x8x32xbf16, #tpu.memory_space<vmem>>, vector<1x8x8xbf16>
    %47 = vector.shape_cast %46 : vector<1x8x8xbf16> to vector<8x8xbf16>
    %cst_35 = arith.constant dense<0.000000e+00> : vector<8x8xf32>
    %48 = tpu.matmul %45, %47, %cst_35 {dimension_numbers = #tpu.dot_dimension_numbers<[1], [1], [0], [0], [0, 0, 1, 0], [], []>} : vector<8x8xbf16>, vector<8x8xbf16>, vector<8x8xf32> -> vector<8x8xf32>
    %cst_36 = arith.constant dense<0xFF800000> : vector<8xf32>
    %49 = vector.multi_reduction <maximumf>, %48, %cst_36 [1] : vector<8x8xf32> to vector<8xf32>
    %50 = vector.shape_cast %49 : vector<8xf32> to vector<8x1xf32>
    %51 = vector.broadcast %50 : vector<8x1xf32> to vector<8x8xf32>
    %52 = arith.subf %48, %51 : vector<8x8xf32>
    %53 = math.exp %52 : vector<8x8xf32>
    %cst_37 = arith.constant dense<0.000000e+00> : vector<8xf32>
    %54 = vector.multi_reduction <add>, %53, %cst_37 [1] : vector<8x8xf32> to vector<8xf32>
    %55 = vector.shape_cast %54 : vector<8xf32> to vector<8x1xf32>
    %56 = tpu.reciprocal %55 {approx = true} : vector<8x1xf32> -> vector<8x1xf32>
    %57 = vector.broadcast %56 : vector<8x1xf32> to vector<8x8xf32>
    %58 = arith.mulf %53, %57 : vector<8x8xf32>
    %59 = arith.truncf %58 : vector<8x8xf32> to vector<8x8xbf16>
    %c0_38 = arith.constant 0 : index
    %c0_39 = arith.constant 0 : index
    %c16_40 = arith.constant 16 : index
    %60 = vector.load %arg5[%c0_38, %c0_39, %c16_40] : memref<1x8x32xbf16, #tpu.memory_space<vmem>>, vector<1x8x8xbf16>
    %61 = vector.shape_cast %60 : vector<1x8x8xbf16> to vector<8x8xbf16>
    %cst_41 = arith.constant dense<0.000000e+00> : vector<8x8xf32>
    %62 = tpu.matmul %59, %61, %cst_41 {dimension_numbers = #tpu.dot_dimension_numbers<[1], [0], [0], [1], [0, 0, 1, 1], [], []>} : vector<8x8xbf16>, vector<8x8xbf16>, vector<8x8xf32> -> vector<8x8xf32>
    %63 = arith.truncf %62 : vector<8x8xf32> to vector<8x8xbf16>
    %c0_42 = arith.constant 0 : index
    %c16_43 = arith.constant 16 : index
    %64 = vector.load %arg17[%c0_42, %c16_43] : memref<8x32xbf16, #tpu.memory_space<vmem>>, vector<8x8xbf16>
    tpu.vector_store %arg17[%c0_42, %c16_43], %63 {strides = array<i32>} : memref<8x32xbf16, #tpu.memory_space<vmem>>, vector<8x8xbf16>,
    %c0_44 = arith.constant 0 : index
    %c0_45 = arith.constant 0 : index
    %c24 = arith.constant 24 : index
    %65 = vector.load %arg3[%c0_44, %c0_45, %c24] : memref<1x8x32xbf16, #tpu.memory_space<vmem>>, vector<1x8x8xbf16>
    %66 = vector.shape_cast %65 : vector<1x8x8xbf16> to vector<8x8xbf16>
    %c0_46 = arith.constant 0 : index
    %c0_47 = arith.constant 0 : index
    %c24_48 = arith.constant 24 : index
    %67 = vector.load %arg4[%c0_46, %c0_47, %c24_48] : memref<1x8x32xbf16, #tpu.memory_space<vmem>>, vector<1x8x8xbf16>
    %68 = vector.shape_cast %67 : vector<1x8x8xbf16> to vector<8x8xbf16>
    %cst_49 = arith.constant dense<0.000000e+00> : vector<8x8xf32>
    %69 = tpu.matmul %66, %68, %cst_49 {dimension_numbers = #tpu.dot_dimension_numbers<[1], [1], [0], [0], [0, 0, 1, 0], [], []>} : vector<8x8xbf16>, vector<8x8xbf16>, vector<8x8xf32> -> vector<8x8xf32>
    %cst_50 = arith.constant dense<0xFF800000> : vector<8xf32>
    %70 = vector.multi_reduction <maximumf>, %69, %cst_50 [1] : vector<8x8xf32> to vector<8xf32>
    %71 = vector.shape_cast %70 : vector<8xf32> to vector<8x1xf32>
    %72 = vector.broadcast %71 : vector<8x1xf32> to vector<8x8xf32>
    %73 = arith.subf %69, %72 : vector<8x8xf32>
    %74 = math.exp %73 : vector<8x8xf32>
    %cst_51 = arith.constant dense<0.000000e+00> : vector<8xf32>
    %75 = vector.multi_reduction <add>, %74, %cst_51 [1] : vector<8x8xf32> to vector<8xf32>
    %76 = vector.shape_cast %75 : vector<8xf32> to vector<8x1xf32>
    %77 = tpu.reciprocal %76 {approx = true} : vector<8x1xf32> -> vector<8x1xf32>
    %78 = vector.broadcast %77 : vector<8x1xf32> to vector<8x8xf32>
    %79 = arith.mulf %74, %78 : vector<8x8xf32>
    %80 = arith.truncf %79 : vector<8x8xf32> to vector<8x8xbf16>
    %c0_52 = arith.constant 0 : index
    %c0_53 = arith.constant 0 : index
    %c24_54 = arith.constant 24 : index
    %81 = vector.load %arg5[%c0_52, %c0_53, %c24_54] : memref<1x8x32xbf16, #tpu.memory_space<vmem>>, vector<1x8x8xbf16>
    %82 = vector.shape_cast %81 : vector<1x8x8xbf16> to vector<8x8xbf16>
    %cst_55 = arith.constant dense<0.000000e+00> : vector<8x8xf32>
    %83 = tpu.matmul %80, %82, %cst_55 {dimension_numbers = #tpu.dot_dimension_numbers<[1], [0], [0], [1], [0, 0, 1, 1], [], []>} : vector<8x8xbf16>, vector<8x8xbf16>, vector<8x8xf32> -> vector<8x8xf32>
    %84 = arith.truncf %83 : vector<8x8xf32> to vector<8x8xbf16>
    %c0_56 = arith.constant 0 : index
    %c24_57 = arith.constant 24 : index
    %85 = vector.load %arg17[%c0_56, %c24_57] : memref<8x32xbf16, #tpu.memory_space<vmem>>, vector<8x8xbf16>
    tpu.vector_store %arg17[%c0_56, %c24_57], %84 {strides = array<i32>} : memref<8x32xbf16, #tpu.memory_space<vmem>>, vector<8x8xbf16>,
    %c0_58 = arith.constant 0 : index
    %c0_59 = arith.constant 0 : index
    %86 = vector.load %arg17[%c0_58, %c0_59] : memref<8x32xbf16, #tpu.memory_space<vmem>>, vector<8x32xbf16>
    %c0_60 = arith.constant 0 : index
    %c0_61 = arith.constant 0 : index
    %87 = vector.load %arg6[%c0_60, %c0_61] : memref<32x32xbf16, #tpu.memory_space<vmem>>, vector<32x32xbf16>
    %cst_62 = arith.constant dense<0.000000e+00> : vector<8x32xf32>
    %88 = tpu.matmul %86, %87, %cst_62 {dimension_numbers = #tpu.dot_dimension_numbers<[1], [0], [0], [1], [0, 0, 1, 1], [], []>} : vector<8x32xbf16>, vector<32x32xbf16>, vector<8x32xf32> -> vector<8x32xf32>
    %c0_63 = arith.constant 0 : index
    %c0_64 = arith.constant 0 : index
    %89 = vector.load %arg7[%c0_63, %c0_64] : memref<1x32xf32, #tpu.memory_space<vmem>>, vector<1x32xf32>
    %90 = vector.broadcast %89 : vector<1x32xf32> to vector<8x32xf32>
    %91 = arith.addf %88, %90 : vector<8x32xf32>
    %92 = arith.addf %1, %91 : vector<8x32xf32>
    %c0_65 = arith.constant 0 : index
    %c0_66 = arith.constant 0 : index
    %93 = vector.load %arg12[%c0_65, %c0_66] : memref<1x32xf32, #tpu.memory_space<vmem>>, vector<1x32xf32>
    %c0_67 = arith.constant 0 : index
    %c0_68 = arith.constant 0 : index
    %94 = vector.load %arg13[%c0_67, %c0_68] : memref<1x32xf32, #tpu.memory_space<vmem>>, vector<1x32xf32>
    %cst_69 = arith.constant dense<0.000000e+00> : vector<8xf32>
    %95 = vector.multi_reduction <add>, %92, %cst_69 [1] : vector<8x32xf32> to vector<8xf32>
    %96 = vector.shape_cast %95 : vector<8xf32> to vector<8x1xf32>
    %cst_70 = arith.constant 3.200000e+01 : f32
    %97 = vector.broadcast %cst_70 : f32 to vector<8x1xf32>
    %98 = arith.divf %96, %97 : vector<8x1xf32>
    %99 = vector.broadcast %98 : vector<8x1xf32> to vector<8x32xf32>
    %100 = arith.subf %92, %99 : vector<8x32xf32>
    %101 = arith.mulf %100, %100 : vector<8x32xf32>
    %cst_71 = arith.constant dense<0.000000e+00> : vector<8xf32>
    %102 = vector.multi_reduction <add>, %101, %cst_71 [1] : vector<8x32xf32> to vector<8xf32>
    %103 = vector.shape_cast %102 : vector<8xf32> to vector<8x1xf32>
    %cst_72 = arith.constant 3.200000e+01 : f32
    %104 = vector.broadcast %cst_72 : f32 to vector<8x1xf32>
    %105 = arith.divf %103, %104 : vector<8x1xf32>
    %cst_73 = arith.constant 9.99999974E-6 : f32
    %106 = vector.broadcast %cst_73 : f32 to vector<8x1xf32>
    %107 = arith.addf %105, %106 : vector<8x1xf32>
    %108 = math.rsqrt %107 : vector<8x1xf32>
    %109 = vector.broadcast %108 : vector<8x1xf32> to vector<8x32xf32>
    %110 = arith.mulf %100, %109 : vector<8x32xf32>
    %111 = vector.broadcast %93 : vector<1x32xf32> to vector<8x32xf32>
    %112 = arith.mulf %110, %111 : vector<8x32xf32>
    %113 = vector.broadcast %94 : vector<1x32xf32> to vector<8x32xf32>
    %114 = arith.addf %112, %113 : vector<8x32xf32>
    %115 = arith.truncf %114 : vector<8x32xf32> to vector<8x32xbf16>
    %c0_74 = arith.constant 0 : index
    %c0_75 = arith.constant 0 : index
    %116 = vector.load %arg8[%c0_74, %c0_75] : memref<32x32xbf16, #tpu.memory_space<vmem>>, vector<32x32xbf16>
    %cst_76 = arith.constant dense<0.000000e+00> : vector<8x32xf32>
    %117 = tpu.matmul %115, %116, %cst_76 {dimension_numbers = #tpu.dot_dimension_numbers<[1], [0], [0], [1], [0, 0, 1, 1], [], []>} : vector<8x32xbf16>, vector<32x32xbf16>, vector<8x32xf32> -> vector<8x32xf32>
    %c0_77 = arith.constant 0 : index
    %c0_78 = arith.constant 0 : index
    %118 = vector.load %arg9[%c0_77, %c0_78] : memref<1x32xf32, #tpu.memory_space<vmem>>, vector<1x32xf32>
    %119 = vector.broadcast %118 : vector<1x32xf32> to vector<8x32xf32>
    %120 = arith.addf %117, %119 : vector<8x32xf32>
    %cst_79 = arith.constant 0.000000e+00 : f32
    %121 = vector.broadcast %cst_79 : f32 to vector<8x32xf32>
    %122 = arith.maximumf %120, %121 : vector<8x32xf32>
    %123 = arith.truncf %122 : vector<8x32xf32> to vector<8x32xbf16>
    %c0_80 = arith.constant 0 : index
    %c0_81 = arith.constant 0 : index
    %124 = vector.load %arg10[%c0_80, %c0_81] : memref<32x32xbf16, #tpu.memory_space<vmem>>, vector<32x32xbf16>
    %cst_82 = arith.constant dense<0.000000e+00> : vector<8x32xf32>
    %125 = tpu.matmul %123, %124, %cst_82 {dimension_numbers = #tpu.dot_dimension_numbers<[1], [0], [0], [1], [0, 0, 1, 1], [], []>} : vector<8x32xbf16>, vector<32x32xbf16>, vector<8x32xf32> -> vector<8x32xf32>
    %c0_83 = arith.constant 0 : index
    %c0_84 = arith.constant 0 : index
    %126 = vector.load %arg11[%c0_83, %c0_84] : memref<1x32xf32, #tpu.memory_space<vmem>>, vector<1x32xf32>
    %127 = vector.broadcast %126 : vector<1x32xf32> to vector<8x32xf32>
    %128 = arith.addf %125, %127 : vector<8x32xf32>
    %129 = arith.addf %114, %128 : vector<8x32xf32>
    %c0_85 = arith.constant 0 : index
    %c0_86 = arith.constant 0 : index
    %130 = vector.load %arg14[%c0_85, %c0_86] : memref<1x32xf32, #tpu.memory_space<vmem>>, vector<1x32xf32>
    %c0_87 = arith.constant 0 : index
    %c0_88 = arith.constant 0 : index
    %131 = vector.load %arg15[%c0_87, %c0_88] : memref<1x32xf32, #tpu.memory_space<vmem>>, vector<1x32xf32>
    %cst_89 = arith.constant dense<0.000000e+00> : vector<8xf32>
    %132 = vector.multi_reduction <add>, %129, %cst_89 [1] : vector<8x32xf32> to vector<8xf32>
    %133 = vector.shape_cast %132 : vector<8xf32> to vector<8x1xf32>
    %cst_90 = arith.constant 3.200000e+01 : f32
    %134 = vector.broadcast %cst_90 : f32 to vector<8x1xf32>
    %135 = arith.divf %133, %134 : vector<8x1xf32>
    %136 = vector.broadcast %135 : vector<8x1xf32> to vector<8x32xf32>
    %137 = arith.subf %129, %136 : vector<8x32xf32>
    %138 = arith.mulf %137, %137 : vector<8x32xf32>
    %cst_91 = arith.constant dense<0.000000e+00> : vector<8xf32>
    %139 = vector.multi_reduction <add>, %138, %cst_91 [1] : vector<8x32xf32> to vector<8xf32>
    %140 = vector.shape_cast %139 : vector<8xf32> to vector<8x1xf32>
    %cst_92 = arith.constant 3.200000e+01 : f32
    %141 = vector.broadcast %cst_92 : f32 to vector<8x1xf32>
    %142 = arith.divf %140, %141 : vector<8x1xf32>
    %cst_93 = arith.constant 9.99999974E-6 : f32
    %143 = vector.broadcast %cst_93 : f32 to vector<8x1xf32>
    %144 = arith.addf %142, %143 : vector<8x1xf32>
    %145 = math.rsqrt %144 : vector<8x1xf32>
    %146 = vector.broadcast %145 : vector<8x1xf32> to vector<8x32xf32>
    %147 = arith.mulf %137, %146 : vector<8x32xf32>
    %148 = vector.broadcast %130 : vector<1x32xf32> to vector<8x32xf32>
    %149 = arith.mulf %147, %148 : vector<8x32xf32>
    %150 = vector.broadcast %131 : vector<1x32xf32> to vector<8x32xf32>
    %151 = arith.addf %149, %150 : vector<8x32xf32>
    %c0_94 = arith.constant 0 : index
    %c0_95 = arith.constant 0 : index
    %c0_96 = arith.constant 0 : index
    %152 = vector.load %arg16[%c0_94, %c0_95, %c0_96] : memref<1x8x32xf32, #tpu.memory_space<vmem>>, vector<1x8x32xf32>
    %153 = vector.shape_cast %152 : vector<1x8x32xf32> to vector<8x32xf32>
    %154 = vector.shape_cast %151 : vector<8x32xf32> to vector<1x8x32xf32>
    tpu.vector_store %arg16[%c0_94, %c0_95, %c0_96], %154 {strides = array<i32>} : memref<1x8x32xf32, #tpu.memory_space<vmem>>, vector<1x8x32xf32>,
    return
  }
  func.func @transform_0(%arg0: i32, %arg1: i32) -> (i32, i32, i32) {
    %c0_i32 = arith.constant 0 : i32
    %c0_i32_0 = arith.constant 0 : i32
    return %arg0, %arg1, %c0_i32 : i32, i32, i32
  }
  func.func @transform_1(%arg0: i32, %arg1: i32) -> (i32, i32, i32) {
    %c0_i32 = arith.constant 0 : i32
    %c0_i32_0 = arith.constant 0 : i32
    return %arg0, %arg1, %c0_i32 : i32, i32, i32
  }
  func.func @transform_2(%arg0: i32, %arg1: i32) -> (i32, i32, i32) {
    %c0_i32 = arith.constant 0 : i32
    %c0_i32_0 = arith.constant 0 : i32
    %c0_i32_1 = arith.constant 0 : i32
    return %arg0, %c0_i32, %c0_i32_0 : i32, i32, i32
  }
  func.func @transform_3(%arg0: i32, %arg1: i32) -> (i32, i32, i32) {
    %c0_i32 = arith.constant 0 : i32
    %c0_i32_0 = arith.constant 0 : i32
    %c0_i32_1 = arith.constant 0 : i32
    return %arg0, %c0_i32, %c0_i32_0 : i32, i32, i32
  }
  func.func @transform_4(%arg0: i32, %arg1: i32) -> (i32, i32) {
    %c0_i32 = arith.constant 0 : i32
    %c0_i32_0 = arith.constant 0 : i32
    %c0_i32_1 = arith.constant 0 : i32
    return %c0_i32, %c0_i32_0 : i32, i32
  }
  func.func @transform_5(%arg0: i32, %arg1: i32) -> (i32, i32) {
    %c0_i32 = arith.constant 0 : i32
    %c0_i32_0 = arith.constant 0 : i32
    %c0_i32_1 = arith.constant 0 : i32
    return %c0_i32, %c0_i32_0 : i32, i32
  }
  func.func @transform_6(%arg0: i32, %arg1: i32) -> (i32, i32) {
    %c0_i32 = arith.constant 0 : i32
    %c0_i32_0 = arith.constant 0 : i32
    %c0_i32_1 = arith.constant 0 : i32
    return %c0_i32, %c0_i32_0 : i32, i32
  }
  func.func @transform_7(%arg0: i32, %arg1: i32) -> (i32, i32) {
    %c0_i32 = arith.constant 0 : i32
    %c0_i32_0 = arith.constant 0 : i32
    %c0_i32_1 = arith.constant 0 : i32
    return %c0_i32, %c0_i32_0 : i32, i32
  }
  func.func @transform_8(%arg0: i32, %arg1: i32) -> (i32, i32) {
    %c0_i32 = arith.constant 0 : i32
    %c0_i32_0 = arith.constant 0 : i32
    %c0_i32_1 = arith.constant 0 : i32
    return %c0_i32, %c0_i32_0 : i32, i32
  }
  func.func @transform_9(%arg0: i32, %arg1: i32) -> (i32, i32) {
    %c0_i32 = arith.constant 0 : i32
    %c0_i32_0 = arith.constant 0 : i32
    %c0_i32_1 = arith.constant 0 : i32
    return %c0_i32, %c0_i32_0 : i32, i32
  }
  func.func @transform_10(%arg0: i32, %arg1: i32) -> (i32, i32) {
    %c0_i32 = arith.constant 0 : i32
    %c0_i32_0 = arith.constant 0 : i32
    %c0_i32_1 = arith.constant 0 : i32
    return %c0_i32, %c0_i32_0 : i32, i32
  }
  func.func @transform_11(%arg0: i32, %arg1: i32) -> (i32, i32) {
    %c0_i32 = arith.constant 0 : i32
    %c0_i32_0 = arith.constant 0 : i32
    %c0_i32_1 = arith.constant 0 : i32
    return %c0_i32, %c0_i32_0 : i32, i32
  }
  func.func @transform_12(%arg0: i32, %arg1: i32) -> (i32, i32) {
    %c0_i32 = arith.constant 0 : i32
    %c0_i32_0 = arith.constant 0 : i32
    %c0_i32_1 = arith.constant 0 : i32
    return %c0_i32, %c0_i32_0 : i32, i32
  }
  func.func @transform_13(%arg0: i32, %arg1: i32) -> (i32, i32) {
    %c0_i32 = arith.constant 0 : i32
    %c0_i32_0 = arith.constant 0 : i32
    %c0_i32_1 = arith.constant 0 : i32
    return %c0_i32, %c0_i32_0 : i32, i32
  }
  func.func @transform_14(%arg0: i32, %arg1: i32) -> (i32, i32, i32) {
    %c0_i32 = arith.constant 0 : i32
    %c0_i32_0 = arith.constant 0 : i32
    return %arg0, %arg1, %c0_i32 : i32, i32, i32
  }
}

</mosaic_0001>

<llo_original>
// kernel: tpu_custom_call.1
$region0: #{tpu_custom_call.1}
  #allocation0 [shape = 'u32[]', space=smem, size = 0x4, offset = 0x4, fixed_abs, tag = 'smem constant byte address 0x4 - core index']
  #allocation1 [shape = 'u32[72,128]{1,0:T(1,128)}', space=vmem, size = 0x9000, scoped, tag = 'internal scratch']
  #allocation2 [shape = 'bf16[8,32]{1,0:T(8,128)(2,1)}', space=vmem, size = 0x800, scoped, tag = 'scratch operand']
  %s0 = inlined_call_operand.hbm [shape: f32[2,8,32], index: 0, kind: input, shape index: {}]
  %s1 = inlined_call_operand.hbm [shape: bf16[2,8,32], index: 1, kind: input, shape index: {}]
  %s2 = inlined_call_operand.hbm [shape: bf16[2,8,32], index: 2, kind: input, shape index: {}]
  %s3 = inlined_call_operand.hbm [shape: bf16[2,8,32], index: 3, kind: input, shape index: {}]
  %s4 = inlined_call_operand.hbm [shape: bf16[32,32], index: 4, kind: input, shape index: {}]
  %s5 = inlined_call_operand.vmem [shape: f32[1,32], index: 5, kind: input, shape index: {}]
  %s6 = inlined_call_operand.hbm [shape: bf16[32,32], index: 6, kind: input, shape index: {}]
  %s7 = inlined_call_operand.vmem [shape: f32[1,32], index: 7, kind: input, shape index: {}]
  %s8 = inlined_call_operand.hbm [shape: bf16[32,32], index: 8, kind: input, shape index: {}]
  %s9 = inlined_call_operand.vmem [shape: f32[1,32], index: 9, kind: input, shape index: {}]
  %s10 = inlined_call_operand.vmem [shape: f32[1,32], index: 10, kind: input, shape index: {}]
  %s11 = inlined_call_operand.vmem [shape: f32[1,32], index: 11, kind: input, shape index: {}]
  %s12 = inlined_call_operand.vmem [shape: f32[1,32], index: 12, kind: input, shape index: {}]
  %s13 = inlined_call_operand.vmem [shape: f32[1,32], index: 13, kind: input, shape index: {}]
  %s14 = inlined_call_operand.hbm [shape: f32[2,8,32], index: 14, kind: output, shape index: {}]
  %s15 = sld [smem:[#allocation0]]
  $region117: #{tpu_custom_call.1} parent=0
    _
  %s17 = ssub.s32 1, %s15
  %s18 = scalar_select 0, %s17, %s15
  $region1: #{tpu_custom_call.1} parent=0
    #allocation3 [shape = 'u8[8192]{0}', space=vmem, size = 0x2000, scoped, tag = 'input window, operand 0']
    #allocation4 [shape = 's32[2]{0}', space=sflag, size = 0x8, scoped, tag = 'scoped memory for tpu_custom_call.1']
    #allocation5 [shape = 's32[2]{0}', space=sflag, size = 0x8, scoped, tag = 'scoped memory for tpu_custom_call.1']
    #allocation6 [shape = 'u8[4096]{0}', space=vmem, size = 0x1000, scoped, tag = 'input window, operand 1']
    #allocation7 [shape = 's32[2]{0}', space=sflag, size = 0x8, scoped, tag = 'scoped memory for tpu_custom_call.1']
    #allocation8 [shape = 'u8[4096]{0}', space=vmem, size = 0x1000, scoped, tag = 'input window, operand 2']
    #allocation9 [shape = 'u8[4096]{0}', space=vmem, size = 0x1000, scoped, tag = 'input window, operand 3']
    #allocation10 [shape = 's32[2]{0}', space=sflag, size = 0x8, scoped, tag = 'scoped memory for tpu_custom_call.1']
    #allocation11 [shape = 'u8[8192]{0}', space=vmem, size = 0x2000, scoped, tag = 'input window, operand 4, single buffered']
    #allocation12 [shape = 'u8[8192]{0}', space=vmem, size = 0x2000, scoped, tag = 'input window, operand 6, single buffered']
    #allocation13 [shape = 's32[1]{0}', space=sflag, size = 0x4, scoped, tag = 'scoped memory for tpu_custom_call.1']
    #allocation14 [shape = 'u8[8192]{0}', space=vmem, size = 0x2000, scoped, tag = 'input window, operand 8, single buffered']
    #allocation15 [shape = 'u8[8192]{0}', space=vmem, size = 0x2000, scoped, tag = 'output window, operand 0']
    %19 = vsyncpa [#allocation4], 0
    %s20 = scalar_lea.sflag [#allocation4], 1
    %21 = vsyncpa %s20, 0
    %22 = vsyncpa [#allocation7], 0
    %s23 = scalar_lea.sflag [#allocation7], 1
    %24 = vsyncpa %s23, 0
    %25 = vsyncpa [#allocation10], 0
    %s26 = scalar_lea.sflag [#allocation10], 1
    %27 = vsyncpa %s26, 0
    %28 = vsyncpa [#allocation13], 0
    %29 = vsyncpa [#allocation5], 0
    %s30 = scalar_lea.sflag [#allocation5], 1
    %31 = vsyncpa %s30, 0
    loop: start=0, step=1, limit=4
    $region2: #{tpu_custom_call.1} parent=1 // loop_pre_header
      _
    $region3: #{tpu_custom_call.1} parent=1 // loop_header
      %s33 = sphi 0, %s37
      %p34 = scmp.ge.s32.totalorder %s33, 4
      %s40 = sphi 0, %s52
      %s41 = sphi 0, %s48
      %s42 = sphi 0, %s40
      %s43 = sphi 0, %s41
      %s44 = sphi 0, %s42
      %s45 = sphi 0, %s43
      %s57 = sphi 0, %s59
      %s60 = sphi 0, %s57
      %s61 = sphi 0, %s60
      %s77 = sphi 0, %s61
      %s85 = sphi 0, %s87
      %s88 = sphi 0, %s85
      %s89 = sphi 0, %s88
      %s105 = sphi 0, %s89
      %s111 = sphi 0, %s113
      %s114 = sphi 0, %s111
      %s115 = sphi 0, %s114
      %s131 = sphi 0, %s115
      %s137 = sphi 0, %s139
      %s140 = sphi 0, %s137
      %s141 = sphi 0, %s140
      %s157 = sphi 0, %s141
      %s161 = sphi 0, %s161
      %s163 = sphi 0, %s161
      %s164 = sphi 0, %s163
      %s178 = sphi 0, %s164
      %s182 = sphi 0, %s182
      %s184 = sphi 0, %s182
      %s185 = sphi 0, %s184
      %s199 = sphi 0, %s185
      %s203 = sphi 0, %s203
      %s205 = sphi 0, %s203
      %s206 = sphi 0, %s205
      %s220 = sphi 0, %s206
      %s224 = sphi 0, %s224
      %s226 = sphi 0, %s224
      %s227 = sphi 0, %s226
      %s241 = sphi 0, %s227
      %s245 = sphi 0, %s245
      %s247 = sphi 0, %s245
      %s248 = sphi 0, %s247
      %s262 = sphi 0, %s248
      %s266 = sphi 0, %s266
      %s268 = sphi 0, %s266
      %s269 = sphi 0, %s268
      %s283 = sphi 0, %s269
      %s287 = sphi 0, %s287
      %s289 = sphi 0, %s287
      %s290 = sphi 0, %s289
      %s304 = sphi 0, %s290
      %s308 = sphi 0, %s308
      %s310 = sphi 0, %s308
      %s311 = sphi 0, %s310
      %s325 = sphi 0, %s311
      %s329 = sphi 0, %s329
      %s331 = sphi 0, %s329
      %s332 = sphi 0, %s331
      %s346 = sphi 0, %s332
      %s350 = sphi 0, %s350
      %s352 = sphi 0, %s350
      %s353 = sphi 0, %s352
      %s367 = sphi 0, %s353
      %s375 = sphi 0, %s377
      %s378 = sphi 0, %s375
      %s379 = sphi 0, %s378
      %s395 = sphi 0, %s379
    $region4: #{tpu_custom_call.1} parent=1 // loop_header_branch
      %36 = sbr.rel (%p34) target = $region8
    $region5: #{tpu_custom_call.1} parent=1 // loop_body
      %s38 = ssub.s32 %s33, 1
      %s39 = ssub.s32 %s33, 2
      %s46 = sadd.s32 1, %s41
      %p47 = scmp.ge.s32.totalorder %s46, 1
      %s48 = scalar_select %p47, 0, %s46
      %s49 = sadd.s32 1, %s40
      %s50 = scalar_select %p47, %s49, %s40
      %p51 = scmp.ge.s32.totalorder %s50, 2
      %s52 = scalar_select %p51, 0, %s50
      %s53 = ssub.s32 %s40, %s52
      %s54 = ssub.s32 %s41, %s48
      %s55 = sor.u32 %s53, %s54
      %p56 = scmp.eq.s32.totalorder %s55, 0
      %s58 = sadd.s32 %s57, 1
      %s59 = scalar_select %p56, %s57, %s58
      %p62 = pneg %p56
      %p63 = scmp.eq.s32.totalorder %s33, 1
      %p64 = por %p62, %p63
      %p65 = scmp.ne.s32.totalorder %s57, %s60
      %p66 = scmp.eq.s32.totalorder %s33, 0
      %p67 = por %p65, %p66
      %p68 = scmp.ne.s32.totalorder %s57, %s60
      %p69 = scmp.eq.s32.totalorder %s38, 1
      %p70 = por %p68, %p69
      %p71 = scmp.ne.s32.totalorder %s60, %s61
      %p72 = scmp.eq.s32.totalorder %s38, 0
      %p73 = por %p71, %p72
      %p74 = scmp.ne.s32.totalorder %s60, %s61
      %p75 = scmp.eq.s32.totalorder %s39, 1
      %p76 = por %p74, %p75
      %p78 = scmp.ne.s32.totalorder %s61, %s77
      %p79 = scmp.eq.s32.totalorder %s39, 0
      %p80 = por %p78, %p79
      %s81 = ssub.s32 %s40, %s52
      %s82 = ssub.s32 %s41, %s48
      %s83 = sor.u32 %s81, %s82
      %p84 = scmp.eq.s32.totalorder %s83, 0
      %s86 = sadd.s32 %s85, 1
      %s87 = scalar_select %p84, %s85, %s86
      %p90 = pneg %p84
      %p91 = scmp.eq.s32.totalorder %s33, 1
      %p92 = por %p90, %p91
      %p93 = scmp.ne.s32.totalorder %s85, %s88
      %p94 = scmp.eq.s32.totalorder %s33, 0
      %p95 = por %p93, %p94
      %p96 = scmp.ne.s32.totalorder %s85, %s88
      %p97 = scmp.eq.s32.totalorder %s38, 1
      %p98 = por %p96, %p97
      %p99 = scmp.ne.s32.totalorder %s88, %s89
      %p100 = scmp.eq.s32.totalorder %s38, 0
      %p101 = por %p99, %p100
      %p102 = scmp.ne.s32.totalorder %s88, %s89
      %p103 = scmp.eq.s32.totalorder %s39, 1
      %p104 = por %p102, %p103
      %p106 = scmp.ne.s32.totalorder %s89, %s105
      %p107 = scmp.eq.s32.totalorder %s39, 0
      %p108 = por %p106, %p107
      %s109 = ssub.s32 %s40, %s52
      %p110 = scmp.eq.s32.totalorder %s109, 0
      %s112 = sadd.s32 %s111, 1
      %s113 = scalar_select %p110, %s111, %s112
      %p116 = pneg %p110
      %p117 = scmp.eq.s32.totalorder %s33, 1
      %p118 = por %p116, %p117
      %p119 = scmp.ne.s32.totalorder %s111, %s114
      %p120 = scmp.eq.s32.totalorder %s33, 0
      %p121 = por %p119, %p120
      %p122 = scmp.ne.s32.totalorder %s111, %s114
      %p123 = scmp.eq.s32.totalorder %s38, 1
      %p124 = por %p122, %p123
      %p125 = scmp.ne.s32.totalorder %s114, %s115
      %p126 = scmp.eq.s32.totalorder %s38, 0
      %p127 = por %p125, %p126
      %p128 = scmp.ne.s32.totalorder %s114, %s115
      %p129 = scmp.eq.s32.totalorder %s39, 1
      %p130 = por %p128, %p129
      %p132 = scmp.ne.s32.totalorder %s115, %s131
      %p133 = scmp.eq.s32.totalorder %s39, 0
      %p134 = por %p132, %p133
      %s135 = ssub.s32 %s40, %s52
      %p136 = scmp.eq.s32.totalorder %s135, 0
      %s138 = sadd.s32 %s137, 1
      %s139 = scalar_select %p136, %s137, %s138
      %p142 = pneg %p136
      %p143 = scmp.eq.s32.totalorder %s33, 1
      %p144 = por %p142, %p143
      %p145 = scmp.ne.s32.totalorder %s137, %s140
      %p146 = scmp.eq.s32.totalorder %s33, 0
      %p147 = por %p145, %p146
      %p148 = scmp.ne.s32.totalorder %s137, %s140
      %p149 = scmp.eq.s32.totalorder %s38, 1
      %p150 = por %p148, %p149
      %p151 = scmp.ne.s32.totalorder %s140, %s141
      %p152 = scmp.eq.s32.totalorder %s38, 0
      %p153 = por %p151, %p152
      %p154 = scmp.ne.s32.totalorder %s140, %s141
      %p155 = scmp.eq.s32.totalorder %s39, 1
      %p156 = por %p154, %p155
      %p158 = scmp.ne.s32.totalorder %s141, %s157
      %p159 = scmp.eq.s32.totalorder %s39, 0
      %p160 = por %p158, %p159
      %s162 = sadd.s32 %s161, 1
      %p165 = scmp.eq.s32.totalorder %s33, 1
      %p166 = scmp.ne.s32.totalorder %s161, %s163
      %p167 = scmp.eq.s32.totalorder %s33, 0
      %p168 = por %p166, %p167
      %p169 = scmp.ne.s32.totalorder %s161, %s163
      %p170 = scmp.eq.s32.totalorder %s38, 1
      %p171 = por %p169, %p170
      %p172 = scmp.ne.s32.totalorder %s163, %s164
      %p173 = scmp.eq.s32.totalorder %s38, 0
      %p174 = por %p172, %p173
      %p175 = scmp.ne.s32.totalorder %s163, %s164
      %p176 = scmp.eq.s32.totalorder %s39, 1
      %p177 = por %p175, %p176
      %p179 = scmp.ne.s32.totalorder %s164, %s178
      %p180 = scmp.eq.s32.totalorder %s39, 0
      %p181 = por %p179, %p180
      %s183 = sadd.s32 %s182, 1
      %p186 = scmp.eq.s32.totalorder %s33, 1
      %p187 = scmp.ne.s32.totalorder %s182, %s184
      %p188 = scmp.eq.s32.totalorder %s33, 0
      %p189 = por %p187, %p188
      %p190 = scmp.ne.s32.totalorder %s182, %s184
      %p191 = scmp.eq.s32.totalorder %s38, 1
      %p192 = por %p190, %p191
      %p193 = scmp.ne.s32.totalorder %s184, %s185
      %p194 = scmp.eq.s32.totalorder %s38, 0
      %p195 = por %p193, %p194
      %p196 = scmp.ne.s32.totalorder %s184, %s185
      %p197 = scmp.eq.s32.totalorder %s39, 1
      %p198 = por %p196, %p197
      %p200 = scmp.ne.s32.totalorder %s185, %s199
      %p201 = scmp.eq.s32.totalorder %s39, 0
      %p202 = por %p200, %p201
      %s204 = sadd.s32 %s203, 1
      %p207 = scmp.eq.s32.totalorder %s33, 1
      %p208 = scmp.ne.s32.totalorder %s203, %s205
      %p209 = scmp.eq.s32.totalorder %s33, 0
      %p210 = por %p208, %p209
      %p211 = scmp.ne.s32.totalorder %s203, %s205
      %p212 = scmp.eq.s32.totalorder %s38, 1
      %p213 = por %p211, %p212
      %p214 = scmp.ne.s32.totalorder %s205, %s206
      %p215 = scmp.eq.s32.totalorder %s38, 0
      %p216 = por %p214, %p215
      %p217 = scmp.ne.s32.totalorder %s205, %s206
      %p218 = scmp.eq.s32.totalorder %s39, 1
      %p219 = por %p217, %p218
      %p221 = scmp.ne.s32.totalorder %s206, %s220
      %p222 = scmp.eq.s32.totalorder %s39, 0
      %p223 = por %p221, %p222
      %s225 = sadd.s32 %s224, 1
      %p228 = scmp.eq.s32.totalorder %s33, 1
      %p229 = scmp.ne.s32.totalorder %s224, %s226
      %p230 = scmp.eq.s32.totalorder %s33, 0
      %p231 = por %p229, %p230
      %p232 = scmp.ne.s32.totalorder %s224, %s226
      %p233 = scmp.eq.s32.totalorder %s38, 1
      %p234 = por %p232, %p233
      %p235 = scmp.ne.s32.totalorder %s226, %s227
      %p236 = scmp.eq.s32.totalorder %s38, 0
      %p237 = por %p235, %p236
      %p238 = scmp.ne.s32.totalorder %s226, %s227
      %p239 = scmp.eq.s32.totalorder %s39, 1
      %p240 = por %p238, %p239
      %p242 = scmp.ne.s32.totalorder %s227, %s241
      %p243 = scmp.eq.s32.totalorder %s39, 0
      %p244 = por %p242, %p243
      %s246 = sadd.s32 %s245, 1
      %p249 = scmp.eq.s32.totalorder %s33, 1
      %p250 = scmp.ne.s32.totalorder %s245, %s247
      %p251 = scmp.eq.s32.totalorder %s33, 0
      %p252 = por %p250, %p251
      %p253 = scmp.ne.s32.totalorder %s245, %s247
      %p254 = scmp.eq.s32.totalorder %s38, 1
      %p255 = por %p253, %p254
      %p256 = scmp.ne.s32.totalorder %s247, %s248
      %p257 = scmp.eq.s32.totalorder %s38, 0
      %p258 = por %p256, %p257
      %p259 = scmp.ne.s32.totalorder %s247, %s248
      %p260 = scmp.eq.s32.totalorder %s39, 1
      %p261 = por %p259, %p260
      %p263 = scmp.ne.s32.totalorder %s248, %s262
      %p264 = scmp.eq.s32.totalorder %s39, 0
      %p265 = por %p263, %p264
      %s267 = sadd.s32 %s266, 1
      %p270 = scmp.eq.s32.totalorder %s33, 1
      %p271 = scmp.ne.s32.totalorder %s266, %s268
      %p272 = scmp.eq.s32.totalorder %s33, 0
      %p273 = por %p271, %p272
      %p274 = scmp.ne.s32.totalorder %s266, %s268
      %p275 = scmp.eq.s32.totalorder %s38, 1
      %p276 = por %p274, %p275
      %p277 = scmp.ne.s32.totalorder %s268, %s269
      %p278 = scmp.eq.s32.totalorder %s38, 0
      %p279 = por %p277, %p278
      %p280 = scmp.ne.s32.totalorder %s268, %s269
      %p281 = scmp.eq.s32.totalorder %s39, 1
      %p282 = por %p280, %p281
      %p284 = scmp.ne.s32.totalorder %s269, %s283
      %p285 = scmp.eq.s32.totalorder %s39, 0
      %p286 = por %p284, %p285
      %s288 = sadd.s32 %s287, 1
      %p291 = scmp.eq.s32.totalorder %s33, 1
      %p292 = scmp.ne.s32.totalorder %s287, %s289
      %p293 = scmp.eq.s32.totalorder %s33, 0
      %p294 = por %p292, %p293
      %p295 = scmp.ne.s32.totalorder %s287, %s289
      %p296 = scmp.eq.s32.totalorder %s38, 1
      %p297 = por %p295, %p296
      %p298 = scmp.ne.s32.totalorder %s289, %s290
      %p299 = scmp.eq.s32.totalorder %s38, 0
      %p300 = por %p298, %p299
      %p301 = scmp.ne.s32.totalorder %s289, %s290
      %p302 = scmp.eq.s32.totalorder %s39, 1
      %p303 = por %p301, %p302
      %p305 = scmp.ne.s32.totalorder %s290, %s304
      %p306 = scmp.eq.s32.totalorder %s39, 0
      %p307 = por %p305, %p306
      %s309 = sadd.s32 %s308, 1
      %p312 = scmp.eq.s32.totalorder %s33, 1
      %p313 = scmp.ne.s32.totalorder %s308, %s310
      %p314 = scmp.eq.s32.totalorder %s33, 0
      %p315 = por %p313, %p314
      %p316 = scmp.ne.s32.totalorder %s308, %s310
      %p317 = scmp.eq.s32.totalorder %s38, 1
      %p318 = por %p316, %p317
      %p319 = scmp.ne.s32.totalorder %s310, %s311
      %p320 = scmp.eq.s32.totalorder %s38, 0
      %p321 = por %p319, %p320
      %p322 = scmp.ne.s32.totalorder %s310, %s311
      %p323 = scmp.eq.s32.totalorder %s39, 1
      %p324 = por %p322, %p323
      %p326 = scmp.ne.s32.totalorder %s311, %s325
      %p327 = scmp.eq.s32.totalorder %s39, 0
      %p328 = por %p326, %p327
      %s330 = sadd.s32 %s329, 1
      %p333 = scmp.eq.s32.totalorder %s33, 1
      %p334 = scmp.ne.s32.totalorder %s329, %s331
      %p335 = scmp.eq.s32.totalorder %s33, 0
      %p336 = por %p334, %p335
      %p337 = scmp.ne.s32.totalorder %s329, %s331
      %p338 = scmp.eq.s32.totalorder %s38, 1
      %p339 = por %p337, %p338
      %p340 = scmp.ne.s32.totalorder %s331, %s332
      %p341 = scmp.eq.s32.totalorder %s38, 0
      %p342 = por %p340, %p341
      %p343 = scmp.ne.s32.totalorder %s331, %s332
      %p344 = scmp.eq.s32.totalorder %s39, 1
      %p345 = por %p343, %p344
      %p347 = scmp.ne.s32.totalorder %s332, %s346
      %p348 = scmp.eq.s32.totalorder %s39, 0
      %p349 = por %p347, %p348
      %s351 = sadd.s32 %s350, 1
      %p354 = scmp.eq.s32.totalorder %s33, 1
      %p355 = scmp.ne.s32.totalorder %s350, %s352
      %p356 = scmp.eq.s32.totalorder %s33, 0
      %p357 = por %p355, %p356
      %p358 = scmp.ne.s32.totalorder %s350, %s352
      %p359 = scmp.eq.s32.totalorder %s38, 1
      %p360 = por %p358, %p359
      %p361 = scmp.ne.s32.totalorder %s352, %s353
      %p362 = scmp.eq.s32.totalorder %s38, 0
      %p363 = por %p361, %p362
      %p364 = scmp.ne.s32.totalorder %s352, %s353
      %p365 = scmp.eq.s32.totalorder %s39, 1
      %p366 = por %p364, %p365
      %p368 = scmp.ne.s32.totalorder %s353, %s367
      %p369 = scmp.eq.s32.totalorder %s39, 0
      %p370 = por %p368, %p369
      %s371 = ssub.s32 %s40, %s52
      %s372 = ssub.s32 %s41, %s48
      %s373 = sor.u32 %s371, %s372
      %p374 = scmp.eq.s32.totalorder %s373, 0
      %s376 = sadd.s32 %s375, 1
      %s377 = scalar_select %p374, %s375, %s376
      %p380 = pneg %p374
      %p381 = scmp.eq.s32.totalorder %s33, 1
      %p382 = por %p380, %p381
      %p383 = scmp.ne.s32.totalorder %s375, %s378
      %p384 = scmp.eq.s32.totalorder %s33, 0
      %p385 = por %p383, %p384
      %p386 = scmp.ne.s32.totalorder %s375, %s378
      %p387 = scmp.eq.s32.totalorder %s38, 1
      %p388 = por %p386, %p387
      %p389 = scmp.ne.s32.totalorder %s378, %s379
      %p390 = scmp.eq.s32.totalorder %s38, 0
      %p391 = por %p389, %p390
      %p392 = scmp.ne.s32.totalorder %s378, %s379
      %p393 = scmp.eq.s32.totalorder %s39, 1
      %p394 = por %p392, %p393
      %p396 = scmp.ne.s32.totalorder %s379, %s395
      %p397 = scmp.eq.s32.totalorder %s39, 0
      %p398 = por %p396, %p397
      %p399 = scmp.le.s32.totalorder 1, %s33
      %p400 = scmp.lt.s32.totalorder %s33, 3
      %p401 = pnand %p399, %p400
      %p402 = pneg %p401
      // Predicated region
      $region9: #{tpu_custom_call.1} parent=5 // pred_check
        _
      $region10: #{tpu_custom_call.1} parent=5 // pred_check_branch
        %404 = sbr.rel (%p401) target = $region12
      $region11: #{tpu_custom_call.1} parent=5 // pred_region
        %s405 = ssub.s32 %s33, 1
        // Predicated region
        $region13: #{tpu_custom_call.1} parent=11 // pred_check
          %p406 = pneg %p174
        $region14: #{tpu_custom_call.1} parent=11 // pred_check_branch
          %408 = sbr.rel (%p406) target = $region16
        $region15: #{tpu_custom_call.1} parent=11 // pred_region
          %410 = vsyncadd [#allocation10], 0
          %s411 = sshll.u32 %s4, 4
          %s412 = int_to_ptr.hbm [resolvable:$true] %s411
          %s413 = sshll.u32 [#allocation11], 4
          %s414 = int_to_ptr.vmem [resolvable:$true] %s413
          %419 = dma.hbm_to_vmem [thread:$0]  %s412, 256, %s414, [#allocation10], 64, 64, 4
        $region16: #{tpu_custom_call.1} parent=11 // pred_fallthru
          _
        // Predicated region
        $region17: #{tpu_custom_call.1} parent=11 // pred_check
          %p420 = pneg %p195
        $region18: #{tpu_custom_call.1} parent=11 // pred_check_branch
          %422 = sbr.rel (%p420) target = $region20
        $region19: #{tpu_custom_call.1} parent=11 // pred_region
          _
        $region20: #{tpu_custom_call.1} parent=11 // pred_fallthru
          _
        // Predicated region
        $region21: #{tpu_custom_call.1} parent=11 // pred_check
          %p423 = pneg %p216
        $region22: #{tpu_custom_call.1} parent=11 // pred_check_branch
          %425 = sbr.rel (%p423) target = $region24
        $region23: #{tpu_custom_call.1} parent=11 // pred_region
          %427 = vsyncadd [#allocation13], 0
          %s428 = sshll.u32 %s6, 4
          %s429 = int_to_ptr.hbm [resolvable:$true] %s428
          %s430 = sshll.u32 [#allocation12], 4
          %s431 = int_to_ptr.vmem [resolvable:$true] %s430
          %436 = dma.hbm_to_vmem [thread:$0]  %s429, 256, %s431, [#allocation13], 64, 64, 4
        $region24: #{tpu_custom_call.1} parent=11 // pred_fallthru
          _
        // Predicated region
        $region25: #{tpu_custom_call.1} parent=11 // pred_check
          %p437 = pneg %p237
        $region26: #{tpu_custom_call.1} parent=11 // pred_check_branch
          %439 = sbr.rel (%p437) target = $region28
        $region27: #{tpu_custom_call.1} parent=11 // pred_region
          _
        $region28: #{tpu_custom_call.1} parent=11 // pred_fallthru
          _
        // Predicated region
        $region29: #{tpu_custom_call.1} parent=11 // pred_check
          %p440 = pneg %p258
        $region30: #{tpu_custom_call.1} parent=11 // pred_check_branch
          %442 = sbr.rel (%p440) target = $region32
        $region31: #{tpu_custom_call.1} parent=11 // pred_region
          %444 = vsyncadd [#allocation13], 0
          %s445 = sshll.u32 %s8, 4
          %s446 = int_to_ptr.hbm [resolvable:$true] %s445
          %s447 = sshll.u32 [#allocation14], 4
          %s448 = int_to_ptr.vmem [resolvable:$true] %s447
          %453 = dma.hbm_to_vmem [thread:$0]  %s446, 256, %s448, [#allocation13], 64, 64, 4
        $region32: #{tpu_custom_call.1} parent=11 // pred_fallthru
          _
        // Predicated region
        $region33: #{tpu_custom_call.1} parent=11 // pred_check
          %p454 = pneg %p279
        $region34: #{tpu_custom_call.1} parent=11 // pred_check_branch
          %456 = sbr.rel (%p454) target = $region36
        $region35: #{tpu_custom_call.1} parent=11 // pred_region
          _
        $region36: #{tpu_custom_call.1} parent=11 // pred_fallthru
          _
        // Predicated region
        $region37: #{tpu_custom_call.1} parent=11 // pred_check
          %p457 = pneg %p300
        $region38: #{tpu_custom_call.1} parent=11 // pred_check_branch
          %459 = sbr.rel (%p457) target = $region40
        $region39: #{tpu_custom_call.1} parent=11 // pred_region
          _
        $region40: #{tpu_custom_call.1} parent=11 // pred_fallthru
          _
        // Predicated region
        $region41: #{tpu_custom_call.1} parent=11 // pred_check
          %p460 = pneg %p321
        $region42: #{tpu_custom_call.1} parent=11 // pred_check_branch
          %462 = sbr.rel (%p460) target = $region44
        $region43: #{tpu_custom_call.1} parent=11 // pred_region
          _
        $region44: #{tpu_custom_call.1} parent=11 // pred_fallthru
          _
        // Predicated region
        $region45: #{tpu_custom_call.1} parent=11 // pred_check
          %p463 = pneg %p342
        $region46: #{tpu_custom_call.1} parent=11 // pred_check_branch
          %465 = sbr.rel (%p463) target = $region48
        $region47: #{tpu_custom_call.1} parent=11 // pred_region
          _
        $region48: #{tpu_custom_call.1} parent=11 // pred_fallthru
          _
        // Predicated region
        $region49: #{tpu_custom_call.1} parent=11 // pred_check
          %p466 = pneg %p363
        $region50: #{tpu_custom_call.1} parent=11 // pred_check_branch
          %468 = sbr.rel (%p466) target = $region52
        $region51: #{tpu_custom_call.1} parent=11 // pred_region
          _
        $region52: #{tpu_custom_call.1} parent=11 // pred_fallthru
          _
      $region12: #{tpu_custom_call.1} parent=5 // pred_fallthru
        _
      %p469 = scmp.lt.s32.totalorder %s33, 2
      // Predicated region
      $region53: #{tpu_custom_call.1} parent=5 // pred_check
        %p470 = pneg %p469
      $region54: #{tpu_custom_call.1} parent=5 // pred_check_branch
        %472 = sbr.rel (%p470) target = $region56
      $region55: #{tpu_custom_call.1} parent=5 // pred_region
        // Predicated region
        $region57: #{tpu_custom_call.1} parent=55 // pred_check
          %p473 = pneg %p67
        $region58: #{tpu_custom_call.1} parent=55 // pred_check_branch
          %475 = sbr.rel (%p473) target = $region60
        $region59: #{tpu_custom_call.1} parent=55 // pred_region
          %s476 = sand.u32 %s57, 1
          %s477 = scalar_lea.sflag [#allocation4], %s476
          %s478 = sand.u32 %s57, 1
          %s479 = smul.addr %s478, 8
          %s480 = scalar_lea.vmem [#allocation3], %s479
          %482 = vsyncadd %s477, 0
          %s483 = sadd.s32 %s41, %s40
          %s484 = smul.addr %s483, 8
          %s485 = scalar_lea.hbm %s0, %s484
          %s487 = sshll.u32 %s485, 4
          %s488 = int_to_ptr.hbm [resolvable:$true] %s487
          %s489 = sshll.u32 %s480, 4
          %s490 = int_to_ptr.vmem [resolvable:$true] %s489
          %492 = dma.hbm_to_vmem [thread:$0]  %s488, 128, %s490, %s477
        $region60: #{tpu_custom_call.1} parent=55 // pred_fallthru
          _
        // Predicated region
        $region61: #{tpu_custom_call.1} parent=55 // pred_check
          %p493 = pneg %p95
        $region62: #{tpu_custom_call.1} parent=55 // pred_check_branch
          %495 = sbr.rel (%p493) target = $region64
        $region63: #{tpu_custom_call.1} parent=55 // pred_region
          %s496 = sand.u32 %s33, 1
          %s497 = scalar_lea.sflag [#allocation7], %s496
          %s498 = sand.u32 %s85, 1
          %s499 = smul.addr %s498, 4
          %s500 = scalar_lea.vmem [#allocation6], %s499
          %502 = vsyncadd %s497, 0
          %s503 = sadd.s32 %s41, %s40
          %s504 = smul.addr %s503, 4
          %s505 = scalar_lea.hbm %s1, %s504
          %s507 = sshll.u32 %s505, 4
          %s508 = int_to_ptr.hbm [resolvable:$true] %s507
          %s509 = sshll.u32 %s500, 4
          %s510 = int_to_ptr.vmem [resolvable:$true] %s509
          %512 = dma.hbm_to_vmem [thread:$0]  %s508, 64, %s510, %s497
        $region64: #{tpu_custom_call.1} parent=55 // pred_fallthru
          _
        // Predicated region
        $region65: #{tpu_custom_call.1} parent=55 // pred_check
          %p513 = pneg %p121
        $region66: #{tpu_custom_call.1} parent=55 // pred_check_branch
          %515 = sbr.rel (%p513) target = $region68
        $region67: #{tpu_custom_call.1} parent=55 // pred_region
          %s516 = sand.u32 %s33, 1
          %s517 = scalar_lea.sflag [#allocation7], %s516
          %s518 = sand.u32 %s111, 1
          %s519 = smul.addr %s518, 4
          %s520 = scalar_lea.vmem [#allocation8], %s519
          %522 = vsyncadd %s517, 0
          %s523 = smul.addr %s40, 4
          %s524 = scalar_lea.hbm %s2, %s523
          %s526 = sshll.u32 %s524, 4
          %s527 = int_to_ptr.hbm [resolvable:$true] %s526
          %s528 = sshll.u32 %s520, 4
          %s529 = int_to_ptr.vmem [resolvable:$true] %s528
          %531 = dma.hbm_to_vmem [thread:$0]  %s527, 64, %s529, %s517
        $region68: #{tpu_custom_call.1} parent=55 // pred_fallthru
          _
        // Predicated region
        $region69: #{tpu_custom_call.1} parent=55 // pred_check
          %p532 = pneg %p147
        $region70: #{tpu_custom_call.1} parent=55 // pred_check_branch
          %534 = sbr.rel (%p532) target = $region72
        $region71: #{tpu_custom_call.1} parent=55 // pred_region
          %s535 = sand.u32 %s33, 1
          %s536 = scalar_lea.sflag [#allocation10], %s535
          %s537 = sand.u32 %s137, 1
          %s538 = smul.addr %s537, 4
          %s539 = scalar_lea.vmem [#allocation9], %s538
          %541 = vsyncadd %s536, 0
          %s542 = smul.addr %s40, 4
          %s543 = scalar_lea.hbm %s3, %s542
          %s545 = sshll.u32 %s543, 4
          %s546 = int_to_ptr.hbm [resolvable:$true] %s545
          %s547 = sshll.u32 %s539, 4
          %s548 = int_to_ptr.vmem [resolvable:$true] %s547
          %550 = dma.hbm_to_vmem [thread:$0]  %s546, 64, %s548, %s536
        $region72: #{tpu_custom_call.1} parent=55 // pred_fallthru
          _
      $region56: #{tpu_custom_call.1} parent=5 // pred_fallthru
        _
      %p551 = scmp.le.s32.totalorder 1, %s33
      %p552 = scmp.lt.s32.totalorder %s33, 3
      %p553 = pnand %p551, %p552
      %p554 = pneg %p553
      // Predicated region
      $region73: #{tpu_custom_call.1} parent=5 // pred_check
        _
      $region74: #{tpu_custom_call.1} parent=5 // pred_check_branch
        %556 = sbr.rel (%p553) target = $region76
      $region75: #{tpu_custom_call.1} parent=5 // pred_region
        %s557 = ssub.s32 %s33, 1
        %s558 = sand.u32 %s60, 1
        %s559 = scalar_lea.sflag [#allocation4], %s558
        %s560 = sand.u32 %s60, 1
        %s561 = smul.addr %s560, 8
        %s562 = scalar_lea.vmem [#allocation3], %s561
        // Predicated region
        $region77: #{tpu_custom_call.1} parent=75 // pred_check
          %p563 = pneg %p73
        $region78: #{tpu_custom_call.1} parent=75 // pred_check_branch
          %565 = sbr.rel (%p563) target = $region80
        $region79: #{tpu_custom_call.1} parent=75 // pred_region
          %567 = dma.done %s559, 128
        $region80: #{tpu_custom_call.1} parent=75 // pred_fallthru
          _
        %s568 = sand.u32 %s38, 1
        %s569 = scalar_lea.sflag [#allocation7], %s568
        %s570 = sand.u32 %s88, 1
        %s571 = smul.addr %s570, 4
        %s572 = scalar_lea.vmem [#allocation6], %s571
        // Predicated region
        $region81: #{tpu_custom_call.1} parent=75 // pred_check
          %p573 = pneg %p101
        $region82: #{tpu_custom_call.1} parent=75 // pred_check_branch
          %575 = sbr.rel (%p573) target = $region84
        $region83: #{tpu_custom_call.1} parent=75 // pred_region
          %577 = dma.done %s569, 64
        $region84: #{tpu_custom_call.1} parent=75 // pred_fallthru
          _
        %s578 = sand.u32 %s38, 1
        %s579 = scalar_lea.sflag [#allocation7], %s578
        %s580 = sand.u32 %s114, 1
        %s581 = smul.addr %s580, 4
        %s582 = scalar_lea.vmem [#allocation8], %s581
        // Predicated region
        $region85: #{tpu_custom_call.1} parent=75 // pred_check
          %p583 = pneg %p127
        $region86: #{tpu_custom_call.1} parent=75 // pred_check_branch
          %585 = sbr.rel (%p583) target = $region88
        $region87: #{tpu_custom_call.1} parent=75 // pred_region
          %587 = dma.done %s579, 64
        $region88: #{tpu_custom_call.1} parent=75 // pred_fallthru
          _
        %s588 = sand.u32 %s38, 1
        %s589 = scalar_lea.sflag [#allocation10], %s588
        %s590 = sand.u32 %s140, 1
        %s591 = smul.addr %s590, 4
        %s592 = scalar_lea.vmem [#allocation9], %s591
        // Predicated region
        $region89: #{tpu_custom_call.1} parent=75 // pred_check
          %p593 = pneg %p153
        $region90: #{tpu_custom_call.1} parent=75 // pred_check_branch
          %595 = sbr.rel (%p593) target = $region92
        $region91: #{tpu_custom_call.1} parent=75 // pred_region
          %597 = dma.done %s589, 64
        $region92: #{tpu_custom_call.1} parent=75 // pred_fallthru
          _
        // Predicated region
        $region93: #{tpu_custom_call.1} parent=75 // pred_check
          %p598 = pneg %p174
        $region94: #{tpu_custom_call.1} parent=75 // pred_check_branch
          %600 = sbr.rel (%p598) target = $region96
        $region95: #{tpu_custom_call.1} parent=75 // pred_region
          %602 = dma.done [#allocation10], 256
        $region96: #{tpu_custom_call.1} parent=75 // pred_fallthru
          _
        // Predicated region
        $region97: #{tpu_custom_call.1} parent=75 // pred_check
          %p603 = pneg %p216
        $region98: #{tpu_custom_call.1} parent=75 // pred_check_branch
          %605 = sbr.rel (%p603) target = $region100
        $region99: #{tpu_custom_call.1} parent=75 // pred_region
          %607 = dma.done [#allocation13], 256
        $region100: #{tpu_custom_call.1} parent=75 // pred_fallthru
          _
        // Predicated region
        $region101: #{tpu_custom_call.1} parent=75 // pred_check
          %p608 = pneg %p258
        $region102: #{tpu_custom_call.1} parent=75 // pred_check_branch
          %610 = sbr.rel (%p608) target = $region104
        $region103: #{tpu_custom_call.1} parent=75 // pred_region
          %612 = dma.done [#allocation13], 256
        $region104: #{tpu_custom_call.1} parent=75 // pred_fallthru
          _
        %s613 = sand.u32 %s60, 1
        %s614 = scalar_lea.sflag [#allocation4], %s613
        %s615 = sand.u32 %s60, 1
        %s616 = smul.addr %s615, 8
        %s617 = scalar_lea.vmem [#allocation3], %s616
        %p618 = pneg %p73
        %p619 = pneg %p70
        %s620 = sand.u32 %s38, 1
        %s621 = scalar_lea.sflag [#allocation7], %s620
        %s622 = sand.u32 %s88, 1
        %s623 = smul.addr %s622, 4
        %s624 = scalar_lea.vmem [#allocation6], %s623
        %p625 = pneg %p101
        %p626 = pneg %p98
        %s627 = sand.u32 %s38, 1
        %s628 = scalar_lea.sflag [#allocation7], %s627
        %s629 = sand.u32 %s114, 1
        %s630 = smul.addr %s629, 4
        %s631 = scalar_lea.vmem [#allocation8], %s630
        %p632 = pneg %p127
        %p633 = pneg %p124
        %s634 = sand.u32 %s38, 1
        %s635 = scalar_lea.sflag [#allocation10], %s634
        %s636 = sand.u32 %s140, 1
        %s637 = smul.addr %s636, 4
        %s638 = scalar_lea.vmem [#allocation9], %s637
        %p639 = pneg %p153
        %p640 = pneg %p150
        %p641 = pneg %p174
        %p642 = pneg %p171
        %p643 = pneg %p195
        %p644 = pneg %p192
        %p645 = pneg %p216
        %p646 = pneg %p213
        %p647 = pneg %p237
        %p648 = pneg %p234
        %p649 = pneg %p258
        %p650 = pneg %p255
        %p651 = pneg %p279
        %p652 = pneg %p276
        %p653 = pneg %p300
        %p654 = pneg %p297
        %p655 = pneg %p321
        %p656 = pneg %p318
        %p657 = pneg %p342
        %p658 = pneg %p339
        %p659 = pneg %p363
        %p660 = pneg %p360
        %p661 = pneg %p391
        %p662 = pneg %p388
        %s663 = sand.u32 %s378, 1
        %s664 = scalar_lea.sflag [#allocation5], %s663
        %s665 = sand.u32 %s378, 1
        %s666 = smul.addr %s665, 8
        %s667 = scalar_lea.vmem [#allocation15], %s666
        %v669 = vld [vmem:[%s562] sm:$0xff]
        %v670 = vld [vmem:[%s572] sm:$0xf]
        %v671 = vld [vmem:[%s582] sm:$0xf]
        %vm672 = vcmask 64512
        %v674 = vsel %vm672, %v670, 0
        %v677 = vsel %vm672, %v671, 0
        %679 = vmatpush.bf16.xpose.msra.mxu0 0
        %680 = vmatpush.bf16.xpose.msra.mxu0 0
        %681 = vmatpush.bf16.xpose.msra.mxu0 0
        %682 = vmatpush.bf16.xpose.msra.mxu0 0
        %683 = vmatpush.bf16.xpose.msra.mxu0 0
        %684 = vmatpush.bf16.xpose.msra.mxu0 0
        %685 = vmatpush.bf16.xpose.msra.mxu0 0
        %686 = vmatpush.bf16.xpose.msra.mxu0 %v677
        %687 = vmatmul.bf16.gmra.mxu0 %v674
        %v688 = vpop.f32.mrf.mxu0
        %v689 = vadd.f32 0.0, %v688
        %v690 = vpop.f32.mrf.mxu0
        %691 = vdwg.mxu0
        %v692 = vsel %vm672, %v689, -inf
        %693 = vmax.xlane.f32.xlu0 %v692
        %v694 = vpop.xlane.xlu0 %693
        %v695 = vsub.f32 %v689, %v694
        %v696 = vmul.f32 %v695, 1.442695
        %v697 = vpow.pop %v696
        %v698 = vsel %vm672, %v697, 0.0
        %699 = vadd.xlane.f32.xlu0 %v698
        %v700 = vpop.xlane.xlu0 %699
        %v701 = vrcp.pop %v700
        %v702 = vmul.f32 %v697, %v701
        %v703 = vpack.c.bf16 %v702, %v702
        %v704 = vld [vmem:[%s592] sm:$0xf]
        %v706 = vsel %vm672, %v703, 0
        %vm708 = vcmask 1043456
        %v710 = vsel %vm708, %v704, 0
        %712 = vmatpush.bf16.msra.mxu0 0
        %713 = vmatpush.bf16.msra.mxu0 0
        %714 = vmatpush.bf16.msra.mxu0 0
        %715 = vmatpush.bf16.msra.mxu0 0
        %716 = vmatpush.bf16.msra.mxu0 0
        %717 = vmatpush.bf16.msra.mxu0 0
        %718 = vmatpush.bf16.msra.mxu0 0
        %719 = vmatpush.bf16.msra.mxu0 %v710
        %720 = vmatmul.bf16.gmra.mxu0 %v706
        %v721 = vpop.f32.mrf.mxu0
        %v722 = vadd.f32 0.0, %v721
        %v723 = vpop.f32.mrf.mxu0
        %724 = vdwg.mxu0
        %v725 = vpack.c.bf16 %v722, %v722
        %vm726 = vcmask 60416
        %727 = vst.msk [vmem:[#allocation2] sm:$0xf] %vm726, %v725
        %v728 = vld [vmem:[%s572] sm:$0xf]
        %v729 = vld [vmem:[%s582] sm:$0xf]
        %v731 = vunpack.c.l.b16 %v728
        %v732 = vpack.c.b16 %v731, %v731
        %733 = vrot.lane.b32.xlu0 %v732, 120
        %v734 = vpop.permute.xlu0 %733
        %v736 = vunpack.c.l.b16 %v729
        %v737 = vpack.c.b16 %v736, %v736
        %738 = vrot.lane.b32.xlu0 %v737, 120
        %v739 = vpop.permute.xlu0 %738
        %v741 = vsel %vm672, %v734, 0
        %v744 = vsel %vm672, %v739, 0
        %746 = vmatpush.bf16.xpose.msra.mxu0 0
        %747 = vmatpush.bf16.xpose.msra.mxu0 0
        %748 = vmatpush.bf16.xpose.msra.mxu0 0
        %749 = vmatpush.bf16.xpose.msra.mxu0 0
        %750 = vmatpush.bf16.xpose.msra.mxu0 0
        %751 = vmatpush.bf16.xpose.msra.mxu0 0
        %752 = vmatpush.bf16.xpose.msra.mxu0 0
        %753 = vmatpush.bf16.xpose.msra.mxu0 %v744
        %754 = vmatmul.bf16.gmra.mxu0 %v741
        %v755 = vpop.f32.mrf.mxu0
        %v756 = vadd.f32 0.0, %v755
        %v757 = vpop.f32.mrf.mxu0
        %758 = vdwg.mxu0
        %v759 = vsel %vm672, %v756, -inf
        %760 = vmax.xlane.f32.xlu0 %v759
        %v761 = vpop.xlane.xlu0 %760
        %v762 = vsub.f32 %v756, %v761
        %v763 = vmul.f32 %v762, 1.442695
        %v764 = vpow.pop %v763
        %v765 = vsel %vm672, %v764, 0.0
        %766 = vadd.xlane.f32.xlu0 %v765
        %v767 = vpop.xlane.xlu0 %766
        %v768 = vrcp.pop %v767
        %v769 = vmul.f32 %v764, %v768
        %v770 = vpack.c.bf16 %v769, %v769
        %v771 = vld [vmem:[%s592] sm:$0xf]
        %v773 = vunpack.c.l.b16 %v771
        %v774 = vpack.c.b16 %v773, %v773
        %775 = vrot.lane.b32.xlu0 %v774, 120
        %v776 = vpop.permute.xlu0 %775
        %v778 = vsel %vm672, %v770, 0
        %v781 = vsel %vm708, %v776, 0
        %783 = vmatpush.bf16.msra.mxu0 0
        %784 = vmatpush.bf16.msra.mxu0 0
        %785 = vmatpush.bf16.msra.mxu0 0
        %786 = vmatpush.bf16.msra.mxu0 0
        %787 = vmatpush.bf16.msra.mxu0 0
        %788 = vmatpush.bf16.msra.mxu0 0
        %789 = vmatpush.bf16.msra.mxu0 0
        %790 = vmatpush.bf16.msra.mxu0 %v781
        %791 = vmatmul.bf16.gmra.mxu0 %v778
        %v792 = vpop.f32.mrf.mxu0
        %v793 = vadd.f32 0.0, %v792
        %v794 = vpop.f32.mrf.mxu0
        %795 = vdwg.mxu0
        %v796 = vpack.c.bf16 %v793, %v793
        %798 = vrot.lane.b32.xlu0 %v796, 8
        %v799 = vpop.permute.xlu0 %798
        %vm801 = vcmask 126016
        %802 = vst.msk [vmem:[#allocation2] sm:$0xf] %vm801, %v799
        %v803 = vld [vmem:[%s572] sm:$0xf]
        %v804 = vld [vmem:[%s582] sm:$0xf]
        %v806 = vunpack.c.l.b16 %v803
        %v807 = vpack.c.b16 %v806, %v806
        %808 = vrot.lane.b32.xlu0 %v807, 112
        %v809 = vpop.permute.xlu0 %808
        %v811 = vunpack.c.l.b16 %v804
        %v812 = vpack.c.b16 %v811, %v811
        %813 = vrot.lane.b32.xlu0 %v812, 112
        %v814 = vpop.permute.xlu0 %813
        %v816 = vsel %vm672, %v809, 0
        %v819 = vsel %vm672, %v814, 0
        %821 = vmatpush.bf16.xpose.msra.mxu0 0
        %822 = vmatpush.bf16.xpose.msra.mxu0 0
        %823 = vmatpush.bf16.xpose.msra.mxu0 0
        %824 = vmatpush.bf16.xpose.msra.mxu0 0
        %825 = vmatpush.bf16.xpose.msra.mxu0 0
        %826 = vmatpush.bf16.xpose.msra.mxu0 0
        %827 = vmatpush.bf16.xpose.msra.mxu0 0
        %828 = vmatpush.bf16.xpose.msra.mxu0 %v819
        %829 = vmatmul.bf16.gmra.mxu0 %v816
        %v830 = vpop.f32.mrf.mxu0
        %v831 = vadd.f32 0.0, %v830
        %v832 = vpop.f32.mrf.mxu0
        %833 = vdwg.mxu0
        %v834 = vsel %vm672, %v831, -inf
        %835 = vmax.xlane.f32.xlu0 %v834
        %v836 = vpop.xlane.xlu0 %835
        %v837 = vsub.f32 %v831, %v836
        %v838 = vmul.f32 %v837, 1.442695
        %v839 = vpow.pop %v838
        %v840 = vsel %vm672, %v839, 0.0
        %841 = vadd.xlane.f32.xlu0 %v840
        %v842 = vpop.xlane.xlu0 %841
        %v843 = vrcp.pop %v842
        %v844 = vmul.f32 %v839, %v843
        %v845 = vpack.c.bf16 %v844, %v844
        %v846 = vld [vmem:[%s592] sm:$0xf]
        %v848 = vunpack.c.l.b16 %v846
        %v849 = vpack.c.b16 %v848, %v848
        %850 = vrot.lane.b32.xlu0 %v849, 112
        %v851 = vpop.permute.xlu0 %850
        %v853 = vsel %vm672, %v845, 0
        %v856 = vsel %vm708, %v851, 0
        %858 = vmatpush.bf16.msra.mxu0 0
        %859 = vmatpush.bf16.msra.mxu0 0
        %860 = vmatpush.bf16.msra.mxu0 0
        %861 = vmatpush.bf16.msra.mxu0 0
        %862 = vmatpush.bf16.msra.mxu0 0
        %863 = vmatpush.bf16.msra.mxu0 0
        %864 = vmatpush.bf16.msra.mxu0 0
        %865 = vmatpush.bf16.msra.mxu0 %v856
        %866 = vmatmul.bf16.gmra.mxu0 %v853
        %v867 = vpop.f32.mrf.mxu0
        %v868 = vadd.f32 0.0, %v867
        %v869 = vpop.f32.mrf.mxu0
        %870 = vdwg.mxu0
        %v871 = vpack.c.bf16 %v868, %v868
        %873 = vrot.lane.b32.xlu0 %v871, 16
        %v874 = vpop.permute.xlu0 %873
        %vm876 = vcmask 191616
        %877 = vst.msk [vmem:[#allocation2] sm:$0xf] %vm876, %v874
        %v878 = vld [vmem:[%s572] sm:$0xf]
        %v879 = vld [vmem:[%s582] sm:$0xf]
        %v881 = vunpack.c.l.b16 %v878
        %v882 = vpack.c.b16 %v881, %v881
        %883 = vrot.lane.b32.xlu0 %v882, 104
        %v884 = vpop.permute.xlu0 %883
        %v886 = vunpack.c.l.b16 %v879
        %v887 = vpack.c.b16 %v886, %v886
        %888 = vrot.lane.b32.xlu0 %v887, 104
        %v889 = vpop.permute.xlu0 %888
        %v891 = vsel %vm672, %v884, 0
        %v894 = vsel %vm672, %v889, 0
        %896 = vmatpush.bf16.xpose.msra.mxu0 0
        %897 = vmatpush.bf16.xpose.msra.mxu0 0
        %898 = vmatpush.bf16.xpose.msra.mxu0 0
        %899 = vmatpush.bf16.xpose.msra.mxu0 0
        %900 = vmatpush.bf16.xpose.msra.mxu0 0
        %901 = vmatpush.bf16.xpose.msra.mxu0 0
        %902 = vmatpush.bf16.xpose.msra.mxu0 0
        %903 = vmatpush.bf16.xpose.msra.mxu0 %v894
        %904 = vmatmul.bf16.gmra.mxu0 %v891
        %v905 = vpop.f32.mrf.mxu0
        %v906 = vadd.f32 0.0, %v905
        %v907 = vpop.f32.mrf.mxu0
        %908 = vdwg.mxu0
        %v909 = vsel %vm672, %v906, -inf
        %910 = vmax.xlane.f32.xlu0 %v909
        %v911 = vpop.xlane.xlu0 %910
        %v912 = vsub.f32 %v906, %v911
        %v913 = vmul.f32 %v912, 1.442695
        %v914 = vpow.pop %v913
        %v915 = vsel %vm672, %v914, 0.0
        %916 = vadd.xlane.f32.xlu0 %v915
        %v917 = vpop.xlane.xlu0 %916
        %v918 = vrcp.pop %v917
        %v919 = vmul.f32 %v914, %v918
        %v920 = vpack.c.bf16 %v919, %v919
        %v921 = vld [vmem:[%s592] sm:$0xf]
        %v923 = vunpack.c.l.b16 %v921
        %v924 = vpack.c.b16 %v923, %v923
        %925 = vrot.lane.b32.xlu0 %v924, 104
        %v926 = vpop.permute.xlu0 %925
        %v928 = vsel %vm672, %v920, 0
        %v931 = vsel %vm708, %v926, 0
        %933 = vmatpush.bf16.msra.mxu0 0
        %934 = vmatpush.bf16.msra.mxu0 0
        %935 = vmatpush.bf16.msra.mxu0 0
        %936 = vmatpush.bf16.msra.mxu0 0
        %937 = vmatpush.bf16.msra.mxu0 0
        %938 = vmatpush.bf16.msra.mxu0 0
        %939 = vmatpush.bf16.msra.mxu0 0
        %940 = vmatpush.bf16.msra.mxu0 %v931
        %941 = vmatmul.bf16.gmra.mxu0 %v928
        %v942 = vpop.f32.mrf.mxu0
        %v943 = vadd.f32 0.0, %v942
        %v944 = vpop.f32.mrf.mxu0
        %945 = vdwg.mxu0
        %v946 = vpack.c.bf16 %v943, %v943
        %948 = vrot.lane.b32.xlu0 %v946, 24
        %v949 = vpop.permute.xlu0 %948
        %vm951 = vcmask 257216
        %952 = vst.msk [vmem:[#allocation2] sm:$0xf] %vm951, %v949
        %v953 = vld [vmem:[#allocation2] sm:$0xf]
        %v954 = vld [vmem:[#allocation11] sm:$0xf]
        %v955 = vld [vmem:[#allocation11 + $0x4] sm:$0xf]
        %v956 = vld [vmem:[#allocation11 + $0x8] sm:$0xf]
        %v957 = vld [vmem:[#allocation11 + $0xc] sm:$0xf]
        %v958 = vld [vmem:[%s5] sm:$0x1]
        %v960 = vperm.slane %v958, 0
        %v966 = vunpack.c.l.b16 %v954
        %v967 = vunpack.c.l.b16 %v955
        %v968 = vunpack.c.l.b16 %v956
        %v969 = vunpack.c.l.b16 %v957
        %v970 = vpack.c.b16 %v967, %v966
        %v971 = vpack.c.b16 %v969, %v968
        %vm974 = vcmask 261120
        %v976 = vsel %vm974, %v953, 0
        %978 = vmatpush.bf16.msra.mxu0 0
        %979 = vmatpush.bf16.msra.mxu0 0
        %980 = vmatpush.bf16.msra.mxu0 0
        %981 = vmatpush.bf16.msra.mxu0 0
        %982 = vmatpush.bf16.msra.mxu0 0
        %983 = vmatpush.bf16.msra.mxu0 0
        %984 = vmatpush.bf16.msra.mxu0 %v971
        %985 = vmatpush.bf16.msra.mxu0 %v970
        %986 = vmatmul.bf16.gmra.mxu0 %v976
        %v987 = vpop.f32.mrf.mxu0
        %v988 = vadd.f32 %v960, %v987
        %v989 = vpop.f32.mrf.mxu0
        %990 = vdwg.mxu0
        %v991 = vadd.f32 %v669, %v988
        %v992 = vld [vmem:[%s10] sm:$0x1]
        %v993 = vld [vmem:[%s11] sm:$0x1]
        %v994 = vsel %vm974, %v991, 0.0
        %995 = vadd.xlane.f32.xlu0 %v994
        %v996 = vpop.xlane.xlu0 %995
        %v997 = vrcp.pop 32.0
        %v998 = vmul.f32 32.0, %v997
        %v999 = vsub.f32 1.0, %v998
        %v1000 = vmul.f32 %v997, %v999
        %v1001 = vadd.f32 %v997, %v1000
        %vm1002 = vweird.f32 %v997
        %v1003 = vsel %vm1002, %v997, %v1001
        %v1004 = vmul.f32 %v996, %v1003
        %v1005 = vsub.f32 %v991, %v1004
        %v1006 = vmul.f32 %v1005, %v1005
        %v1007 = vsel %vm974, %v1006, 0.0
        %1008 = vadd.xlane.f32.xlu0 %v1007
        %v1009 = vpop.xlane.xlu0 %1008
        %v1010 = vmul.f32 %v1009, %v1003
        %v1011 = vadd.f32 %v1010, 1e-05
        %v1012 = vrsqrt.pop %v1011
        %v1013 = vmul.f32 %v1012, %v1011
        %v1014 = vmul.f32 %v1013, %v1012
        %v1015 = vmul.f32 0.5, %v1014
        %v1016 = vsub.f32 1.5, %v1015
        %v1017 = vmul.f32 %v1012, %v1016
        %vm1018 = vweird.f32 %v1011
        %vm1019 = vweird.f32 %v1012
        %vm1020 = vmor %vm1018, %vm1019
        %v1021 = vsel %vm1020, %v1012, %v1017
        %v1022 = vmul.f32 %v1005, %v1021
        %v1024 = vperm.slane %v992, 0
        %v1026 = vmul.f32 %v1022, %v1024
        %v1028 = vperm.slane %v993, 0
        %v1030 = vadd.f32 %v1026, %v1028
        %v1031 = vpack.c.bf16 %v1030, %v1030
        %v1032 = vld [vmem:[#allocation12] sm:$0xf]
        %v1033 = vld [vmem:[#allocation12 + $0x4] sm:$0xf]
        %v1034 = vld [vmem:[#allocation12 + $0x8] sm:$0xf]
        %v1035 = vld [vmem:[#allocation12 + $0xc] sm:$0xf]
        %v1036 = vld [vmem:[%s7] sm:$0x1]
        %v1038 = vperm.slane %v1036, 0
        %v1044 = vunpack.c.l.b16 %v1032
        %v1045 = vunpack.c.l.b16 %v1033
        %v1046 = vunpack.c.l.b16 %v1034
        %v1047 = vunpack.c.l.b16 %v1035
        %v1048 = vpack.c.b16 %v1045, %v1044
        %v1049 = vpack.c.b16 %v1047, %v1046
        %v1053 = vsel %vm974, %v1031, 0
        %1055 = vmatpush.bf16.msra.mxu0 0
        %1056 = vmatpush.bf16.msra.mxu0 0
        %1057 = vmatpush.bf16.msra.mxu0 0
        %1058 = vmatpush.bf16.msra.mxu0 0
        %1059 = vmatpush.bf16.msra.mxu0 0
        %1060 = vmatpush.bf16.msra.mxu0 0
        %1061 = vmatpush.bf16.msra.mxu0 %v1049
        %1062 = vmatpush.bf16.msra.mxu0 %v1048
        %1063 = vmatmul.bf16.gmra.mxu0 %v1053
        %v1064 = vpop.f32.mrf.mxu0
        %v1065 = vadd.f32 %v1038, %v1064
        %v1066 = vpop.f32.mrf.mxu0
        %1067 = vdwg.mxu0
        %v1068 = vmax.f32 %v1065, 0.0
        %v1069 = vpack.c.bf16 %v1068, %v1068
        %v1070 = vld [vmem:[#allocation14] sm:$0xf]
        %v1071 = vld [vmem:[#allocation14 + $0x4] sm:$0xf]
        %v1072 = vld [vmem:[#allocation14 + $0x8] sm:$0xf]
        %v1073 = vld [vmem:[#allocation14 + $0xc] sm:$0xf]
        %v1074 = vld [vmem:[%s9] sm:$0x1]
        %v1076 = vperm.slane %v1074, 0
        %v1082 = vunpack.c.l.b16 %v1070
        %v1083 = vunpack.c.l.b16 %v1071
        %v1084 = vunpack.c.l.b16 %v1072
        %v1085 = vunpack.c.l.b16 %v1073
        %v1086 = vpack.c.b16 %v1083, %v1082
        %v1087 = vpack.c.b16 %v1085, %v1084
        %v1091 = vsel %vm974, %v1069, 0
        %1093 = vmatpush.bf16.msra.mxu0 0
        %1094 = vmatpush.bf16.msra.mxu0 0
        %1095 = vmatpush.bf16.msra.mxu0 0
        %1096 = vmatpush.bf16.msra.mxu0 0
        %1097 = vmatpush.bf16.msra.mxu0 0
        %1098 = vmatpush.bf16.msra.mxu0 0
        %1099 = vmatpush.bf16.msra.mxu0 %v1087
        %1100 = vmatpush.bf16.msra.mxu0 %v1086
        %1101 = vmatmul.bf16.gmra.mxu0 %v1091
        %v1102 = vpop.f32.mrf.mxu0
        %v1103 = vadd.f32 %v1076, %v1102
        %v1104 = vpop.f32.mrf.mxu0
        %1105 = vdwg.mxu0
        %v1106 = vadd.f32 %v1030, %v1103
        %v1107 = vld [vmem:[%s12] sm:$0x1]
        %v1108 = vld [vmem:[%s13] sm:$0x1]
        %v1109 = vsel %vm974, %v1106, 0.0
        %1110 = vadd.xlane.f32.xlu0 %v1109
        %v1111 = vpop.xlane.xlu0 %1110
        %v1112 = vmul.f32 %v1111, %v1003
        %v1113 = vsub.f32 %v1106, %v1112
        %v1114 = vmul.f32 %v1113, %v1113
        %v1115 = vsel %vm974, %v1114, 0.0
        %1116 = vadd.xlane.f32.xlu0 %v1115
        %v1117 = vpop.xlane.xlu0 %1116
        %v1118 = vmul.f32 %v1117, %v1003
        %v1119 = vadd.f32 %v1118, 1e-05
        %v1120 = vrsqrt.pop %v1119
        %v1121 = vmul.f32 %v1120, %v1119
        %v1122 = vmul.f32 %v1121, %v1120
        %v1123 = vmul.f32 0.5, %v1122
        %v1124 = vsub.f32 1.5, %v1123
        %v1125 = vmul.f32 %v1120, %v1124
        %vm1126 = vweird.f32 %v1119
        %vm1127 = vweird.f32 %v1120
        %vm1128 = vmor %vm1126, %vm1127
        %v1129 = vsel %vm1128, %v1120, %v1125
        %v1130 = vmul.f32 %v1113, %v1129
        %v1132 = vperm.slane %v1107, 0
        %v1134 = vmul.f32 %v1130, %v1132
        %v1136 = vperm.slane %v1108, 0
        %v1138 = vadd.f32 %v1134, %v1136
        %1139 = vst.msk [vmem:[%s667] sm:$0xff] %vm974, %v1138
        %s1140 = sand.u32 %s378, 1
        %s1141 = scalar_lea.sflag [#allocation5], %s1140
        %s1142 = sand.u32 %s378, 1
        %s1143 = smul.addr %s1142, 8
        %s1144 = scalar_lea.vmem [#allocation15], %s1143
        // Predicated region
        $region105: #{tpu_custom_call.1} parent=75 // pred_check
          %p1145 = pneg %p388
        $region106: #{tpu_custom_call.1} parent=75 // pred_check_branch
          %1147 = sbr.rel (%p1145) target = $region108
        $region107: #{tpu_custom_call.1} parent=75 // pred_region
          %1149 = vsyncadd %s1141, 0
          %s1150 = sadd.s32 %s43, %s42
          %s1151 = smul.addr %s1150, 8
          %s1152 = scalar_lea.hbm %s14, %s1151
          %s1154 = sshll.u32 %s1144, 4
          %s1155 = int_to_ptr.vmem [resolvable:$true] %s1154
          %s1156 = sshll.u32 %s1152, 4
          %s1157 = int_to_ptr.hbm [resolvable:$true] %s1156
          %1159 = dma.vmem_to_hbm [thread:$0]  %s1155, 128, %s1157, %s1141
        $region108: #{tpu_custom_call.1} parent=75 // pred_fallthru
          _
      $region76: #{tpu_custom_call.1} parent=5 // pred_fallthru
        _
      %p1160 = scmp.le.s32.totalorder 2, %s33
      // Predicated region
      $region109: #{tpu_custom_call.1} parent=5 // pred_check
        %p1161 = pneg %p1160
      $region110: #{tpu_custom_call.1} parent=5 // pred_check_branch
        %1163 = sbr.rel (%p1161) target = $region112
      $region111: #{tpu_custom_call.1} parent=5 // pred_region
        %s1164 = ssub.s32 %s33, 2
        // Predicated region
        $region113: #{tpu_custom_call.1} parent=111 // pred_check
          %p1165 = pneg %p394
        $region114: #{tpu_custom_call.1} parent=111 // pred_check_branch
          %1167 = sbr.rel (%p1165) target = $region116
        $region115: #{tpu_custom_call.1} parent=111 // pred_region
          %s1168 = sand.u32 %s379, 1
          %s1169 = scalar_lea.sflag [#allocation5], %s1168
          %s1170 = sand.u32 %s379, 1
          %s1171 = smul.addr %s1170, 8
          %s1172 = scalar_lea.vmem [#allocation15], %s1171
          %1174 = dma.done %s1169, 128
        $region116: #{tpu_custom_call.1} parent=111 // pred_fallthru
          _
      $region112: #{tpu_custom_call.1} parent=5 // pred_fallthru
        _
    $region6: #{tpu_custom_call.1} parent=1 // loop_footer
      %s37 = sadd.s32 1, %s33
    $region7: #{tpu_custom_call.1} parent=1 // loop_footer_branch
      %32 = sbr.rel target = $region3
    $region8: #{tpu_custom_call.1} parent=1 // loop_exit
      _
    %1175 = vsyncpa [#allocation4], 1
    %s1176 = scalar_lea.sflag [#allocation4], 1
    %1177 = vsyncpa %s1176, 1
    %1178 = vsyncpa [#allocation7], 1
    %s1179 = scalar_lea.sflag [#allocation7], 1
    %1180 = vsyncpa %s1179, 1
    %1181 = vsyncpa [#allocation10], 1
    %s1182 = scalar_lea.sflag [#allocation10], 1
    %1183 = vsyncpa %s1182, 1
    %1184 = vsyncpa [#allocation13], 1
    %1185 = vsyncpa [#allocation5], 1
    %s1186 = scalar_lea.sflag [#allocation5], 1
    %1187 = vsyncpa %s1186, 1

// kernel: tpu_custom_call.1
$region0: #{tpu_custom_call.1}
  #allocation0 [shape = 'u32[]', space=smem, size = 0x4, offset = 0x4, fixed_abs, tag = 'smem constant byte address 0x4 - core index']
  #allocation1 [shape = 'u32[72,128]{1,0:T(1,128)}', space=vmem, size = 0x9000, scoped, tag = 'internal scratch']
  #allocation2 [shape = 'bf16[8,32]{1,0:T(8,128)(2,1)}', space=vmem, size = 0x800, scoped, tag = 'scratch operand']
  %s0 = inlined_call_operand.hbm [shape: f32[2,8,32], index: 0, kind: input, shape index: {}]
  %s1 = inlined_call_operand.hbm [shape: bf16[2,8,32], index: 1, kind: input, shape index: {}]
  %s2 = inlined_call_operand.hbm [shape: bf16[2,8,32], index: 2, kind: input, shape index: {}]
  %s3 = inlined_call_operand.hbm [shape: bf16[2,8,32], index: 3, kind: input, shape index: {}]
  %s4 = inlined_call_operand.hbm [shape: bf16[32,32], index: 4, kind: input, shape index: {}]
  %s5 = inlined_call_operand.vmem [shape: f32[1,32], index: 5, kind: input, shape index: {}]
  %s6 = inlined_call_operand.hbm [shape: bf16[32,32], index: 6, kind: input, shape index: {}]
  %s7 = inlined_call_operand.vmem [shape: f32[1,32], index: 7, kind: input, shape index: {}]
  %s8 = inlined_call_operand.hbm [shape: bf16[32,32], index: 8, kind: input, shape index: {}]
  %s9 = inlined_call_operand.vmem [shape: f32[1,32], index: 9, kind: input, shape index: {}]
  %s10 = inlined_call_operand.vmem [shape: f32[1,32], index: 10, kind: input, shape index: {}]
  %s11 = inlined_call_operand.vmem [shape: f32[1,32], index: 11, kind: input, shape index: {}]
  %s12 = inlined_call_operand.vmem [shape: f32[1,32], index: 12, kind: input, shape index: {}]
  %s13 = inlined_call_operand.vmem [shape: f32[1,32], index: 13, kind: input, shape index: {}]
  %s14 = inlined_call_operand.hbm [shape: f32[2,8,32], index: 14, kind: output, shape index: {}]
  %s15 = sld [smem:[#allocation0]]
  $region117: #{tpu_custom_call.1} parent=0
    _
  %s17 = ssub.s32 1, %s15
  %s18 = scalar_select 0, %s17, %s15
  $region1: #{tpu_custom_call.1} parent=0
    #allocation3 [shape = 'u8[8192]{0}', space=vmem, size = 0x2000, scoped, tag = 'input window, operand 0']
    #allocation4 [shape = 's32[2]{0}', space=sflag, size = 0x8, scoped, tag = 'scoped memory for tpu_custom_call.1']
    #allocation5 [shape = 's32[2]{0}', space=sflag, size = 0x8, scoped, tag = 'scoped memory for tpu_custom_call.1']
    #allocation6 [shape = 'u8[4096]{0}', space=vmem, size = 0x1000, scoped, tag = 'input window, operand 1']
    #allocation7 [shape = 's32[2]{0}', space=sflag, size = 0x8, scoped, tag = 'scoped memory for tpu_custom_call.1']
    #allocation8 [shape = 'u8[4096]{0}', space=vmem, size = 0x1000, scoped, tag = 'input window, operand 2']
    #allocation9 [shape = 'u8[4096]{0}', space=vmem, size = 0x1000, scoped, tag = 'input window, operand 3']
    #allocation10 [shape = 's32[2]{0}', space=sflag, size = 0x8, scoped, tag = 'scoped memory for tpu_custom_call.1']
    #allocation11 [shape = 'u8[8192]{0}', space=vmem, size = 0x2000, scoped, tag = 'input window, operand 4, single buffered']
    #allocation12 [shape = 'u8[8192]{0}', space=vmem, size = 0x2000, scoped, tag = 'input window, operand 6, single buffered']
    #allocation13 [shape = 's32[1]{0}', space=sflag, size = 0x4, scoped, tag = 'scoped memory for tpu_custom_call.1']
    #allocation14 [shape = 'u8[8192]{0}', space=vmem, size = 0x2000, scoped, tag = 'input window, operand 8, single buffered']
    #allocation15 [shape = 'u8[8192]{0}', space=vmem, size = 0x2000, scoped, tag = 'output window, operand 0']
    %19 = vsyncpa [#allocation4], 0
    %s20 = scalar_lea.sflag [#allocation4], 1
    %21 = vsyncpa %s20, 0
    %22 = vsyncpa [#allocation7], 0
    %s23 = scalar_lea.sflag [#allocation7], 1
    %24 = vsyncpa %s23, 0
    %25 = vsyncpa [#allocation10], 0
    %s26 = scalar_lea.sflag [#allocation10], 1
    %27 = vsyncpa %s26, 0
    %28 = vsyncpa [#allocation13], 0
    %29 = vsyncpa [#allocation5], 0
    %s30 = scalar_lea.sflag [#allocation5], 1
    %31 = vsyncpa %s30, 0
    loop: start=0, step=1, limit=4
    $region2: #{tpu_custom_call.1} parent=1 // loop_pre_header
      _
    $region3: #{tpu_custom_call.1} parent=1 // loop_header
      %s33 = sphi 0, %s37
      %p34 = scmp.ge.s32.totalorder %s33, 4
      %s40 = sphi 0, %s52
      %s41 = sphi 0, %s48
      %s42 = sphi 0, %s40
      %s43 = sphi 0, %s41
      %s44 = sphi 0, %s42
      %s45 = sphi 0, %s43
      %s57 = sphi 0, %s59
      %s60 = sphi 0, %s57
      %s61 = sphi 0, %s60
      %s77 = sphi 0, %s61
      %s85 = sphi 0, %s87
      %s88 = sphi 0, %s85
      %s89 = sphi 0, %s88
      %s105 = sphi 0, %s89
      %s111 = sphi 0, %s113
      %s114 = sphi 0, %s111
      %s115 = sphi 0, %s114
      %s131 = sphi 0, %s115
      %s137 = sphi 0, %s139
      %s140 = sphi 0, %s137
      %s141 = sphi 0, %s140
      %s157 = sphi 0, %s141
      %s161 = sphi 0, %s161
      %s163 = sphi 0, %s161
      %s164 = sphi 0, %s163
      %s178 = sphi 0, %s164
      %s182 = sphi 0, %s182
      %s184 = sphi 0, %s182
      %s185 = sphi 0, %s184
      %s199 = sphi 0, %s185
      %s203 = sphi 0, %s203
      %s205 = sphi 0, %s203
      %s206 = sphi 0, %s205
      %s220 = sphi 0, %s206
      %s224 = sphi 0, %s224
      %s226 = sphi 0, %s224
      %s227 = sphi 0, %s226
      %s241 = sphi 0, %s227
      %s245 = sphi 0, %s245
      %s247 = sphi 0, %s245
      %s248 = sphi 0, %s247
      %s262 = sphi 0, %s248
      %s266 = sphi 0, %s266
      %s268 = sphi 0, %s266
      %s269 = sphi 0, %s268
      %s283 = sphi 0, %s269
      %s287 = sphi 0, %s287
      %s289 = sphi 0, %s287
      %s290 = sphi 0, %s289
      %s304 = sphi 0, %s290
      %s308 = sphi 0, %s308
      %s310 = sphi 0, %s308
      %s311 = sphi 0, %s310
      %s325 = sphi 0, %s311
      %s329 = sphi 0, %s329
      %s331 = sphi 0, %s329
      %s332 = sphi 0, %s331
      %s346 = sphi 0, %s332
      %s350 = sphi 0, %s350
      %s352 = sphi 0, %s350
      %s353 = sphi 0, %s352
      %s367 = sphi 0, %s353
      %s375 = sphi 0, %s377
      %s378 = sphi 0, %s375
      %s379 = sphi 0, %s378
      %s395 = sphi 0, %s379
    $region4: #{tpu_custom_call.1} parent=1 // loop_header_branch
      %36 = sbr.rel (%p34) target = $region8
    $region5: #{tpu_custom_call.1} parent=1 // loop_body
      %s38 = ssub.s32 %s33, 1
      %s39 = ssub.s32 %s33, 2
      %s46 = sadd.s32 1, %s41
      %p47 = scmp.ge.s32.totalorder %s46, 1
      %s48 = scalar_select %p47, 0, %s46
      %s49 = sadd.s32 1, %s40
      %s50 = scalar_select %p47, %s49, %s40
      %p51 = scmp.ge.s32.totalorder %s50, 2
      %s52 = scalar_select %p51, 0, %s50
      %s53 = ssub.s32 %s40, %s52
      %s54 = ssub.s32 %s41, %s48
      %s55 = sor.u32 %s53, %s54
      %p56 = scmp.eq.s32.totalorder %s55, 0
      %s58 = sadd.s32 %s57, 1
      %s59 = scalar_select %p56, %s57, %s58
      %p62 = pneg %p56
      %p63 = scmp.eq.s32.totalorder %s33, 1
      %p64 = por %p62, %p63
      %p65 = scmp.ne.s32.totalorder %s57, %s60
      %p66 = scmp.eq.s32.totalorder %s33, 0
      %p67 = por %p65, %p66
      %p68 = scmp.ne.s32.totalorder %s57, %s60
      %p69 = scmp.eq.s32.totalorder %s38, 1
      %p70 = por %p68, %p69
      %p71 = scmp.ne.s32.totalorder %s60, %s61
      %p72 = scmp.eq.s32.totalorder %s38, 0
      %p73 = por %p71, %p72
      %p74 = scmp.ne.s32.totalorder %s60, %s61
      %p75 = scmp.eq.s32.totalorder %s39, 1
      %p76 = por %p74, %p75
      %p78 = scmp.ne.s32.totalorder %s61, %s77
      %p79 = scmp.eq.s32.totalorder %s39, 0
      %p80 = por %p78, %p79
      %s81 = ssub.s32 %s40, %s52
      %s82 = ssub.s32 %s41, %s48
      %s83 = sor.u32 %s81, %s82
      %p84 = scmp.eq.s32.totalorder %s83, 0
      %s86 = sadd.s32 %s85, 1
      %s87 = scalar_select %p84, %s85, %s86
      %p90 = pneg %p84
      %p91 = scmp.eq.s32.totalorder %s33, 1
      %p92 = por %p90, %p91
      %p93 = scmp.ne.s32.totalorder %s85, %s88
      %p94 = scmp.eq.s32.totalorder %s33, 0
      %p95 = por %p93, %p94
      %p96 = scmp.ne.s32.totalorder %s85, %s88
      %p97 = scmp.eq.s32.totalorder %s38, 1
      %p98 = por %p96, %p97
      %p99 = scmp.ne.s32.totalorder %s88, %s89
      %p100 = scmp.eq.s32.totalorder %s38, 0
      %p101 = por %p99, %p100
      %p102 = scmp.ne.s32.totalorder %s88, %s89
      %p103 = scmp.eq.s32.totalorder %s39, 1
      %p104 = por %p102, %p103
      %p106 = scmp.ne.s32.totalorder %s89, %s105
      %p107 = scmp.eq.s32.totalorder %s39, 0
      %p108 = por %p106, %p107
      %s109 = ssub.s32 %s40, %s52
      %p110 = scmp.eq.s32.totalorder %s109, 0
      %s112 = sadd.s32 %s111, 1
      %s113 = scalar_select %p110, %s111, %s112
      %p116 = pneg %p110
      %p117 = scmp.eq.s32.totalorder %s33, 1
      %p118 = por %p116, %p117
      %p119 = scmp.ne.s32.totalorder %s111, %s114
      %p120 = scmp.eq.s32.totalorder %s33, 0
      %p121 = por %p119, %p120
      %p122 = scmp.ne.s32.totalorder %s111, %s114
      %p123 = scmp.eq.s32.totalorder %s38, 1
      %p124 = por %p122, %p123
      %p125 = scmp.ne.s32.totalorder %s114, %s115
      %p126 = scmp.eq.s32.totalorder %s38, 0
      %p127 = por %p125, %p126
      %p128 = scmp.ne.s32.totalorder %s114, %s115
      %p129 = scmp.eq.s32.totalorder %s39, 1
      %p130 = por %p128, %p129
      %p132 = scmp.ne.s32.totalorder %s115, %s131
      %p133 = scmp.eq.s32.totalorder %s39, 0
      %p134 = por %p132, %p133
      %s135 = ssub.s32 %s40, %s52
      %p136 = scmp.eq.s32.totalorder %s135, 0
      %s138 = sadd.s32 %s137, 1
      %s139 = scalar_select %p136, %s137, %s138
      %p142 = pneg %p136
      %p143 = scmp.eq.s32.totalorder %s33, 1
      %p144 = por %p142, %p143
      %p145 = scmp.ne.s32.totalorder %s137, %s140
      %p146 = scmp.eq.s32.totalorder %s33, 0
      %p147 = por %p145, %p146
      %p148 = scmp.ne.s32.totalorder %s137, %s140
      %p149 = scmp.eq.s32.totalorder %s38, 1
      %p150 = por %p148, %p149
      %p151 = scmp.ne.s32.totalorder %s140, %s141
      %p152 = scmp.eq.s32.totalorder %s38, 0
      %p153 = por %p151, %p152
      %p154 = scmp.ne.s32.totalorder %s140, %s141
      %p155 = scmp.eq.s32.totalorder %s39, 1
      %p156 = por %p154, %p155
      %p158 = scmp.ne.s32.totalorder %s141, %s157
      %p159 = scmp.eq.s32.totalorder %s39, 0
      %p160 = por %p158, %p159
      %s162 = sadd.s32 %s161, 1
      %p165 = scmp.eq.s32.totalorder %s33, 1
      %p166 = scmp.ne.s32.totalorder %s161, %s163
      %p167 = scmp.eq.s32.totalorder %s33, 0
      %p168 = por %p166, %p167
      %p169 = scmp.ne.s32.totalorder %s161, %s163
      %p170 = scmp.eq.s32.totalorder %s38, 1
      %p171 = por %p169, %p170
      %p172 = scmp.ne.s32.totalorder %s163, %s164
      %p173 = scmp.eq.s32.totalorder %s38, 0
      %p174 = por %p172, %p173
      %p175 = scmp.ne.s32.totalorder %s163, %s164
      %p176 = scmp.eq.s32.totalorder %s39, 1
      %p177 = por %p175, %p176
      %p179 = scmp.ne.s32.totalorder %s164, %s178
      %p180 = scmp.eq.s32.totalorder %s39, 0
      %p181 = por %p179, %p180
      %s183 = sadd.s32 %s182, 1
      %p186 = scmp.eq.s32.totalorder %s33, 1
      %p187 = scmp.ne.s32.totalorder %s182, %s184
      %p188 = scmp.eq.s32.totalorder %s33, 0
      %p189 = por %p187, %p188
      %p190 = scmp.ne.s32.totalorder %s182, %s184
      %p191 = scmp.eq.s32.totalorder %s38, 1
      %p192 = por %p190, %p191
      %p193 = scmp.ne.s32.totalorder %s184, %s185
      %p194 = scmp.eq.s32.totalorder %s38, 0
      %p195 = por %p193, %p194
      %p196 = scmp.ne.s32.totalorder %s184, %s185
      %p197 = scmp.eq.s32.totalorder %s39, 1
      %p198 = por %p196, %p197
      %p200 = scmp.ne.s32.totalorder %s185, %s199
      %p201 = scmp.eq.s32.totalorder %s39, 0
      %p202 = por %p200, %p201
      %s204 = sadd.s32 %s203, 1
      %p207 = scmp.eq.s32.totalorder %s33, 1
      %p208 = scmp.ne.s32.totalorder %s203, %s205
      %p209 = scmp.eq.s32.totalorder %s33, 0
      %p210 = por %p208, %p209
      %p211 = scmp.ne.s32.totalorder %s203, %s205
      %p212 = scmp.eq.s32.totalorder %s38, 1
      %p213 = por %p211, %p212
      %p214 = scmp.ne.s32.totalorder %s205, %s206
      %p215 = scmp.eq.s32.totalorder %s38, 0
      %p216 = por %p214, %p215
      %p217 = scmp.ne.s32.totalorder %s205, %s206
      %p218 = scmp.eq.s32.totalorder %s39, 1
      %p219 = por %p217, %p218
      %p221 = scmp.ne.s32.totalorder %s206, %s220
      %p222 = scmp.eq.s32.totalorder %s39, 0
      %p223 = por %p221, %p222
      %s225 = sadd.s32 %s224, 1
      %p228 = scmp.eq.s32.totalorder %s33, 1
      %p229 = scmp.ne.s32.totalorder %s224, %s226
      %p230 = scmp.eq.s32.totalorder %s33, 0
      %p231 = por %p229, %p230
      %p232 = scmp.ne.s32.totalorder %s224, %s226
      %p233 = scmp.eq.s32.totalorder %s38, 1
      %p234 = por %p232, %p233
      %p235 = scmp.ne.s32.totalorder %s226, %s227
      %p236 = scmp.eq.s32.totalorder %s38, 0
      %p237 = por %p235, %p236
      %p238 = scmp.ne.s32.totalorder %s226, %s227
      %p239 = scmp.eq.s32.totalorder %s39, 1
      %p240 = por %p238, %p239
      %p242 = scmp.ne.s32.totalorder %s227, %s241
      %p243 = scmp.eq.s32.totalorder %s39, 0
      %p244 = por %p242, %p243
      %s246 = sadd.s32 %s245, 1
      %p249 = scmp.eq.s32.totalorder %s33, 1
      %p250 = scmp.ne.s32.totalorder %s245, %s247
      %p251 = scmp.eq.s32.totalorder %s33, 0
      %p252 = por %p250, %p251
      %p253 = scmp.ne.s32.totalorder %s245, %s247
      %p254 = scmp.eq.s32.totalorder %s38, 1
      %p255 = por %p253, %p254
      %p256 = scmp.ne.s32.totalorder %s247, %s248
      %p257 = scmp.eq.s32.totalorder %s38, 0
      %p258 = por %p256, %p257
      %p259 = scmp.ne.s32.totalorder %s247, %s248
      %p260 = scmp.eq.s32.totalorder %s39, 1
      %p261 = por %p259, %p260
      %p263 = scmp.ne.s32.totalorder %s248, %s262
      %p264 = scmp.eq.s32.totalorder %s39, 0
      %p265 = por %p263, %p264
      %s267 = sadd.s32 %s266, 1
      %p270 = scmp.eq.s32.totalorder %s33, 1
      %p271 = scmp.ne.s32.totalorder %s266, %s268
      %p272 = scmp.eq.s32.totalorder %s33, 0
      %p273 = por %p271, %p272
      %p274 = scmp.ne.s32.totalorder %s266, %s268
      %p275 = scmp.eq.s32.totalorder %s38, 1
      %p276 = por %p274, %p275
      %p277 = scmp.ne.s32.totalorder %s268, %s269
      %p278 = scmp.eq.s32.totalorder %s38, 0
      %p279 = por %p277, %p278
      %p280 = scmp.ne.s32.totalorder %s268, %s269
      %p281 = scmp.eq.s32.totalorder %s39, 1
      %p282 = por %p280, %p281
      %p284 = scmp.ne.s32.totalorder %s269, %s283
      %p285 = scmp.eq.s32.totalorder %s39, 0
      %p286 = por %p284, %p285
      %s288 = sadd.s32 %s287, 1
      %p291 = scmp.eq.s32.totalorder %s33, 1
      %p292 = scmp.ne.s32.totalorder %s287, %s289
      %p293 = scmp.eq.s32.totalorder %s33, 0
      %p294 = por %p292, %p293
      %p295 = scmp.ne.s32.totalorder %s287, %s289
      %p296 = scmp.eq.s32.totalorder %s38, 1
      %p297 = por %p295, %p296
      %p298 = scmp.ne.s32.totalorder %s289, %s290
      %p299 = scmp.eq.s32.totalorder %s38, 0
      %p300 = por %p298, %p299
      %p301 = scmp.ne.s32.totalorder %s289, %s290
      %p302 = scmp.eq.s32.totalorder %s39, 1
      %p303 = por %p301, %p302
      %p305 = scmp.ne.s32.totalorder %s290, %s304
      %p306 = scmp.eq.s32.totalorder %s39, 0
      %p307 = por %p305, %p306
      %s309 = sadd.s32 %s308, 1
      %p312 = scmp.eq.s32.totalorder %s33, 1
      %p313 = scmp.ne.s32.totalorder %s308, %s310
      %p314 = scmp.eq.s32.totalorder %s33, 0
      %p315 = por %p313, %p314
      %p316 = scmp.ne.s32.totalorder %s308, %s310
      %p317 = scmp.eq.s32.totalorder %s38, 1
      %p318 = por %p316, %p317
      %p319 = scmp.ne.s32.totalorder %s310, %s311
      %p320 = scmp.eq.s32.totalorder %s38, 0
      %p321 = por %p319, %p320
      %p322 = scmp.ne.s32.totalorder %s310, %s311
      %p323 = scmp.eq.s32.totalorder %s39, 1
      %p324 = por %p322, %p323
      %p326 = scmp.ne.s32.totalorder %s311, %s325
      %p327 = scmp.eq.s32.totalorder %s39, 0
      %p328 = por %p326, %p327
      %s330 = sadd.s32 %s329, 1
      %p333 = scmp.eq.s32.totalorder %s33, 1
      %p334 = scmp.ne.s32.totalorder %s329, %s331
      %p335 = scmp.eq.s32.totalorder %s33, 0
      %p336 = por %p334, %p335
      %p337 = scmp.ne.s32.totalorder %s329, %s331
      %p338 = scmp.eq.s32.totalorder %s38, 1
      %p339 = por %p337, %p338
      %p340 = scmp.ne.s32.totalorder %s331, %s332
      %p341 = scmp.eq.s32.totalorder %s38, 0
      %p342 = por %p340, %p341
      %p343 = scmp.ne.s32.totalorder %s331, %s332
      %p344 = scmp.eq.s32.totalorder %s39, 1
      %p345 = por %p343, %p344
      %p347 = scmp.ne.s32.totalorder %s332, %s346
      %p348 = scmp.eq.s32.totalorder %s39, 0
      %p349 = por %p347, %p348
      %s351 = sadd.s32 %s350, 1
      %p354 = scmp.eq.s32.totalorder %s33, 1
      %p355 = scmp.ne.s32.totalorder %s350, %s352
      %p356 = scmp.eq.s32.totalorder %s33, 0
      %p357 = por %p355, %p356
      %p358 = scmp.ne.s32.totalorder %s350, %s352
      %p359 = scmp.eq.s32.totalorder %s38, 1
      %p360 = por %p358, %p359
      %p361 = scmp.ne.s32.totalorder %s352, %s353
      %p362 = scmp.eq.s32.totalorder %s38, 0
      %p363 = por %p361, %p362
      %p364 = scmp.ne.s32.totalorder %s352, %s353
      %p365 = scmp.eq.s32.totalorder %s39, 1
      %p366 = por %p364, %p365
      %p368 = scmp.ne.s32.totalorder %s353, %s367
      %p369 = scmp.eq.s32.totalorder %s39, 0
      %p370 = por %p368, %p369
      %s371 = ssub.s32 %s40, %s52
      %s372 = ssub.s32 %s41, %s48
      %s373 = sor.u32 %s371, %s372
      %p374 = scmp.eq.s32.totalorder %s373, 0
      %s376 = sadd.s32 %s375, 1
      %s377 = scalar_select %p374, %s375, %s376
      %p380 = pneg %p374
      %p381 = scmp.eq.s32.totalorder %s33, 1
      %p382 = por %p380, %p381
      %p383 = scmp.ne.s32.totalorder %s375, %s378
      %p384 = scmp.eq.s32.totalorder %s33, 0
      %p385 = por %p383, %p384
      %p386 = scmp.ne.s32.totalorder %s375, %s378
      %p387 = scmp.eq.s32.totalorder %s38, 1
      %p388 = por %p386, %p387
      %p389 = scmp.ne.s32.totalorder %s378, %s379
      %p390 = scmp.eq.s32.totalorder %s38, 0
      %p391 = por %p389, %p390
      %p392 = scmp.ne.s32.totalorder %s378, %s379
      %p393 = scmp.eq.s32.totalorder %s39, 1
      %p394 = por %p392, %p393
      %p396 = scmp.ne.s32.totalorder %s379, %s395
      %p397 = scmp.eq.s32.totalorder %s39, 0
      %p398 = por %p396, %p397
      %p399 = scmp.le.s32.totalorder 1, %s33
      %p400 = scmp.lt.s32.totalorder %s33, 3
      %p401 = pnand %p399, %p400
      %p402 = pneg %p401
      // Predicated region
      $region9: #{tpu_custom_call.1} parent=5 // pred_check
        _
      $region10: #{tpu_custom_call.1} parent=5 // pred_check_branch
        %404 = sbr.rel (%p401) target = $region12
      $region11: #{tpu_custom_call.1} parent=5 // pred_region
        %s405 = ssub.s32 %s33, 1
        // Predicated region
        $region13: #{tpu_custom_call.1} parent=11 // pred_check
          %p406 = pneg %p174
        $region14: #{tpu_custom_call.1} parent=11 // pred_check_branch
          %408 = sbr.rel (%p406) target = $region16
        $region15: #{tpu_custom_call.1} parent=11 // pred_region
          %410 = vsyncadd [#allocation10], 0
          %s411 = sshll.u32 %s4, 4
          %s412 = int_to_ptr.hbm [resolvable:$true] %s411
          %s413 = sshll.u32 [#allocation11], 4
          %s414 = int_to_ptr.vmem [resolvable:$true] %s413
          %419 = dma.hbm_to_vmem [thread:$0]  %s412, 256, %s414, [#allocation10], 64, 64, 4
        $region16: #{tpu_custom_call.1} parent=11 // pred_fallthru
          _
        // Predicated region
        $region17: #{tpu_custom_call.1} parent=11 // pred_check
          %p420 = pneg %p195
        $region18: #{tpu_custom_call.1} parent=11 // pred_check_branch
          %422 = sbr.rel (%p420) target = $region20
        $region19: #{tpu_custom_call.1} parent=11 // pred_region
          _
        $region20: #{tpu_custom_call.1} parent=11 // pred_fallthru
          _
        // Predicated region
        $region21: #{tpu_custom_call.1} parent=11 // pred_check
          %p423 = pneg %p216
        $region22: #{tpu_custom_call.1} parent=11 // pred_check_branch
          %425 = sbr.rel (%p423) target = $region24
        $region23: #{tpu_custom_call.1} parent=11 // pred_region
          %427 = vsyncadd [#allocation13], 0
          %s428 = sshll.u32 %s6, 4
          %s429 = int_to_ptr.hbm [resolvable:$true] %s428
          %s430 = sshll.u32 [#allocation12], 4
          %s431 = int_to_ptr.vmem [resolvable:$true] %s430
          %436 = dma.hbm_to_vmem [thread:$0]  %s429, 256, %s431, [#allocation13], 64, 64, 4
        $region24: #{tpu_custom_call.1} parent=11 // pred_fallthru
          _
        // Predicated region
        $region25: #{tpu_custom_call.1} parent=11 // pred_check
          %p437 = pneg %p237
        $region26: #{tpu_custom_call.1} parent=11 // pred_check_branch
          %439 = sbr.rel (%p437) target = $region28
        $region27: #{tpu_custom_call.1} parent=11 // pred_region
          _
        $region28: #{tpu_custom_call.1} parent=11 // pred_fallthru
          _
        // Predicated region
        $region29: #{tpu_custom_call.1} parent=11 // pred_check
          %p440 = pneg %p258
        $region30: #{tpu_custom_call.1} parent=11 // pred_check_branch
          %442 = sbr.rel (%p440) target = $region32
        $region31: #{tpu_custom_call.1} parent=11 // pred_region
          %444 = vsyncadd [#allocation13], 0
          %s445 = sshll.u32 %s8, 4
          %s446 = int_to_ptr.hbm [resolvable:$true] %s445
          %s447 = sshll.u32 [#allocation14], 4
          %s448 = int_to_ptr.vmem [resolvable:$true] %s447
          %453 = dma.hbm_to_vmem [thread:$0]  %s446, 256, %s448, [#allocation13], 64, 64, 4
        $region32: #{tpu_custom_call.1} parent=11 // pred_fallthru
          _
        // Predicated region
        $region33: #{tpu_custom_call.1} parent=11 // pred_check
          %p454 = pneg %p279
        $region34: #{tpu_custom_call.1} parent=11 // pred_check_branch
          %456 = sbr.rel (%p454) target = $region36
        $region35: #{tpu_custom_call.1} parent=11 // pred_region
          _
        $region36: #{tpu_custom_call.1} parent=11 // pred_fallthru
          _
        // Predicated region
        $region37: #{tpu_custom_call.1} parent=11 // pred_check
          %p457 = pneg %p300
        $region38: #{tpu_custom_call.1} parent=11 // pred_check_branch
          %459 = sbr.rel (%p457) target = $region40
        $region39: #{tpu_custom_call.1} parent=11 // pred_region
          _
        $region40: #{tpu_custom_call.1} parent=11 // pred_fallthru
          _
        // Predicated region
        $region41: #{tpu_custom_call.1} parent=11 // pred_check
          %p460 = pneg %p321
        $region42: #{tpu_custom_call.1} parent=11 // pred_check_branch
          %462 = sbr.rel (%p460) target = $region44
        $region43: #{tpu_custom_call.1} parent=11 // pred_region
          _
        $region44: #{tpu_custom_call.1} parent=11 // pred_fallthru
          _
        // Predicated region
        $region45: #{tpu_custom_call.1} parent=11 // pred_check
          %p463 = pneg %p342
        $region46: #{tpu_custom_call.1} parent=11 // pred_check_branch
          %465 = sbr.rel (%p463) target = $region48
        $region47: #{tpu_custom_call.1} parent=11 // pred_region
          _
        $region48: #{tpu_custom_call.1} parent=11 // pred_fallthru
          _
        // Predicated region
        $region49: #{tpu_custom_call.1} parent=11 // pred_check
          %p466 = pneg %p363
        $region50: #{tpu_custom_call.1} parent=11 // pred_check_branch
          %468 = sbr.rel (%p466) target = $region52
        $region51: #{tpu_custom_call.1} parent=11 // pred_region
          _
        $region52: #{tpu_custom_call.1} parent=11 // pred_fallthru
          _
      $region12: #{tpu_custom_call.1} parent=5 // pred_fallthru
        _
      %p469 = scmp.lt.s32.totalorder %s33, 2
      // Predicated region
      $region53: #{tpu_custom_call.1} parent=5 // pred_check
        %p470 = pneg %p469
      $region54: #{tpu_custom_call.1} parent=5 // pred_check_branch
        %472 = sbr.rel (%p470) target = $region56
      $region55: #{tpu_custom_call.1} parent=5 // pred_region
        // Predicated region
        $region57: #{tpu_custom_call.1} parent=55 // pred_check
          %p473 = pneg %p67
        $region58: #{tpu_custom_call.1} parent=55 // pred_check_branch
          %475 = sbr.rel (%p473) target = $region60
        $region59: #{tpu_custom_call.1} parent=55 // pred_region
          %s476 = sand.u32 %s57, 1
          %s477 = scalar_lea.sflag [#allocation4], %s476
          %s478 = sand.u32 %s57, 1
          %s479 = smul.addr %s478, 8
          %s480 = scalar_lea.vmem [#allocation3], %s479
          %482 = vsyncadd %s477, 0
          %s483 = sadd.s32 %s41, %s40
          %s484 = smul.addr %s483, 8
          %s485 = scalar_lea.hbm %s0, %s484
          %s487 = sshll.u32 %s485, 4
          %s488 = int_to_ptr.hbm [resolvable:$true] %s487
          %s489 = sshll.u32 %s480, 4
          %s490 = int_to_ptr.vmem [resolvable:$true] %s489
          %492 = dma.hbm_to_vmem [thread:$0]  %s488, 128, %s490, %s477
        $region60: #{tpu_custom_call.1} parent=55 // pred_fallthru
          _
        // Predicated region
        $region61: #{tpu_custom_call.1} parent=55 // pred_check
          %p493 = pneg %p95
        $region62: #{tpu_custom_call.1} parent=55 // pred_check_branch
          %495 = sbr.rel (%p493) target = $region64
        $region63: #{tpu_custom_call.1} parent=55 // pred_region
          %s496 = sand.u32 %s33, 1
          %s497 = scalar_lea.sflag [#allocation7], %s496
          %s498 = sand.u32 %s85, 1
          %s499 = smul.addr %s498, 4
          %s500 = scalar_lea.vmem [#allocation6], %s499
          %502 = vsyncadd %s497, 0
          %s503 = sadd.s32 %s41, %s40
          %s504 = smul.addr %s503, 4
          %s505 = scalar_lea.hbm %s1, %s504
          %s507 = sshll.u32 %s505, 4
          %s508 = int_to_ptr.hbm [resolvable:$true] %s507
          %s509 = sshll.u32 %s500, 4
          %s510 = int_to_ptr.vmem [resolvable:$true] %s509
          %512 = dma.hbm_to_vmem [thread:$0]  %s508, 64, %s510, %s497
        $region64: #{tpu_custom_call.1} parent=55 // pred_fallthru
          _
        // Predicated region
        $region65: #{tpu_custom_call.1} parent=55 // pred_check
          %p513 = pneg %p121
        $region66: #{tpu_custom_call.1} parent=55 // pred_check_branch
          %515 = sbr.rel (%p513) target = $region68
        $region67: #{tpu_custom_call.1} parent=55 // pred_region
          %s516 = sand.u32 %s33, 1
          %s517 = scalar_lea.sflag [#allocation7], %s516
          %s518 = sand.u32 %s111, 1
          %s519 = smul.addr %s518, 4
          %s520 = scalar_lea.vmem [#allocation8], %s519
          %522 = vsyncadd %s517, 0
          %s523 = smul.addr %s40, 4
          %s524 = scalar_lea.hbm %s2, %s523
          %s526 = sshll.u32 %s524, 4
          %s527 = int_to_ptr.hbm [resolvable:$true] %s526
          %s528 = sshll.u32 %s520, 4
          %s529 = int_to_ptr.vmem [resolvable:$true] %s528
          %531 = dma.hbm_to_vmem [thread:$0]  %s527, 64, %s529, %s517
        $region68: #{tpu_custom_call.1} parent=55 // pred_fallthru
          _
        // Predicated region
        $region69: #{tpu_custom_call.1} parent=55 // pred_check
          %p532 = pneg %p147
        $region70: #{tpu_custom_call.1} parent=55 // pred_check_branch
          %534 = sbr.rel (%p532) target = $region72
        $region71: #{tpu_custom_call.1} parent=55 // pred_region
          %s535 = sand.u32 %s33, 1
          %s536 = scalar_lea.sflag [#allocation10], %s535
          %s537 = sand.u32 %s137, 1
          %s538 = smul.addr %s537, 4
          %s539 = scalar_lea.vmem [#allocation9], %s538
          %541 = vsyncadd %s536, 0
          %s542 = smul.addr %s40, 4
          %s543 = scalar_lea.hbm %s3, %s542
          %s545 = sshll.u32 %s543, 4
          %s546 = int_to_ptr.hbm [resolvable:$true] %s545
          %s547 = sshll.u32 %s539, 4
          %s548 = int_to_ptr.vmem [resolvable:$true] %s547
          %550 = dma.hbm_to_vmem [thread:$0]  %s546, 64, %s548, %s536
        $region72: #{tpu_custom_call.1} parent=55 // pred_fallthru
          _
      $region56: #{tpu_custom_call.1} parent=5 // pred_fallthru
        _
      %p551 = scmp.le.s32.totalorder 1, %s33
      %p552 = scmp.lt.s32.totalorder %s33, 3
      %p553 = pnand %p551, %p552
      %p554 = pneg %p553
      // Predicated region
      $region73: #{tpu_custom_call.1} parent=5 // pred_check
        _
      $region74: #{tpu_custom_call.1} parent=5 // pred_check_branch
        %556 = sbr.rel (%p553) target = $region76
      $region75: #{tpu_custom_call.1} parent=5 // pred_region
        %s557 = ssub.s32 %s33, 1
        %s558 = sand.u32 %s60, 1
        %s559 = scalar_lea.sflag [#allocation4], %s558
        %s560 = sand.u32 %s60, 1
        %s561 = smul.addr %s560, 8
        %s562 = scalar_lea.vmem [#allocation3], %s561
        // Predicated region
        $region77: #{tpu_custom_call.1} parent=75 // pred_check
          %p563 = pneg %p73
        $region78: #{tpu_custom_call.1} parent=75 // pred_check_branch
          %565 = sbr.rel (%p563) target = $region80
        $region79: #{tpu_custom_call.1} parent=75 // pred_region
          %567 = dma.done %s559, 128
        $region80: #{tpu_custom_call.1} parent=75 // pred_fallthru
          _
        %s568 = sand.u32 %s38, 1
        %s569 = scalar_lea.sflag [#allocation7], %s568
        %s570 = sand.u32 %s88, 1
        %s571 = smul.addr %s570, 4
        %s572 = scalar_lea.vmem [#allocation6], %s571
        // Predicated region
        $region81: #{tpu_custom_call.1} parent=75 // pred_check
          %p573 = pneg %p101
        $region82: #{tpu_custom_call.1} parent=75 // pred_check_branch
          %575 = sbr.rel (%p573) target = $region84
        $region83: #{tpu_custom_call.1} parent=75 // pred_region
          %577 = dma.done %s569, 64
        $region84: #{tpu_custom_call.1} parent=75 // pred_fallthru
          _
        %s578 = sand.u32 %s38, 1
        %s579 = scalar_lea.sflag [#allocation7], %s578
        %s580 = sand.u32 %s114, 1
        %s581 = smul.addr %s580, 4
        %s582 = scalar_lea.vmem [#allocation8], %s581
        // Predicated region
        $region85: #{tpu_custom_call.1} parent=75 // pred_check
          %p583 = pneg %p127
        $region86: #{tpu_custom_call.1} parent=75 // pred_check_branch
          %585 = sbr.rel (%p583) target = $region88
        $region87: #{tpu_custom_call.1} parent=75 // pred_region
          %587 = dma.done %s579, 64
        $region88: #{tpu_custom_call.1} parent=75 // pred_fallthru
          _
        %s588 = sand.u32 %s38, 1
        %s589 = scalar_lea.sflag [#allocation10], %s588
        %s590 = sand.u32 %s140, 1
        %s591 = smul.addr %s590, 4
        %s592 = scalar_lea.vmem [#allocation9], %s591
        // Predicated region
        $region89: #{tpu_custom_call.1} parent=75 // pred_check
          %p593 = pneg %p153
        $region90: #{tpu_custom_call.1} parent=75 // pred_check_branch
          %595 = sbr.rel (%p593) target = $region92
        $region91: #{tpu_custom_call.1} parent=75 // pred_region
          %597 = dma.done %s589, 64
        $region92: #{tpu_custom_call.1} parent=75 // pred_fallthru
          _
        // Predicated region
        $region93: #{tpu_custom_call.1} parent=75 // pred_check
          %p598 = pneg %p174
        $region94: #{tpu_custom_call.1} parent=75 // pred_check_branch
          %600 = sbr.rel (%p598) target = $region96
        $region95: #{tpu_custom_call.1} parent=75 // pred_region
          %602 = dma.done [#allocation10], 256
        $region96: #{tpu_custom_call.1} parent=75 // pred_fallthru
          _
        // Predicated region
        $region97: #{tpu_custom_call.1} parent=75 // pred_check
          %p603 = pneg %p216
        $region98: #{tpu_custom_call.1} parent=75 // pred_check_branch
          %605 = sbr.rel (%p603) target = $region100
        $region99: #{tpu_custom_call.1} parent=75 // pred_region
          %607 = dma.done [#allocation13], 256
        $region100: #{tpu_custom_call.1} parent=75 // pred_fallthru
          _
        // Predicated region
        $region101: #{tpu_custom_call.1} parent=75 // pred_check
          %p608 = pneg %p258
        $region102: #{tpu_custom_call.1} parent=75 // pred_check_branch
          %610 = sbr.rel (%p608) target = $region104
        $region103: #{tpu_custom_call.1} parent=75 // pred_region
          %612 = dma.done [#allocation13], 256
        $region104: #{tpu_custom_call.1} parent=75 // pred_fallthru
          _
        %s613 = sand.u32 %s60, 1
        %s614 = scalar_lea.sflag [#allocation4], %s613
        %s615 = sand.u32 %s60, 1
        %s616 = smul.addr %s615, 8
        %s617 = scalar_lea.vmem [#allocation3], %s616
        %p618 = pneg %p73
        %p619 = pneg %p70
        %s620 = sand.u32 %s38, 1
        %s621 = scalar_lea.sflag [#allocation7], %s620
        %s622 = sand.u32 %s88, 1
        %s623 = smul.addr %s622, 4
        %s624 = scalar_lea.vmem [#allocation6], %s623
        %p625 = pneg %p101
        %p626 = pneg %p98
        %s627 = sand.u32 %s38, 1
        %s628 = scalar_lea.sflag [#allocation7], %s627
        %s629 = sand.u32 %s114, 1
        %s630 = smul.addr %s629, 4
        %s631 = scalar_lea.vmem [#allocation8], %s630
        %p632 = pneg %p127
        %p633 = pneg %p124
        %s634 = sand.u32 %s38, 1
        %s635 = scalar_lea.sflag [#allocation10], %s634
        %s636 = sand.u32 %s140, 1
        %s637 = smul.addr %s636, 4
        %s638 = scalar_lea.vmem [#allocation9], %s637
        %p639 = pneg %p153
        %p640 = pneg %p150
        %p641 = pneg %p174
        %p642 = pneg %p171
        %p643 = pneg %p195
        %p644 = pneg %p192
        %p645 = pneg %p216
        %p646 = pneg %p213
        %p647 = pneg %p237
        %p648 = pneg %p234
        %p649 = pneg %p258
        %p650 = pneg %p255
        %p651 = pneg %p279
        %p652 = pneg %p276
        %p653 = pneg %p300
        %p654 = pneg %p297
        %p655 = pneg %p321
        %p656 = pneg %p318
        %p657 = pneg %p342
        %p658 = pneg %p339
        %p659 = pneg %p363
        %p660 = pneg %p360
        %p661 = pneg %p391
        %p662 = pneg %p388
        %s663 = sand.u32 %s378, 1
        %s664 = scalar_lea.sflag [#allocation5], %s663
        %s665 = sand.u32 %s378, 1
        %s666 = smul.addr %s665, 8
        %s667 = scalar_lea.vmem [#allocation15], %s666
        %v669 = vld [vmem:[%s562] sm:$0xff]
        %v670 = vld [vmem:[%s572] sm:$0xf]
        %v671 = vld [vmem:[%s582] sm:$0xf]
        %vm672 = vcmask 64512
        %v674 = vsel %vm672, %v670, 0
        %v677 = vsel %vm672, %v671, 0
        %679 = vmatpush.bf16.xpose.msra.mxu0 0
        %680 = vmatpush.bf16.xpose.msra.mxu0 0
        %681 = vmatpush.bf16.xpose.msra.mxu0 0
        %682 = vmatpush.bf16.xpose.msra.mxu0 0
        %683 = vmatpush.bf16.xpose.msra.mxu0 0
        %684 = vmatpush.bf16.xpose.msra.mxu0 0
        %685 = vmatpush.bf16.xpose.msra.mxu0 0
        %686 = vmatpush.bf16.xpose.msra.mxu0 %v677
        %687 = vmatmul.bf16.gmra.mxu0 %v674
        %v688 = vpop.f32.mrf.mxu0
        %v689 = vadd.f32 0.0, %v688
        %v690 = vpop.f32.mrf.mxu0
        %691 = vdwg.mxu0
        %v692 = vsel %vm672, %v689, -inf
        %693 = vmax.xlane.f32.xlu0 %v692
        %v694 = vpop.xlane.xlu0 %693
        %v695 = vsub.f32 %v689, %v694
        %v696 = vmul.f32 %v695, 1.442695
        %v697 = vpow.pop %v696
        %v698 = vsel %vm672, %v697, 0.0
        %699 = vadd.xlane.f32.xlu0 %v698
        %v700 = vpop.xlane.xlu0 %699
        %v701 = vrcp.pop %v700
        %v702 = vmul.f32 %v697, %v701
        %v703 = vpack.c.bf16 %v702, %v702
        %v704 = vld [vmem:[%s592] sm:$0xf]
        %v706 = vsel %vm672, %v703, 0
        %vm708 = vcmask 1043456
        %v710 = vsel %vm708, %v704, 0
        %712 = vmatpush.bf16.msra.mxu0 0
        %713 = vmatpush.bf16.msra.mxu0 0
        %714 = vmatpush.bf16.msra.mxu0 0
        %715 = vmatpush.bf16.msra.mxu0 0
        %716 = vmatpush.bf16.msra.mxu0 0
        %717 = vmatpush.bf16.msra.mxu0 0
        %718 = vmatpush.bf16.msra.mxu0 0
        %719 = vmatpush.bf16.msra.mxu0 %v710
        %720 = vmatmul.bf16.gmra.mxu0 %v706
        %v721 = vpop.f32.mrf.mxu0
        %v722 = vadd.f32 0.0, %v721
        %v723 = vpop.f32.mrf.mxu0
        %724 = vdwg.mxu0
        %v725 = vpack.c.bf16 %v722, %v722
        %vm726 = vcmask 60416
        %727 = vst.msk [vmem:[#allocation2] sm:$0xf] %vm726, %v725
        %v728 = vld [vmem:[%s572] sm:$0xf]
        %v729 = vld [vmem:[%s582] sm:$0xf]
        %v731 = vunpack.c.l.b16 %v728
        %v732 = vpack.c.b16 %v731, %v731
        %733 = vrot.lane.b32.xlu0 %v732, 120
        %v734 = vpop.permute.xlu0 %733
        %v736 = vunpack.c.l.b16 %v729
        %v737 = vpack.c.b16 %v736, %v736
        %738 = vrot.lane.b32.xlu0 %v737, 120
        %v739 = vpop.permute.xlu0 %738
        %v741 = vsel %vm672, %v734, 0
        %v744 = vsel %vm672, %v739, 0
        %746 = vmatpush.bf16.xpose.msra.mxu0 0
        %747 = vmatpush.bf16.xpose.msra.mxu0 0
        %748 = vmatpush.bf16.xpose.msra.mxu0 0
        %749 = vmatpush.bf16.xpose.msra.mxu0 0
        %750 = vmatpush.bf16.xpose.msra.mxu0 0
        %751 = vmatpush.bf16.xpose.msra.mxu0 0
        %752 = vmatpush.bf16.xpose.msra.mxu0 0
        %753 = vmatpush.bf16.xpose.msra.mxu0 %v744
        %754 = vmatmul.bf16.gmra.mxu0 %v741
        %v755 = vpop.f32.mrf.mxu0
        %v756 = vadd.f32 0.0, %v755
        %v757 = vpop.f32.mrf.mxu0
        %758 = vdwg.mxu0
        %v759 = vsel %vm672, %v756, -inf
        %760 = vmax.xlane.f32.xlu0 %v759
        %v761 = vpop.xlane.xlu0 %760
        %v762 = vsub.f32 %v756, %v761
        %v763 = vmul.f32 %v762, 1.442695
        %v764 = vpow.pop %v763
        %v765 = vsel %vm672, %v764, 0.0
        %766 = vadd.xlane.f32.xlu0 %v765
        %v767 = vpop.xlane.xlu0 %766
        %v768 = vrcp.pop %v767
        %v769 = vmul.f32 %v764, %v768
        %v770 = vpack.c.bf16 %v769, %v769
        %v771 = vld [vmem:[%s592] sm:$0xf]
        %v773 = vunpack.c.l.b16 %v771
        %v774 = vpack.c.b16 %v773, %v773
        %775 = vrot.lane.b32.xlu0 %v774, 120
        %v776 = vpop.permute.xlu0 %775
        %v778 = vsel %vm672, %v770, 0
        %v781 = vsel %vm708, %v776, 0
        %783 = vmatpush.bf16.msra.mxu0 0
        %784 = vmatpush.bf16.msra.mxu0 0
        %785 = vmatpush.bf16.msra.mxu0 0
        %786 = vmatpush.bf16.msra.mxu0 0
        %787 = vmatpush.bf16.msra.mxu0 0
        %788 = vmatpush.bf16.msra.mxu0 0
        %789 = vmatpush.bf16.msra.mxu0 0
        %790 = vmatpush.bf16.msra.mxu0 %v781
        %791 = vmatmul.bf16.gmra.mxu0 %v778
        %v792 = vpop.f32.mrf.mxu0
        %v793 = vadd.f32 0.0, %v792
        %v794 = vpop.f32.mrf.mxu0
        %795 = vdwg.mxu0
        %v796 = vpack.c.bf16 %v793, %v793
        %798 = vrot.lane.b32.xlu0 %v796, 8
        %v799 = vpop.permute.xlu0 %798
        %vm801 = vcmask 126016
        %802 = vst.msk [vmem:[#allocation2] sm:$0xf] %vm801, %v799
        %v803 = vld [vmem:[%s572] sm:$0xf]
        %v804 = vld [vmem:[%s582] sm:$0xf]
        %v806 = vunpack.c.l.b16 %v803
        %v807 = vpack.c.b16 %v806, %v806
        %808 = vrot.lane.b32.xlu0 %v807, 112
        %v809 = vpop.permute.xlu0 %808
        %v811 = vunpack.c.l.b16 %v804
        %v812 = vpack.c.b16 %v811, %v811
        %813 = vrot.lane.b32.xlu0 %v812, 112
        %v814 = vpop.permute.xlu0 %813
        %v816 = vsel %vm672, %v809, 0
        %v819 = vsel %vm672, %v814, 0
        %821 = vmatpush.bf16.xpose.msra.mxu0 0
        %822 = vmatpush.bf16.xpose.msra.mxu0 0
        %823 = vmatpush.bf16.xpose.msra.mxu0 0
        %824 = vmatpush.bf16.xpose.msra.mxu0 0
        %825 = vmatpush.bf16.xpose.msra.mxu0 0
        %826 = vmatpush.bf16.xpose.msra.mxu0 0
        %827 = vmatpush.bf16.xpose.msra.mxu0 0
        %828 = vmatpush.bf16.xpose.msra.mxu0 %v819
        %829 = vmatmul.bf16.gmra.mxu0 %v816
        %v830 = vpop.f32.mrf.mxu0
        %v831 = vadd.f32 0.0, %v830
        %v832 = vpop.f32.mrf.mxu0
        %833 = vdwg.mxu0
        %v834 = vsel %vm672, %v831, -inf
        %835 = vmax.xlane.f32.xlu0 %v834
        %v836 = vpop.xlane.xlu0 %835
        %v837 = vsub.f32 %v831, %v836
        %v838 = vmul.f32 %v837, 1.442695
        %v839 = vpow.pop %v838
        %v840 = vsel %vm672, %v839, 0.0
        %841 = vadd.xlane.f32.xlu0 %v840
        %v842 = vpop.xlane.xlu0 %841
        %v843 = vrcp.pop %v842
        %v844 = vmul.f32 %v839, %v843
        %v845 = vpack.c.bf16 %v844, %v844
        %v846 = vld [vmem:[%s592] sm:$0xf]
        %v848 = vunpack.c.l.b16 %v846
        %v849 = vpack.c.b16 %v848, %v848
        %850 = vrot.lane.b32.xlu0 %v849, 112
        %v851 = vpop.permute.xlu0 %850
        %v853 = vsel %vm672, %v845, 0
        %v856 = vsel %vm708, %v851, 0
        %858 = vmatpush.bf16.msra.mxu0 0
        %859 = vmatpush.bf16.msra.mxu0 0
        %860 = vmatpush.bf16.msra.mxu0 0
        %861 = vmatpush.bf16.msra.mxu0 0
        %862 = vmatpush.bf16.msra.mxu0 0
        %863 = vmatpush.bf16.msra.mxu0 0
        %864 = vmatpush.bf16.msra.mxu0 0
        %865 = vmatpush.bf16.msra.mxu0 %v856
        %866 = vmatmul.bf16.gmra.mxu0 %v853
        %v867 = vpop.f32.mrf.mxu0
        %v868 = vadd.f32 0.0, %v867
        %v869 = vpop.f32.mrf.mxu0
        %870 = vdwg.mxu0
        %v871 = vpack.c.bf16 %v868, %v868
        %873 = vrot.lane.b32.xlu0 %v871, 16
        %v874 = vpop.permute.xlu0 %873
        %vm876 = vcmask 191616
        %877 = vst.msk [vmem:[#allocation2] sm:$0xf] %vm876, %v874
        %v878 = vld [vmem:[%s572] sm:$0xf]
        %v879 = vld [vmem:[%s582] sm:$0xf]
        %v881 = vunpack.c.l.b16 %v878
        %v882 = vpack.c.b16 %v881, %v881
        %883 = vrot.lane.b32.xlu0 %v882, 104
        %v884 = vpop.permute.xlu0 %883
        %v886 = vunpack.c.l.b16 %v879
        %v887 = vpack.c.b16 %v886, %v886
        %888 = vrot.lane.b32.xlu0 %v887, 104
        %v889 = vpop.permute.xlu0 %888
        %v891 = vsel %vm672, %v884, 0
        %v894 = vsel %vm672, %v889, 0
        %896 = vmatpush.bf16.xpose.msra.mxu0 0
        %897 = vmatpush.bf16.xpose.msra.mxu0 0
        %898 = vmatpush.bf16.xpose.msra.mxu0 0
        %899 = vmatpush.bf16.xpose.msra.mxu0 0
        %900 = vmatpush.bf16.xpose.msra.mxu0 0
        %901 = vmatpush.bf16.xpose.msra.mxu0 0
        %902 = vmatpush.bf16.xpose.msra.mxu0 0
        %903 = vmatpush.bf16.xpose.msra.mxu0 %v894
        %904 = vmatmul.bf16.gmra.mxu0 %v891
        %v905 = vpop.f32.mrf.mxu0
        %v906 = vadd.f32 0.0, %v905
        %v907 = vpop.f32.mrf.mxu0
        %908 = vdwg.mxu0
        %v909 = vsel %vm672, %v906, -inf
        %910 = vmax.xlane.f32.xlu0 %v909
        %v911 = vpop.xlane.xlu0 %910
        %v912 = vsub.f32 %v906, %v911
        %v913 = vmul.f32 %v912, 1.442695
        %v914 = vpow.pop %v913
        %v915 = vsel %vm672, %v914, 0.0
        %916 = vadd.xlane.f32.xlu0 %v915
        %v917 = vpop.xlane.xlu0 %916
        %v918 = vrcp.pop %v917
        %v919 = vmul.f32 %v914, %v918
        %v920 = vpack.c.bf16 %v919, %v919
        %v921 = vld [vmem:[%s592] sm:$0xf]
        %v923 = vunpack.c.l.b16 %v921
        %v924 = vpack.c.b16 %v923, %v923
        %925 = vrot.lane.b32.xlu0 %v924, 104
        %v926 = vpop.permute.xlu0 %925
        %v928 = vsel %vm672, %v920, 0
        %v931 = vsel %vm708, %v926, 0
        %933 = vmatpush.bf16.msra.mxu0 0
        %934 = vmatpush.bf16.msra.mxu0 0
        %935 = vmatpush.bf16.msra.mxu0 0
        %936 = vmatpush.bf16.msra.mxu0 0
        %937 = vmatpush.bf16.msra.mxu0 0
        %938 = vmatpush.bf16.msra.mxu0 0
        %939 = vmatpush.bf16.msra.mxu0 0
        %940 = vmatpush.bf16.msra.mxu0 %v931
        %941 = vmatmul.bf16.gmra.mxu0 %v928
        %v942 = vpop.f32.mrf.mxu0
        %v943 = vadd.f32 0.0, %v942
        %v944 = vpop.f32.mrf.mxu0
        %945 = vdwg.mxu0
        %v946 = vpack.c.bf16 %v943, %v943
        %948 = vrot.lane.b32.xlu0 %v946, 24
        %v949 = vpop.permute.xlu0 %948
        %vm951 = vcmask 257216
        %952 = vst.msk [vmem:[#allocation2] sm:$0xf] %vm951, %v949
        %v953 = vld [vmem:[#allocation2] sm:$0xf]
        %v954 = vld [vmem:[#allocation11] sm:$0xf]
        %v955 = vld [vmem:[#allocation11 + $0x4] sm:$0xf]
        %v956 = vld [vmem:[#allocation11 + $0x8] sm:$0xf]
        %v957 = vld [vmem:[#allocation11 + $0xc] sm:$0xf]
        %v958 = vld [vmem:[%s5] sm:$0x1]
        %v960 = vperm.slane %v958, 0
        %v966 = vunpack.c.l.b16 %v954
        %v967 = vunpack.c.l.b16 %v955
        %v968 = vunpack.c.l.b16 %v956
        %v969 = vunpack.c.l.b16 %v957
        %v970 = vpack.c.b16 %v967, %v966
        %v971 = vpack.c.b16 %v969, %v968
        %vm974 = vcmask 261120
        %v976 = vsel %vm974, %v953, 0
        %978 = vmatpush.bf16.msra.mxu0 0
        %979 = vmatpush.bf16.msra.mxu0 0
        %980 = vmatpush.bf16.msra.mxu0 0
        %981 = vmatpush.bf16.msra.mxu0 0
        %982 = vmatpush.bf16.msra.mxu0 0
        %983 = vmatpush.bf16.msra.mxu0 0
        %984 = vmatpush.bf16.msra.mxu0 %v971
        %985 = vmatpush.bf16.msra.mxu0 %v970
        %986 = vmatmul.bf16.gmra.mxu0 %v976
        %v987 = vpop.f32.mrf.mxu0
        %v988 = vadd.f32 %v960, %v987
        %v989 = vpop.f32.mrf.mxu0
        %990 = vdwg.mxu0
        %v991 = vadd.f32 %v669, %v988
        %v992 = vld [vmem:[%s10] sm:$0x1]
        %v993 = vld [vmem:[%s11] sm:$0x1]
        %v994 = vsel %vm974, %v991, 0.0
        %995 = vadd.xlane.f32.xlu0 %v994
        %v996 = vpop.xlane.xlu0 %995
        %v997 = vrcp.pop 32.0
        %v998 = vmul.f32 32.0, %v997
        %v999 = vsub.f32 1.0, %v998
        %v1000 = vmul.f32 %v997, %v999
        %v1001 = vadd.f32 %v997, %v1000
        %vm1002 = vweird.f32 %v997
        %v1003 = vsel %vm1002, %v997, %v1001
        %v1004 = vmul.f32 %v996, %v1003
        %v1005 = vsub.f32 %v991, %v1004
        %v1006 = vmul.f32 %v1005, %v1005
        %v1007 = vsel %vm974, %v1006, 0.0
        %1008 = vadd.xlane.f32.xlu0 %v1007
        %v1009 = vpop.xlane.xlu0 %1008
        %v1010 = vmul.f32 %v1009, %v1003
        %v1011 = vadd.f32 %v1010, 1e-05
        %v1012 = vrsqrt.pop %v1011
        %v1013 = vmul.f32 %v1012, %v1011
        %v1014 = vmul.f32 %v1013, %v1012
        %v1015 = vmul.f32 0.5, %v1014
        %v1016 = vsub.f32 1.5, %v1015
        %v1017 = vmul.f32 %v1012, %v1016
        %vm1018 = vweird.f32 %v1011
        %vm1019 = vweird.f32 %v1012
        %vm1020 = vmor %vm1018, %vm1019
        %v1021 = vsel %vm1020, %v1012, %v1017
        %v1022 = vmul.f32 %v1005, %v1021
        %v1024 = vperm.slane %v992, 0
        %v1026 = vmul.f32 %v1022, %v1024
        %v1028 = vperm.slane %v993, 0
        %v1030 = vadd.f32 %v1026, %v1028
        %v1031 = vpack.c.bf16 %v1030, %v1030
        %v1032 = vld [vmem:[#allocation12] sm:$0xf]
        %v1033 = vld [vmem:[#allocation12 + $0x4] sm:$0xf]
        %v1034 = vld [vmem:[#allocation12 + $0x8] sm:$0xf]
        %v1035 = vld [vmem:[#allocation12 + $0xc] sm:$0xf]
        %v1036 = vld [vmem:[%s7] sm:$0x1]
        %v1038 = vperm.slane %v1036, 0
        %v1044 = vunpack.c.l.b16 %v1032
        %v1045 = vunpack.c.l.b16 %v1033
        %v1046 = vunpack.c.l.b16 %v1034
        %v1047 = vunpack.c.l.b16 %v1035
        %v1048 = vpack.c.b16 %v1045, %v1044
        %v1049 = vpack.c.b16 %v1047, %v1046
        %v1053 = vsel %vm974, %v1031, 0
        %1055 = vmatpush.bf16.msra.mxu0 0
        %1056 = vmatpush.bf16.msra.mxu0 0
        %1057 = vmatpush.bf16.msra.mxu0 0
        %1058 = vmatpush.bf16.msra.mxu0 0
        %1059 = vmatpush.bf16.msra.mxu0 0
        %1060 = vmatpush.bf16.msra.mxu0 0
        %1061 = vmatpush.bf16.msra.mxu0 %v1049
        %1062 = vmatpush.bf16.msra.mxu0 %v1048
        %1063 = vmatmul.bf16.gmra.mxu0 %v1053
        %v1064 = vpop.f32.mrf.mxu0
        %v1065 = vadd.f32 %v1038, %v1064
        %v1066 = vpop.f32.mrf.mxu0
        %1067 = vdwg.mxu0
        %v1068 = vmax.f32 %v1065, 0.0
        %v1069 = vpack.c.bf16 %v1068, %v1068
        %v1070 = vld [vmem:[#allocation14] sm:$0xf]
        %v1071 = vld [vmem:[#allocation14 + $0x4] sm:$0xf]
        %v1072 = vld [vmem:[#allocation14 + $0x8] sm:$0xf]
        %v1073 = vld [vmem:[#allocation14 + $0xc] sm:$0xf]
        %v1074 = vld [vmem:[%s9] sm:$0x1]
        %v1076 = vperm.slane %v1074, 0
        %v1082 = vunpack.c.l.b16 %v1070
        %v1083 = vunpack.c.l.b16 %v1071
        %v1084 = vunpack.c.l.b16 %v1072
        %v1085 = vunpack.c.l.b16 %v1073
        %v1086 = vpack.c.b16 %v1083, %v1082
        %v1087 = vpack.c.b16 %v1085, %v1084
        %v1091 = vsel %vm974, %v1069, 0
        %1093 = vmatpush.bf16.msra.mxu0 0
        %1094 = vmatpush.bf16.msra.mxu0 0
        %1095 = vmatpush.bf16.msra.mxu0 0
        %1096 = vmatpush.bf16.msra.mxu0 0
        %1097 = vmatpush.bf16.msra.mxu0 0
        %1098 = vmatpush.bf16.msra.mxu0 0
        %1099 = vmatpush.bf16.msra.mxu0 %v1087
        %1100 = vmatpush.bf16.msra.mxu0 %v1086
        %1101 = vmatmul.bf16.gmra.mxu0 %v1091
        %v1102 = vpop.f32.mrf.mxu0
        %v1103 = vadd.f32 %v1076, %v1102
        %v1104 = vpop.f32.mrf.mxu0
        %1105 = vdwg.mxu0
        %v1106 = vadd.f32 %v1030, %v1103
        %v1107 = vld [vmem:[%s12] sm:$0x1]
        %v1108 = vld [vmem:[%s13] sm:$0x1]
        %v1109 = vsel %vm974, %v1106, 0.0
        %1110 = vadd.xlane.f32.xlu0 %v1109
        %v1111 = vpop.xlane.xlu0 %1110
        %v1112 = vmul.f32 %v1111, %v1003
        %v1113 = vsub.f32 %v1106, %v1112
        %v1114 = vmul.f32 %v1113, %v1113
        %v1115 = vsel %vm974, %v1114, 0.0
        %1116 = vadd.xlane.f32.xlu0 %v1115
        %v1117 = vpop.xlane.xlu0 %1116
        %v1118 = vmul.f32 %v1117, %v1003
        %v1119 = vadd.f32 %v1118, 1e-05
        %v1120 = vrsqrt.pop %v1119
        %v1121 = vmul.f32 %v1120, %v1119
        %v1122 = vmul.f32 %v1121, %v1120
        %v1123 = vmul.f32 0.5, %v1122
        %v1124 = vsub.f32 1.5, %v1123
        %v1125 = vmul.f32 %v1120, %v1124
        %vm1126 = vweird.f32 %v1119
        %vm1127 = vweird.f32 %v1120
        %vm1128 = vmor %vm1126, %vm1127
        %v1129 = vsel %vm1128, %v1120, %v1125
        %v1130 = vmul.f32 %v1113, %v1129
        %v1132 = vperm.slane %v1107, 0
        %v1134 = vmul.f32 %v1130, %v1132
        %v1136 = vperm.slane %v1108, 0
        %v1138 = vadd.f32 %v1134, %v1136
        %1139 = vst.msk [vmem:[%s667] sm:$0xff] %vm974, %v1138
        %s1140 = sand.u32 %s378, 1
        %s1141 = scalar_lea.sflag [#allocation5], %s1140
        %s1142 = sand.u32 %s378, 1
        %s1143 = smul.addr %s1142, 8
        %s1144 = scalar_lea.vmem [#allocation15], %s1143
        // Predicated region
        $region105: #{tpu_custom_call.1} parent=75 // pred_check
          %p1145 = pneg %p388
        $region106: #{tpu_custom_call.1} parent=75 // pred_check_branch
          %1147 = sbr.rel (%p1145) target = $region108
        $region107: #{tpu_custom_call.1} parent=75 // pred_region
          %1149 = vsyncadd %s1141, 0
          %s1150 = sadd.s32 %s43, %s42
          %s1151 = smul.addr %s1150, 8
          %s1152 = scalar_lea.hbm %s14, %s1151
          %s1154 = sshll.u32 %s1144, 4
          %s1155 = int_to_ptr.vmem [resolvable:$true] %s1154
          %s1156 = sshll.u32 %s1152, 4
          %s1157 = int_to_ptr.hbm [resolvable:$true] %s1156
          %1159 = dma.vmem_to_hbm [thread:$0]  %s1155, 128, %s1157, %s1141
        $region108: #{tpu_custom_call.1} parent=75 // pred_fallthru
          _
      $region76: #{tpu_custom_call.1} parent=5 // pred_fallthru
        _
      %p1160 = scmp.le.s32.totalorder 2, %s33
      // Predicated region
      $region109: #{tpu_custom_call.1} parent=5 // pred_check
        %p1161 = pneg %p1160
      $region110: #{tpu_custom_call.1} parent=5 // pred_check_branch
        %1163 = sbr.rel (%p1161) target = $region112
      $region111: #{tpu_custom_call.1} parent=5 // pred_region
        %s1164 = ssub.s32 %s33, 2
        // Predicated region
        $region113: #{tpu_custom_call.1} parent=111 // pred_check
          %p1165 = pneg %p394
        $region114: #{tpu_custom_call.1} parent=111 // pred_check_branch
          %1167 = sbr.rel (%p1165) target = $region116
        $region115: #{tpu_custom_call.1} parent=111 // pred_region
          %s1168 = sand.u32 %s379, 1
          %s1169 = scalar_lea.sflag [#allocation5], %s1168
          %s1170 = sand.u32 %s379, 1
          %s1171 = smul.addr %s1170, 8
          %s1172 = scalar_lea.vmem [#allocation15], %s1171
          %1174 = dma.done %s1169, 128
        $region116: #{tpu_custom_call.1} parent=111 // pred_fallthru
          _
      $region112: #{tpu_custom_call.1} parent=5 // pred_fallthru
        _
    $region6: #{tpu_custom_call.1} parent=1 // loop_footer
      %s37 = sadd.s32 1, %s33
    $region7: #{tpu_custom_call.1} parent=1 // loop_footer_branch
      %32 = sbr.rel target = $region3
    $region8: #{tpu_custom_call.1} parent=1 // loop_exit
      _
    %1175 = vsyncpa [#allocation4], 1
    %s1176 = scalar_lea.sflag [#allocation4], 1
    %1177 = vsyncpa %s1176, 1
    %1178 = vsyncpa [#allocation7], 1
    %s1179 = scalar_lea.sflag [#allocation7], 1
    %1180 = vsyncpa %s1179, 1
    %1181 = vsyncpa [#allocation10], 1
    %s1182 = scalar_lea.sflag [#allocation10], 1
    %1183 = vsyncpa %s1182, 1
    %1184 = vsyncpa [#allocation13], 1
    %1185 = vsyncpa [#allocation5], 1
    %s1186 = scalar_lea.sflag [#allocation5], 1
    %1187 = vsyncpa %s1186, 1

</llo_original>
